<compile_context>
chip_gen: v7x
topology: tpu7x:2x2x1
jax: 0.10.0
libtpu: 0.0.40
codegen_flags: <defaults>
</compile_context>

<pallas_src>
import math
import functools

import jax
import jax.numpy as jnp
from jax import lax
from jax.experimental import pallas as pl
from jax.experimental.pallas import tpu as pltpu


# ----------------------------------------------------------------------------
# Tiling helper (hardened: only 128-multiples or the full dimension)
# ----------------------------------------------------------------------------
def _pick_q_tile(seq_len, target=256):
    """Largest multiple of 128 that divides seq_len and is <= target.
    Falls back to the full dimension (a full-extent block is always layout-legal)."""
    t = min(seq_len, target)
    t -= t % 128
    while t >= 128:
        if seq_len % t == 0:
            return t
        t -= 128
    return seq_len


# ----------------------------------------------------------------------------
# Fully fused MHA kernel: one grid step = one (batch row, query tile)
# ----------------------------------------------------------------------------
def _fused_mha_kernel(xq_ref, xk_ref, xv_ref, wqkv_ref, bqkv_ref, wo_ref, bo_ref,
                      o_ref, kv_ref, *, h, d_k):
    """Refs:
       xq_ref : (tq, d_model)  input slice for this query tile (batch row b)
       xk_ref : (S,  d_model)  full key   input row b
       xv_ref : (S,  d_model)  full value input row b
       wqkv   : (3, d_model, d_model) bf16 packed W_q/W_k/W_v
       bqkv   : (3, 1, d_model)       bf16 packed biases
       wo     : (d_model, d_model)    bf16
       bo     : (1, d_model)          bf16
       o_ref  : (tq, d_model)  output tile
       kv_ref : (2, S, d_model) bf16 VMEM scratch holding projected K, V
    """
    qi = pl.program_id(1)

    # --- K/V projection: once per batch row, cached in bf16 VMEM scratch -----
    @pl.when(qi == 0)
    def _():
        k = jnp.dot(xk_ref[...].astype(jnp.bfloat16), wqkv_ref[1],
                    preferred_element_type=jnp.float32) + bqkv_ref[1]
        v = jnp.dot(xv_ref[...].astype(jnp.bfloat16), wqkv_ref[2],
                    preferred_element_type=jnp.float32) + bqkv_ref[2]
        kv_ref[0] = k.astype(kv_ref.dtype)
        kv_ref[1] = v.astype(kv_ref.dtype)

    # --- Q projection for this query tile (1/sqrt(d_k) folded in) ------------
    q = jnp.dot(xq_ref[...].astype(jnp.bfloat16), wqkv_ref[0],
                preferred_element_type=jnp.float32) + bqkv_ref[0]
    q = (q * (1.0 / math.sqrt(d_k))).astype(jnp.bfloat16)

    k = kv_ref[0]                 # (S, d_model) bf16
    v = kv_ref[1]                 # (S, d_model) bf16
    wo = wo_ref[...]              # (d_model, d_model) bf16

    # --- per-head attention, accumulated directly into the output projection -
    # No concatenate / head stack: each head's (tq, d_k) result is consumed by
    # its W_o row-block immediately, keeping live ranges small and the final
    # store lane-dense.
    out = jnp.zeros(o_ref.shape, jnp.float32)
    for head in range(h):                                     # static unroll
        lo = head * d_k
        # Q_h @ K_h^T without materializing a transpose.
        s = lax.dot_general(q[:, lo:lo + d_k], k[:, lo:lo + d_k],
                            (((1,), (1,)), ((), ())),
                            preferred_element_type=jnp.float32)   # (tq, S) f32
        m = jnp.max(s, axis=-1, keepdims=True)                    # f32 stats
        p = jnp.exp(s - m)
        p = p * pl.reciprocal(jnp.sum(p, axis=-1, keepdims=True), approx=True)
        attn_h = jnp.dot(p.astype(jnp.bfloat16), v[:, lo:lo + d_k],
                         preferred_element_type=jnp.float32)      # (tq, d_k)
        out = out + jnp.dot(attn_h.astype(jnp.bfloat16), wo[lo:lo + d_k, :],
                            preferred_element_type=jnp.float32)   # (tq, d_model)

    o_ref[...] = (out + bo_ref[...]).astype(o_ref.dtype)


def fused_multi_head_attention(q_in, k_in, v_in, w_qkv, b_qkv, w_o, b_o,
                               *, h, q_tile_target=256):
    """q_in/k_in/v_in: (B, S, d_model); w_qkv: (3, d, d) bf16; b_qkv: (3, 1, d) bf16;
       w_o: (d, d) bf16; b_o: (1, d) bf16  ->  (B, S, d_model) in q_in.dtype."""
    B, S, d_model = q_in.shape
    d_k = d_model // h
    tq = _pick_q_tile(S, q_tile_target)
    grid = (B, S // tq)

    kern = functools.partial(_fused_mha_kernel, h=h, d_k=d_k)
    flops = 8 * B * S * d_model * d_model + 4 * B * S * S * d_model
    bytes_accessed = (4 * 3 * B * S * d_model        # f32 inputs
                      + 2 * 4 * d_model * d_model    # bf16 weights
                      + 4 * B * S * d_model)         # f32 output

    return pl.pallas_call(
        kern,
        out_shape=jax.ShapeDtypeStruct((B, S, d_model), q_in.dtype),
        grid=grid,
        in_specs=[
            pl.BlockSpec((None, tq, d_model), lambda b, i: (b, i, 0)),   # x_q tile
            pl.BlockSpec((None, S, d_model), lambda b, i: (b, 0, 0)),    # x_k row (resident across i)
            pl.BlockSpec((None, S, d_model), lambda b, i: (b, 0, 0)),    # x_v row (resident across i)
            pl.BlockSpec((3, d_model, d_model), lambda b, i: (0, 0, 0)), # packed W_qkv (bf16)
            pl.BlockSpec((3, 1, d_model), lambda b, i: (0, 0, 0)),       # packed biases (bf16)
            pl.BlockSpec((d_model, d_model), lambda b, i: (0, 0)),       # W_o (bf16)
            pl.BlockSpec((1, d_model), lambda b, i: (0, 0)),             # b_o (bf16)
        ],
        out_specs=pl.BlockSpec((None, tq, d_model), lambda b, i: (b, i, 0)),
        scratch_shapes=[pltpu.VMEM((2, S, d_model), jnp.bfloat16)],      # projected K, V
        compiler_params=pltpu.CompilerParams(
            dimension_semantics=("parallel", "arbitrary"),
            vmem_limit_bytes=32 * 1024 * 1024),
        cost_estimate=pl.CostEstimate(
            flops=flops,
            transcendentals=B * h * S * S,
            bytes_accessed=bytes_accessed),
    )(q_in, k_in, v_in, w_qkv, b_qkv, w_o, b_o)


# ----------------------------------------------------------------------------
# MultiHeadAttention forward (mirrors the PyTorch module, eval mode, mask=None)
# ----------------------------------------------------------------------------
def multi_head_attention_forward(params, q_in, k_in, v_in, *, h):
    d_model = q_in.shape[-1]
    # Parameter packing + bf16 pre-cast.  Done once at parameter time (not
    # per-activation); halves weight DMA and removes per-step in-kernel casts.
    w_qkv = jnp.stack([params["w_q"], params["w_k"], params["w_v"]]).astype(jnp.bfloat16)
    b_qkv = jnp.stack([params["b_q"], params["b_k"], params["b_v"]])[:, None, :].astype(jnp.bfloat16)
    w_o = params["w_o"].astype(jnp.bfloat16)
    b_o = params["b_o"].reshape(1, d_model).astype(jnp.bfloat16)
    return fused_multi_head_attention(q_in, k_in, v_in, w_qkv, b_qkv, w_o, b_o, h=h)


# ----------------------------------------------------------------------------
# Pure-JAX (f32) reference for sanity checking
# ----------------------------------------------------------------------------
def reference_forward(params, q_in, k_in, v_in, *, h):
    B, S, d_model = q_in.shape
    d_k = d_model // h
    q = q_in @ params["w_q"] + params["b_q"]
    k = k_in @ params["w_k"] + params["b_k"]
    v = v_in @ params["w_v"] + params["b_v"]
    q = q.reshape(B, S, h, d_k).transpose(0, 2, 1, 3)
    k = k.reshape(B, S, h, d_k).transpose(0, 2, 1, 3)
    v = v.reshape(B, S, h, d_k).transpose(0, 2, 1, 3)
    scores = jnp.einsum("bhqd,bhkd->bhqk", q, k) / math.sqrt(d_k)
    p = jax.nn.softmax(scores, axis=-1)
    attn = jnp.einsum("bhqk,bhkd->bhqd", p, v)
    attn = attn.transpose(0, 2, 1, 3).reshape(B, S, d_model)
    return attn @ params["w_o"] + params["b_o"]


# ----------------------------------------------------------------------------
# Main
# ----------------------------------------------------------------------------
if __name__ == "__main__":
    B, S, d_model, H = 2, 128, 256, 4

    key = jax.random.PRNGKey(0)
    keys = jax.random.split(key, 12)

    # nn.Linear-like init: U(-1/sqrt(d), 1/sqrt(d)); weights stored (d_in, d_out)
    # so kernels compute x @ W.
    lim = 1.0 / math.sqrt(d_model)

    def init_w(k):
        return jax.random.uniform(k, (d_model, d_model), jnp.float32, -lim, lim)

    def init_b(k):
        return jax.random.uniform(k, (d_model,), jnp.float32, -lim, lim)

    params = {
        "w_q": init_w(keys[0]), "b_q": init_b(keys[1]),
        "w_k": init_w(keys[2]), "b_k": init_b(keys[3]),
        "w_v": init_w(keys[4]), "b_v": init_b(keys[5]),
        "w_o": init_w(keys[6]), "b_o": init_b(keys[7]),
    }

    q_in = jax.random.normal(keys[8], (B, S, d_model), jnp.float32)
    k_in = jax.random.normal(keys[9], (B, S, d_model), jnp.float32)
    v_in = jax.random.normal(keys[10], (B, S, d_model), jnp.float32)

    out = multi_head_attention_forward(params, q_in, k_in, v_in, h=H)
    out = jax.block_until_ready(out)

    ref = reference_forward(params, q_in, k_in, v_in, h=H)
    assert out.shape == (B, S, d_model)
    # bf16 MXU operands / bf16 parameters with f32 accumulation -> compare at
    # bf16-level tolerance (not bit-identical to an f32 PyTorch softmax).
    assert jnp.allclose(out, ref, atol=2e-2, rtol=2e-2), "mismatch vs JAX reference"

    print("KERNEL_OK")
</pallas_src>

<mosaic_0001>
module attributes {stable_mosaic.version = 11 : i64} {
  func.func @_fused_mha_kernel(%arg0: i32, %arg1: i32, %arg2: memref<1x128x256xf32, #tpu.memory_space<vmem>>, %arg3: memref<1x128x256xf32, #tpu.memory_space<vmem>>, %arg4: memref<1x128x256xf32, #tpu.memory_space<vmem>>, %arg5: memref<3x256x256xbf16, #tpu.memory_space<vmem>>, %arg6: memref<3x1x256xbf16, #tpu.memory_space<vmem>>, %arg7: memref<256x256xbf16, #tpu.memory_space<vmem>>, %arg8: memref<1x256xbf16, #tpu.memory_space<vmem>>, %arg9: memref<1x128x256xf32, #tpu.memory_space<vmem>>, %arg10: memref<2x128x256xbf16, #tpu.memory_space<vmem>>) attributes {dimension_semantics = [#tpu.dimension_semantics<parallel>, #tpu.dimension_semantics<arbitrary>], iteration_bounds = array<i64: 2, 1>, scalar_prefetch = 0 : i64, scratch_operands = 1 : i64, tpu.core_type = #tpu.core_type<tc>, window_params = [{transform_indices = @transform_0, window_bounds = array<i64: 1, 128, 256>}, {transform_indices = @transform_1, window_bounds = array<i64: 1, 128, 256>}, {transform_indices = @transform_2, window_bounds = array<i64: 1, 128, 256>}, {pipeline_mode = #tpu.pipeline_mode<synchronous>, transform_indices = @transform_3, window_bounds = array<i64: 3, 256, 256>}, {pipeline_mode = #tpu.pipeline_mode<synchronous>, transform_indices = @transform_4, window_bounds = array<i64: 3, 1, 256>}, {pipeline_mode = #tpu.pipeline_mode<synchronous>, transform_indices = @transform_5, window_bounds = array<i64: 256, 256>}, {pipeline_mode = #tpu.pipeline_mode<synchronous>, transform_indices = @transform_6, window_bounds = array<i64: 1, 256>}, {transform_indices = @transform_7, window_bounds = array<i64: 1, 128, 256>}]} {
    %c0_i32 = arith.constant 0 : i32
    %0 = arith.cmpi eq, %arg1, %c0_i32 : i32
    %1 = arith.extui %0 : i1 to i32
    %c0_i32_0 = arith.constant 0 : i32
    %2 = arith.cmpi ne, %1, %c0_i32_0 : i32
    scf.if %2 {
      %c0_43 = arith.constant 0 : index
      %c0_44 = arith.constant 0 : index
      %c0_45 = arith.constant 0 : index
      %110 = vector.load %arg3[%c0_43, %c0_44, %c0_45] : memref<1x128x256xf32, #tpu.memory_space<vmem>>, vector<1x128x256xf32>
      %111 = vector.shape_cast %110 : vector<1x128x256xf32> to vector<128x256xf32>
      %112 = arith.truncf %111 : vector<128x256xf32> to vector<128x256xbf16>
      %c1_46 = arith.constant 1 : index
      %c0_47 = arith.constant 0 : index
      %c0_48 = arith.constant 0 : index
      %113 = vector.load %arg5[%c1_46, %c0_47, %c0_48] : memref<3x256x256xbf16, #tpu.memory_space<vmem>>, vector<1x256x256xbf16>
      %114 = vector.shape_cast %113 : vector<1x256x256xbf16> to vector<256x256xbf16>
      %cst_49 = arith.constant dense<0.000000e+00> : vector<128x256xf32>
      %115 = tpu.matmul %112, %114, %cst_49 {dimension_numbers = #tpu.dot_dimension_numbers<[1], [0], [0], [1], [0, 0, 1, 1], [], []>} : vector<128x256xbf16>, vector<256x256xbf16>, vector<128x256xf32> -> vector<128x256xf32>
      %c1_50 = arith.constant 1 : index
      %c0_51 = arith.constant 0 : index
      %c0_52 = arith.constant 0 : index
      %116 = vector.load %arg6[%c1_50, %c0_51, %c0_52] : memref<3x1x256xbf16, #tpu.memory_space<vmem>>, vector<1x1x256xbf16>
      %117 = vector.shape_cast %116 : vector<1x1x256xbf16> to vector<1x256xbf16>
      %118 = arith.extf %117 : vector<1x256xbf16> to vector<1x256xf32>
      %119 = vector.broadcast %118 : vector<1x256xf32> to vector<128x256xf32>
      %120 = arith.addf %115, %119 : vector<128x256xf32>
      %c0_53 = arith.constant 0 : index
      %c0_54 = arith.constant 0 : index
      %c0_55 = arith.constant 0 : index
      %121 = vector.load %arg4[%c0_53, %c0_54, %c0_55] : memref<1x128x256xf32, #tpu.memory_space<vmem>>, vector<1x128x256xf32>
      %122 = vector.shape_cast %121 : vector<1x128x256xf32> to vector<128x256xf32>
      %123 = arith.truncf %122 : vector<128x256xf32> to vector<128x256xbf16>
      %c2 = arith.constant 2 : index
      %c0_56 = arith.constant 0 : index
      %c0_57 = arith.constant 0 : index
      %124 = vector.load %arg5[%c2, %c0_56, %c0_57] : memref<3x256x256xbf16, #tpu.memory_space<vmem>>, vector<1x256x256xbf16>
      %125 = vector.shape_cast %124 : vector<1x256x256xbf16> to vector<256x256xbf16>
      %cst_58 = arith.constant dense<0.000000e+00> : vector<128x256xf32>
      %126 = tpu.matmul %123, %125, %cst_58 {dimension_numbers = #tpu.dot_dimension_numbers<[1], [0], [0], [1], [0, 0, 1, 1], [], []>} : vector<128x256xbf16>, vector<256x256xbf16>, vector<128x256xf32> -> vector<128x256xf32>
      %c2_59 = arith.constant 2 : index
      %c0_60 = arith.constant 0 : index
      %c0_61 = arith.constant 0 : index
      %127 = vector.load %arg6[%c2_59, %c0_60, %c0_61] : memref<3x1x256xbf16, #tpu.memory_space<vmem>>, vector<1x1x256xbf16>
      %128 = vector.shape_cast %127 : vector<1x1x256xbf16> to vector<1x256xbf16>
      %129 = arith.extf %128 : vector<1x256xbf16> to vector<1x256xf32>
      %130 = vector.broadcast %129 : vector<1x256xf32> to vector<128x256xf32>
      %131 = arith.addf %126, %130 : vector<128x256xf32>
      %132 = arith.truncf %120 : vector<128x256xf32> to vector<128x256xbf16>
      %c0_62 = arith.constant 0 : index
      %c0_63 = arith.constant 0 : index
      %c0_64 = arith.constant 0 : index
      %133 = vector.load %arg10[%c0_62, %c0_63, %c0_64] : memref<2x128x256xbf16, #tpu.memory_space<vmem>>, vector<1x128x256xbf16>
      %134 = vector.shape_cast %133 : vector<1x128x256xbf16> to vector<128x256xbf16>
      %135 = vector.shape_cast %132 : vector<128x256xbf16> to vector<1x128x256xbf16>
      tpu.vector_store %arg10[%c0_62, %c0_63, %c0_64], %135 {strides = array<i32>} : memref<2x128x256xbf16, #tpu.memory_space<vmem>>, vector<1x128x256xbf16>,
      %136 = arith.truncf %131 : vector<128x256xf32> to vector<128x256xbf16>
      %c1_65 = arith.constant 1 : index
      %c0_66 = arith.constant 0 : index
      %c0_67 = arith.constant 0 : index
      %137 = vector.load %arg10[%c1_65, %c0_66, %c0_67] : memref<2x128x256xbf16, #tpu.memory_space<vmem>>, vector<1x128x256xbf16>
      %138 = vector.shape_cast %137 : vector<1x128x256xbf16> to vector<128x256xbf16>
      %139 = vector.shape_cast %136 : vector<128x256xbf16> to vector<1x128x256xbf16>
      tpu.vector_store %arg10[%c1_65, %c0_66, %c0_67], %139 {strides = array<i32>} : memref<2x128x256xbf16, #tpu.memory_space<vmem>>, vector<1x128x256xbf16>,
    } else {
    }
    %c0 = arith.constant 0 : index
    %c0_1 = arith.constant 0 : index
    %c0_2 = arith.constant 0 : index
    %3 = vector.load %arg2[%c0, %c0_1, %c0_2] : memref<1x128x256xf32, #tpu.memory_space<vmem>>, vector<1x128x256xf32>
    %4 = vector.shape_cast %3 : vector<1x128x256xf32> to vector<128x256xf32>
    %5 = arith.truncf %4 : vector<128x256xf32> to vector<128x256xbf16>
    %c0_3 = arith.constant 0 : index
    %c0_4 = arith.constant 0 : index
    %c0_5 = arith.constant 0 : index
    %6 = vector.load %arg5[%c0_3, %c0_4, %c0_5] : memref<3x256x256xbf16, #tpu.memory_space<vmem>>, vector<1x256x256xbf16>
    %7 = vector.shape_cast %6 : vector<1x256x256xbf16> to vector<256x256xbf16>
    %cst = arith.constant dense<0.000000e+00> : vector<128x256xf32>
    %8 = tpu.matmul %5, %7, %cst {dimension_numbers = #tpu.dot_dimension_numbers<[1], [0], [0], [1], [0, 0, 1, 1], [], []>} : vector<128x256xbf16>, vector<256x256xbf16>, vector<128x256xf32> -> vector<128x256xf32>
    %c0_6 = arith.constant 0 : index
    %c0_7 = arith.constant 0 : index
    %c0_8 = arith.constant 0 : index
    %9 = vector.load %arg6[%c0_6, %c0_7, %c0_8] : memref<3x1x256xbf16, #tpu.memory_space<vmem>>, vector<1x1x256xbf16>
    %10 = vector.shape_cast %9 : vector<1x1x256xbf16> to vector<1x256xbf16>
    %11 = arith.extf %10 : vector<1x256xbf16> to vector<1x256xf32>
    %12 = vector.broadcast %11 : vector<1x256xf32> to vector<128x256xf32>
    %13 = arith.addf %8, %12 : vector<128x256xf32>
    %cst_9 = arith.constant 1.250000e-01 : f32
    %14 = vector.broadcast %cst_9 : f32 to vector<128x256xf32>
    %15 = arith.mulf %13, %14 : vector<128x256xf32>
    %16 = arith.truncf %15 : vector<128x256xf32> to vector<128x256xbf16>
    %c0_10 = arith.constant 0 : index
    %c0_11 = arith.constant 0 : index
    %c0_12 = arith.constant 0 : index
    %17 = vector.load %arg10[%c0_10, %c0_11, %c0_12] : memref<2x128x256xbf16, #tpu.memory_space<vmem>>, vector<1x128x256xbf16>
    %18 = vector.shape_cast %17 : vector<1x128x256xbf16> to vector<128x256xbf16>
    %c1 = arith.constant 1 : index
    %c0_13 = arith.constant 0 : index
    %c0_14 = arith.constant 0 : index
    %19 = vector.load %arg10[%c1, %c0_13, %c0_14] : memref<2x128x256xbf16, #tpu.memory_space<vmem>>, vector<1x128x256xbf16>
    %20 = vector.shape_cast %19 : vector<1x128x256xbf16> to vector<128x256xbf16>
    %c0_15 = arith.constant 0 : index
    %c0_16 = arith.constant 0 : index
    %21 = vector.load %arg7[%c0_15, %c0_16] : memref<256x256xbf16, #tpu.memory_space<vmem>>, vector<256x256xbf16>
    %cst_17 = arith.constant 0.000000e+00 : f32
    %22 = vector.broadcast %cst_17 : f32 to vector<128x256xf32>
    %23 = vector.extract_strided_slice %16 {offsets = [0, 0], sizes = [128, 64], strides = [1, 1]} : vector<128x256xbf16> to vector<128x64xbf16>
    %24 = vector.extract_strided_slice %18 {offsets = [0, 0], sizes = [128, 64], strides = [1, 1]} : vector<128x256xbf16> to vector<128x64xbf16>
    %cst_18 = arith.constant dense<0.000000e+00> : vector<128x128xf32>
    %25 = tpu.matmul %23, %24, %cst_18 {dimension_numbers = #tpu.dot_dimension_numbers<[1], [1], [0], [0], [0, 0, 1, 0], [], []>} : vector<128x64xbf16>, vector<128x64xbf16>, vector<128x128xf32> -> vector<128x128xf32>
    %cst_19 = arith.constant dense<0xFF800000> : vector<128xf32>
    %26 = vector.multi_reduction <maximumf>, %25, %cst_19 [1] : vector<128x128xf32> to vector<128xf32>
    %27 = vector.shape_cast %26 : vector<128xf32> to vector<128x1xf32>
    %28 = vector.broadcast %27 : vector<128x1xf32> to vector<128x128xf32>
    %29 = arith.subf %25, %28 : vector<128x128xf32>
    %30 = math.exp %29 : vector<128x128xf32>
    %cst_20 = arith.constant dense<0.000000e+00> : vector<128xf32>
    %31 = vector.multi_reduction <add>, %30, %cst_20 [1] : vector<128x128xf32> to vector<128xf32>
    %32 = vector.shape_cast %31 : vector<128xf32> to vector<128x1xf32>
    %33 = tpu.reciprocal %32 {approx = true} : vector<128x1xf32> -> vector<128x1xf32>
    %34 = vector.broadcast %33 : vector<128x1xf32> to vector<128x128xf32>
    %35 = arith.mulf %30, %34 : vector<128x128xf32>
    %36 = arith.truncf %35 : vector<128x128xf32> to vector<128x128xbf16>
    %37 = vector.extract_strided_slice %20 {offsets = [0, 0], sizes = [128, 64], strides = [1, 1]} : vector<128x256xbf16> to vector<128x64xbf16>
    %cst_21 = arith.constant dense<0.000000e+00> : vector<128x64xf32>
    %38 = tpu.matmul %36, %37, %cst_21 {dimension_numbers = #tpu.dot_dimension_numbers<[1], [0], [0], [1], [0, 0, 1, 1], [], []>} : vector<128x128xbf16>, vector<128x64xbf16>, vector<128x64xf32> -> vector<128x64xf32>
    %39 = arith.truncf %38 : vector<128x64xf32> to vector<128x64xbf16>
    %40 = vector.extract_strided_slice %21 {offsets = [0, 0], sizes = [64, 256], strides = [1, 1]} : vector<256x256xbf16> to vector<64x256xbf16>
    %cst_22 = arith.constant dense<0.000000e+00> : vector<128x256xf32>
    %41 = tpu.matmul %39, %40, %cst_22 {dimension_numbers = #tpu.dot_dimension_numbers<[1], [0], [0], [1], [0, 0, 1, 1], [], []>} : vector<128x64xbf16>, vector<64x256xbf16>, vector<128x256xf32> -> vector<128x256xf32>
    %42 = arith.addf %22, %41 : vector<128x256xf32>
    %43 = vector.extract_strided_slice %16 {offsets = [0, 64], sizes = [128, 64], strides = [1, 1]} : vector<128x256xbf16> to vector<128x64xbf16>
    %44 = vector.extract_strided_slice %18 {offsets = [0, 64], sizes = [128, 64], strides = [1, 1]} : vector<128x256xbf16> to vector<128x64xbf16>
    %cst_23 = arith.constant dense<0.000000e+00> : vector<128x128xf32>
    %45 = tpu.matmul %43, %44, %cst_23 {dimension_numbers = #tpu.dot_dimension_numbers<[1], [1], [0], [0], [0, 0, 1, 0], [], []>} : vector<128x64xbf16>, vector<128x64xbf16>, vector<128x128xf32> -> vector<128x128xf32>
    %cst_24 = arith.constant dense<0xFF800000> : vector<128xf32>
    %46 = vector.multi_reduction <maximumf>, %45, %cst_24 [1] : vector<128x128xf32> to vector<128xf32>
    %47 = vector.shape_cast %46 : vector<128xf32> to vector<128x1xf32>
    %48 = vector.broadcast %47 : vector<128x1xf32> to vector<128x128xf32>
    %49 = arith.subf %45, %48 : vector<128x128xf32>
    %50 = math.exp %49 : vector<128x128xf32>
    %cst_25 = arith.constant dense<0.000000e+00> : vector<128xf32>
    %51 = vector.multi_reduction <add>, %50, %cst_25 [1] : vector<128x128xf32> to vector<128xf32>
    %52 = vector.shape_cast %51 : vector<128xf32> to vector<128x1xf32>
    %53 = tpu.reciprocal %52 {approx = true} : vector<128x1xf32> -> vector<128x1xf32>
    %54 = vector.broadcast %53 : vector<128x1xf32> to vector<128x128xf32>
    %55 = arith.mulf %50, %54 : vector<128x128xf32>
    %56 = arith.truncf %55 : vector<128x128xf32> to vector<128x128xbf16>
    %57 = vector.extract_strided_slice %20 {offsets = [0, 64], sizes = [128, 64], strides = [1, 1]} : vector<128x256xbf16> to vector<128x64xbf16>
    %cst_26 = arith.constant dense<0.000000e+00> : vector<128x64xf32>
    %58 = tpu.matmul %56, %57, %cst_26 {dimension_numbers = #tpu.dot_dimension_numbers<[1], [0], [0], [1], [0, 0, 1, 1], [], []>} : vector<128x128xbf16>, vector<128x64xbf16>, vector<128x64xf32> -> vector<128x64xf32>
    %59 = arith.truncf %58 : vector<128x64xf32> to vector<128x64xbf16>
    %60 = vector.extract_strided_slice %21 {offsets = [64, 0], sizes = [64, 256], strides = [1, 1]} : vector<256x256xbf16> to vector<64x256xbf16>
    %cst_27 = arith.constant dense<0.000000e+00> : vector<128x256xf32>
    %61 = tpu.matmul %59, %60, %cst_27 {dimension_numbers = #tpu.dot_dimension_numbers<[1], [0], [0], [1], [0, 0, 1, 1], [], []>} : vector<128x64xbf16>, vector<64x256xbf16>, vector<128x256xf32> -> vector<128x256xf32>
    %62 = arith.addf %42, %61 : vector<128x256xf32>
    %63 = vector.extract_strided_slice %16 {offsets = [0, 128], sizes = [128, 64], strides = [1, 1]} : vector<128x256xbf16> to vector<128x64xbf16>
    %64 = vector.extract_strided_slice %18 {offsets = [0, 128], sizes = [128, 64], strides = [1, 1]} : vector<128x256xbf16> to vector<128x64xbf16>
    %cst_28 = arith.constant dense<0.000000e+00> : vector<128x128xf32>
    %65 = tpu.matmul %63, %64, %cst_28 {dimension_numbers = #tpu.dot_dimension_numbers<[1], [1], [0], [0], [0, 0, 1, 0], [], []>} : vector<128x64xbf16>, vector<128x64xbf16>, vector<128x128xf32> -> vector<128x128xf32>
    %cst_29 = arith.constant dense<0xFF800000> : vector<128xf32>
    %66 = vector.multi_reduction <maximumf>, %65, %cst_29 [1] : vector<128x128xf32> to vector<128xf32>
    %67 = vector.shape_cast %66 : vector<128xf32> to vector<128x1xf32>
    %68 = vector.broadcast %67 : vector<128x1xf32> to vector<128x128xf32>
    %69 = arith.subf %65, %68 : vector<128x128xf32>
    %70 = math.exp %69 : vector<128x128xf32>
    %cst_30 = arith.constant dense<0.000000e+00> : vector<128xf32>
    %71 = vector.multi_reduction <add>, %70, %cst_30 [1] : vector<128x128xf32> to vector<128xf32>
    %72 = vector.shape_cast %71 : vector<128xf32> to vector<128x1xf32>
    %73 = tpu.reciprocal %72 {approx = true} : vector<128x1xf32> -> vector<128x1xf32>
    %74 = vector.broadcast %73 : vector<128x1xf32> to vector<128x128xf32>
    %75 = arith.mulf %70, %74 : vector<128x128xf32>
    %76 = arith.truncf %75 : vector<128x128xf32> to vector<128x128xbf16>
    %77 = vector.extract_strided_slice %20 {offsets = [0, 128], sizes = [128, 64], strides = [1, 1]} : vector<128x256xbf16> to vector<128x64xbf16>
    %cst_31 = arith.constant dense<0.000000e+00> : vector<128x64xf32>
    %78 = tpu.matmul %76, %77, %cst_31 {dimension_numbers = #tpu.dot_dimension_numbers<[1], [0], [0], [1], [0, 0, 1, 1], [], []>} : vector<128x128xbf16>, vector<128x64xbf16>, vector<128x64xf32> -> vector<128x64xf32>
    %79 = arith.truncf %78 : vector<128x64xf32> to vector<128x64xbf16>
    %80 = vector.extract_strided_slice %21 {offsets = [128, 0], sizes = [64, 256], strides = [1, 1]} : vector<256x256xbf16> to vector<64x256xbf16>
    %cst_32 = arith.constant dense<0.000000e+00> : vector<128x256xf32>
    %81 = tpu.matmul %79, %80, %cst_32 {dimension_numbers = #tpu.dot_dimension_numbers<[1], [0], [0], [1], [0, 0, 1, 1], [], []>} : vector<128x64xbf16>, vector<64x256xbf16>, vector<128x256xf32> -> vector<128x256xf32>
    %82 = arith.addf %62, %81 : vector<128x256xf32>
    %83 = vector.extract_strided_slice %16 {offsets = [0, 192], sizes = [128, 64], strides = [1, 1]} : vector<128x256xbf16> to vector<128x64xbf16>
    %84 = vector.extract_strided_slice %18 {offsets = [0, 192], sizes = [128, 64], strides = [1, 1]} : vector<128x256xbf16> to vector<128x64xbf16>
    %cst_33 = arith.constant dense<0.000000e+00> : vector<128x128xf32>
    %85 = tpu.matmul %83, %84, %cst_33 {dimension_numbers = #tpu.dot_dimension_numbers<[1], [1], [0], [0], [0, 0, 1, 0], [], []>} : vector<128x64xbf16>, vector<128x64xbf16>, vector<128x128xf32> -> vector<128x128xf32>
    %cst_34 = arith.constant dense<0xFF800000> : vector<128xf32>
    %86 = vector.multi_reduction <maximumf>, %85, %cst_34 [1] : vector<128x128xf32> to vector<128xf32>
    %87 = vector.shape_cast %86 : vector<128xf32> to vector<128x1xf32>
    %88 = vector.broadcast %87 : vector<128x1xf32> to vector<128x128xf32>
    %89 = arith.subf %85, %88 : vector<128x128xf32>
    %90 = math.exp %89 : vector<128x128xf32>
    %cst_35 = arith.constant dense<0.000000e+00> : vector<128xf32>
    %91 = vector.multi_reduction <add>, %90, %cst_35 [1] : vector<128x128xf32> to vector<128xf32>
    %92 = vector.shape_cast %91 : vector<128xf32> to vector<128x1xf32>
    %93 = tpu.reciprocal %92 {approx = true} : vector<128x1xf32> -> vector<128x1xf32>
    %94 = vector.broadcast %93 : vector<128x1xf32> to vector<128x128xf32>
    %95 = arith.mulf %90, %94 : vector<128x128xf32>
    %96 = arith.truncf %95 : vector<128x128xf32> to vector<128x128xbf16>
    %97 = vector.extract_strided_slice %20 {offsets = [0, 192], sizes = [128, 64], strides = [1, 1]} : vector<128x256xbf16> to vector<128x64xbf16>
    %cst_36 = arith.constant dense<0.000000e+00> : vector<128x64xf32>
    %98 = tpu.matmul %96, %97, %cst_36 {dimension_numbers = #tpu.dot_dimension_numbers<[1], [0], [0], [1], [0, 0, 1, 1], [], []>} : vector<128x128xbf16>, vector<128x64xbf16>, vector<128x64xf32> -> vector<128x64xf32>
    %99 = arith.truncf %98 : vector<128x64xf32> to vector<128x64xbf16>
    %100 = vector.extract_strided_slice %21 {offsets = [192, 0], sizes = [64, 256], strides = [1, 1]} : vector<256x256xbf16> to vector<64x256xbf16>
    %cst_37 = arith.constant dense<0.000000e+00> : vector<128x256xf32>
    %101 = tpu.matmul %99, %100, %cst_37 {dimension_numbers = #tpu.dot_dimension_numbers<[1], [0], [0], [1], [0, 0, 1, 1], [], []>} : vector<128x64xbf16>, vector<64x256xbf16>, vector<128x256xf32> -> vector<128x256xf32>
    %102 = arith.addf %82, %101 : vector<128x256xf32>
    %c0_38 = arith.constant 0 : index
    %c0_39 = arith.constant 0 : index
    %103 = vector.load %arg8[%c0_38, %c0_39] : memref<1x256xbf16, #tpu.memory_space<vmem>>, vector<1x256xbf16>
    %104 = arith.extf %103 : vector<1x256xbf16> to vector<1x256xf32>
    %105 = vector.broadcast %104 : vector<1x256xf32> to vector<128x256xf32>
    %106 = arith.addf %102, %105 : vector<128x256xf32>
    %c0_40 = arith.constant 0 : index
    %c0_41 = arith.constant 0 : index
    %c0_42 = arith.constant 0 : index
    %107 = vector.load %arg9[%c0_40, %c0_41, %c0_42] : memref<1x128x256xf32, #tpu.memory_space<vmem>>, vector<1x128x256xf32>
    %108 = vector.shape_cast %107 : vector<1x128x256xf32> to vector<128x256xf32>
    %109 = vector.shape_cast %106 : vector<128x256xf32> to vector<1x128x256xf32>
    tpu.vector_store %arg9[%c0_40, %c0_41, %c0_42], %109 {strides = array<i32>} : memref<1x128x256xf32, #tpu.memory_space<vmem>>, vector<1x128x256xf32>,
    return
  }
  func.func @transform_0(%arg0: i32, %arg1: i32) -> (i32, i32, i32) {
    %c0_i32 = arith.constant 0 : i32
    %c0_i32_0 = arith.constant 0 : i32
    return %arg0, %arg1, %c0_i32 : i32, i32, i32
  }
  func.func @transform_1(%arg0: i32, %arg1: i32) -> (i32, i32, i32) {
    %c0_i32 = arith.constant 0 : i32
    %c0_i32_0 = arith.constant 0 : i32
    %c0_i32_1 = arith.constant 0 : i32
    return %arg0, %c0_i32, %c0_i32_0 : i32, i32, i32
  }
  func.func @transform_2(%arg0: i32, %arg1: i32) -> (i32, i32, i32) {
    %c0_i32 = arith.constant 0 : i32
    %c0_i32_0 = arith.constant 0 : i32
    %c0_i32_1 = arith.constant 0 : i32
    return %arg0, %c0_i32, %c0_i32_0 : i32, i32, i32
  }
  func.func @transform_3(%arg0: i32, %arg1: i32) -> (i32, i32, i32) {
    %c0_i32 = arith.constant 0 : i32
    %c0_i32_0 = arith.constant 0 : i32
    %c0_i32_1 = arith.constant 0 : i32
    %c0_i32_2 = arith.constant 0 : i32
    return %c0_i32, %c0_i32_0, %c0_i32_1 : i32, i32, i32
  }
  func.func @transform_4(%arg0: i32, %arg1: i32) -> (i32, i32, i32) {
    %c0_i32 = arith.constant 0 : i32
    %c0_i32_0 = arith.constant 0 : i32
    %c0_i32_1 = arith.constant 0 : i32
    %c0_i32_2 = arith.constant 0 : i32
    return %c0_i32, %c0_i32_0, %c0_i32_1 : i32, i32, i32
  }
  func.func @transform_5(%arg0: i32, %arg1: i32) -> (i32, i32) {
    %c0_i32 = arith.constant 0 : i32
    %c0_i32_0 = arith.constant 0 : i32
    %c0_i32_1 = arith.constant 0 : i32
    return %c0_i32, %c0_i32_0 : i32, i32
  }
  func.func @transform_6(%arg0: i32, %arg1: i32) -> (i32, i32) {
    %c0_i32 = arith.constant 0 : i32
    %c0_i32_0 = arith.constant 0 : i32
    %c0_i32_1 = arith.constant 0 : i32
    return %c0_i32, %c0_i32_0 : i32, i32
  }
  func.func @transform_7(%arg0: i32, %arg1: i32) -> (i32, i32, i32) {
    %c0_i32 = arith.constant 0 : i32
    %c0_i32_0 = arith.constant 0 : i32
    return %arg0, %arg1, %c0_i32 : i32, i32, i32
  }
}

</mosaic_0001>

<llo_original>
// kernel: tpu_custom_call.1
$region0: #{tpu_custom_call.1}
  #allocation0 [shape = 'u32[]', space=smem, size = 0x4, offset = 0x4, fixed_abs, tag = 'smem constant byte address 0x4 - core index']
  #allocation1 [shape = 'u32[144,128]{1,0:T(1,128)}', space=vmem, size = 0x12000, scoped, tag = 'internal scratch']
  #allocation2 [shape = 'bf16[2,128,256]{2,1,0:T(16,128)(2,1)}', space=vmem, size = 0x20000, scoped, tag = 'scratch operand']
  %s0 = inlined_call_operand.hbm [shape: f32[2,128,256], index: 0, kind: input, shape index: {}]
  %s1 = inlined_call_operand.hbm [shape: f32[2,128,256], index: 1, kind: input, shape index: {}]
  %s2 = inlined_call_operand.hbm [shape: f32[2,128,256], index: 2, kind: input, shape index: {}]
  %s3 = inlined_call_operand.hbm [shape: bf16[3,256,256], index: 3, kind: input, shape index: {}]
  %s4 = inlined_call_operand.vmem [shape: bf16[3,1,256], index: 4, kind: input, shape index: {}]
  %s5 = inlined_call_operand.hbm [shape: bf16[256,256], index: 5, kind: input, shape index: {}]
  %s6 = inlined_call_operand.vmem [shape: bf16[1,256], index: 6, kind: input, shape index: {}]
  %s7 = inlined_call_operand.hbm [shape: f32[2,128,256], index: 7, kind: output, shape index: {}]
  %s8 = sld [smem:[#allocation0]]
  $region85: #{tpu_custom_call.1} parent=0
    _
  %s10 = ssub.s32 1, %s8
  %s11 = scalar_select 0, %s10, %s8
  $region1: #{tpu_custom_call.1} parent=0
    #allocation3 [shape = 'u8[262144]{0}', space=vmem, size = 0x40000, scoped, tag = 'input window, operand 0']
    #allocation4 [shape = 's32[2]{0}', space=sflag, size = 0x8, scoped, tag = 'scoped memory for tpu_custom_call.1']
    #allocation5 [shape = 's32[2]{0}', space=sflag, size = 0x8, scoped, tag = 'scoped memory for tpu_custom_call.1']
    #allocation6 [shape = 'u8[262144]{0}', space=vmem, size = 0x40000, scoped, tag = 'input window, operand 1']
    #allocation7 [shape = 's32[2]{0}', space=sflag, size = 0x8, scoped, tag = 'scoped memory for tpu_custom_call.1']
    #allocation8 [shape = 'u8[262144]{0}', space=vmem, size = 0x40000, scoped, tag = 'input window, operand 2']
    #allocation9 [shape = 'u8[393216]{0}', space=vmem, size = 0x60000, scoped, tag = 'input window, operand 3, single buffered']
    #allocation10 [shape = 's32[1]{0}', space=sflag, size = 0x4, scoped, tag = 'scoped memory for tpu_custom_call.1']
    #allocation11 [shape = 'u8[131072]{0}', space=vmem, size = 0x20000, scoped, tag = 'input window, operand 5, single buffered']
    #allocation12 [shape = 'u8[262144]{0}', space=vmem, size = 0x40000, scoped, tag = 'output window, operand 0']
    %12 = vsyncpa [#allocation4], 0
    %s13 = scalar_lea.sflag [#allocation4], 1
    %14 = vsyncpa %s13, 0
    %15 = vsyncpa [#allocation7], 0
    %s16 = scalar_lea.sflag [#allocation7], 1
    %17 = vsyncpa %s16, 0
    %18 = vsyncpa [#allocation10], 0
    %19 = vsyncpa [#allocation5], 0
    %s20 = scalar_lea.sflag [#allocation5], 1
    %21 = vsyncpa %s20, 0
    loop: start=0, step=1, limit=4
    $region2: #{tpu_custom_call.1} parent=1 // loop_pre_header
      _
    $region3: #{tpu_custom_call.1} parent=1 // loop_header
      %s23 = sphi 0, %s27
      %p24 = scmp.ge.s32.totalorder %s23, 4
      %s30 = sphi 0, %s42
      %s31 = sphi 0, %s38
      %s32 = sphi 0, %s30
      %s33 = sphi 0, %s31
      %s34 = sphi 0, %s32
      %s35 = sphi 0, %s33
      %s47 = sphi 0, %s49
      %s50 = sphi 0, %s47
      %s51 = sphi 0, %s50
      %s67 = sphi 0, %s51
      %s73 = sphi 0, %s75
      %s76 = sphi 0, %s73
      %s77 = sphi 0, %s76
      %s93 = sphi 0, %s77
      %s99 = sphi 0, %s101
      %s102 = sphi 0, %s99
      %s103 = sphi 0, %s102
      %s119 = sphi 0, %s103
      %s123 = sphi 0, %s123
      %s125 = sphi 0, %s123
      %s126 = sphi 0, %s125
      %s140 = sphi 0, %s126
      %s144 = sphi 0, %s144
      %s146 = sphi 0, %s144
      %s147 = sphi 0, %s146
      %s161 = sphi 0, %s147
      %s165 = sphi 0, %s165
      %s167 = sphi 0, %s165
      %s168 = sphi 0, %s167
      %s182 = sphi 0, %s168
      %s186 = sphi 0, %s186
      %s188 = sphi 0, %s186
      %s189 = sphi 0, %s188
      %s203 = sphi 0, %s189
      %s211 = sphi 0, %s213
      %s214 = sphi 0, %s211
      %s215 = sphi 0, %s214
      %s231 = sphi 0, %s215
    $region4: #{tpu_custom_call.1} parent=1 // loop_header_branch
      %26 = sbr.rel (%p24) target = $region8
    $region5: #{tpu_custom_call.1} parent=1 // loop_body
      %s28 = ssub.s32 %s23, 1
      %s29 = ssub.s32 %s23, 2
      %s36 = sadd.s32 1, %s31
      %p37 = scmp.ge.s32.totalorder %s36, 1
      %s38 = scalar_select %p37, 0, %s36
      %s39 = sadd.s32 1, %s30
      %s40 = scalar_select %p37, %s39, %s30
      %p41 = scmp.ge.s32.totalorder %s40, 2
      %s42 = scalar_select %p41, 0, %s40
      %s43 = ssub.s32 %s30, %s42
      %s44 = ssub.s32 %s31, %s38
      %s45 = sor.u32 %s43, %s44
      %p46 = scmp.eq.s32.totalorder %s45, 0
      %s48 = sadd.s32 %s47, 1
      %s49 = scalar_select %p46, %s47, %s48
      %p52 = pneg %p46
      %p53 = scmp.eq.s32.totalorder %s23, 1
      %p54 = por %p52, %p53
      %p55 = scmp.ne.s32.totalorder %s47, %s50
      %p56 = scmp.eq.s32.totalorder %s23, 0
      %p57 = por %p55, %p56
      %p58 = scmp.ne.s32.totalorder %s47, %s50
      %p59 = scmp.eq.s32.totalorder %s28, 1
      %p60 = por %p58, %p59
      %p61 = scmp.ne.s32.totalorder %s50, %s51
      %p62 = scmp.eq.s32.totalorder %s28, 0
      %p63 = por %p61, %p62
      %p64 = scmp.ne.s32.totalorder %s50, %s51
      %p65 = scmp.eq.s32.totalorder %s29, 1
      %p66 = por %p64, %p65
      %p68 = scmp.ne.s32.totalorder %s51, %s67
      %p69 = scmp.eq.s32.totalorder %s29, 0
      %p70 = por %p68, %p69
      %s71 = ssub.s32 %s30, %s42
      %p72 = scmp.eq.s32.totalorder %s71, 0
      %s74 = sadd.s32 %s73, 1
      %s75 = scalar_select %p72, %s73, %s74
      %p78 = pneg %p72
      %p79 = scmp.eq.s32.totalorder %s23, 1
      %p80 = por %p78, %p79
      %p81 = scmp.ne.s32.totalorder %s73, %s76
      %p82 = scmp.eq.s32.totalorder %s23, 0
      %p83 = por %p81, %p82
      %p84 = scmp.ne.s32.totalorder %s73, %s76
      %p85 = scmp.eq.s32.totalorder %s28, 1
      %p86 = por %p84, %p85
      %p87 = scmp.ne.s32.totalorder %s76, %s77
      %p88 = scmp.eq.s32.totalorder %s28, 0
      %p89 = por %p87, %p88
      %p90 = scmp.ne.s32.totalorder %s76, %s77
      %p91 = scmp.eq.s32.totalorder %s29, 1
      %p92 = por %p90, %p91
      %p94 = scmp.ne.s32.totalorder %s77, %s93
      %p95 = scmp.eq.s32.totalorder %s29, 0
      %p96 = por %p94, %p95
      %s97 = ssub.s32 %s30, %s42
      %p98 = scmp.eq.s32.totalorder %s97, 0
      %s100 = sadd.s32 %s99, 1
      %s101 = scalar_select %p98, %s99, %s100
      %p104 = pneg %p98
      %p105 = scmp.eq.s32.totalorder %s23, 1
      %p106 = por %p104, %p105
      %p107 = scmp.ne.s32.totalorder %s99, %s102
      %p108 = scmp.eq.s32.totalorder %s23, 0
      %p109 = por %p107, %p108
      %p110 = scmp.ne.s32.totalorder %s99, %s102
      %p111 = scmp.eq.s32.totalorder %s28, 1
      %p112 = por %p110, %p111
      %p113 = scmp.ne.s32.totalorder %s102, %s103
      %p114 = scmp.eq.s32.totalorder %s28, 0
      %p115 = por %p113, %p114
      %p116 = scmp.ne.s32.totalorder %s102, %s103
      %p117 = scmp.eq.s32.totalorder %s29, 1
      %p118 = por %p116, %p117
      %p120 = scmp.ne.s32.totalorder %s103, %s119
      %p121 = scmp.eq.s32.totalorder %s29, 0
      %p122 = por %p120, %p121
      %s124 = sadd.s32 %s123, 1
      %p127 = scmp.eq.s32.totalorder %s23, 1
      %p128 = scmp.ne.s32.totalorder %s123, %s125
      %p129 = scmp.eq.s32.totalorder %s23, 0
      %p130 = por %p128, %p129
      %p131 = scmp.ne.s32.totalorder %s123, %s125
      %p132 = scmp.eq.s32.totalorder %s28, 1
      %p133 = por %p131, %p132
      %p134 = scmp.ne.s32.totalorder %s125, %s126
      %p135 = scmp.eq.s32.totalorder %s28, 0
      %p136 = por %p134, %p135
      %p137 = scmp.ne.s32.totalorder %s125, %s126
      %p138 = scmp.eq.s32.totalorder %s29, 1
      %p139 = por %p137, %p138
      %p141 = scmp.ne.s32.totalorder %s126, %s140
      %p142 = scmp.eq.s32.totalorder %s29, 0
      %p143 = por %p141, %p142
      %s145 = sadd.s32 %s144, 1
      %p148 = scmp.eq.s32.totalorder %s23, 1
      %p149 = scmp.ne.s32.totalorder %s144, %s146
      %p150 = scmp.eq.s32.totalorder %s23, 0
      %p151 = por %p149, %p150
      %p152 = scmp.ne.s32.totalorder %s144, %s146
      %p153 = scmp.eq.s32.totalorder %s28, 1
      %p154 = por %p152, %p153
      %p155 = scmp.ne.s32.totalorder %s146, %s147
      %p156 = scmp.eq.s32.totalorder %s28, 0
      %p157 = por %p155, %p156
      %p158 = scmp.ne.s32.totalorder %s146, %s147
      %p159 = scmp.eq.s32.totalorder %s29, 1
      %p160 = por %p158, %p159
      %p162 = scmp.ne.s32.totalorder %s147, %s161
      %p163 = scmp.eq.s32.totalorder %s29, 0
      %p164 = por %p162, %p163
      %s166 = sadd.s32 %s165, 1
      %p169 = scmp.eq.s32.totalorder %s23, 1
      %p170 = scmp.ne.s32.totalorder %s165, %s167
      %p171 = scmp.eq.s32.totalorder %s23, 0
      %p172 = por %p170, %p171
      %p173 = scmp.ne.s32.totalorder %s165, %s167
      %p174 = scmp.eq.s32.totalorder %s28, 1
      %p175 = por %p173, %p174
      %p176 = scmp.ne.s32.totalorder %s167, %s168
      %p177 = scmp.eq.s32.totalorder %s28, 0
      %p178 = por %p176, %p177
      %p179 = scmp.ne.s32.totalorder %s167, %s168
      %p180 = scmp.eq.s32.totalorder %s29, 1
      %p181 = por %p179, %p180
      %p183 = scmp.ne.s32.totalorder %s168, %s182
      %p184 = scmp.eq.s32.totalorder %s29, 0
      %p185 = por %p183, %p184
      %s187 = sadd.s32 %s186, 1
      %p190 = scmp.eq.s32.totalorder %s23, 1
      %p191 = scmp.ne.s32.totalorder %s186, %s188
      %p192 = scmp.eq.s32.totalorder %s23, 0
      %p193 = por %p191, %p192
      %p194 = scmp.ne.s32.totalorder %s186, %s188
      %p195 = scmp.eq.s32.totalorder %s28, 1
      %p196 = por %p194, %p195
      %p197 = scmp.ne.s32.totalorder %s188, %s189
      %p198 = scmp.eq.s32.totalorder %s28, 0
      %p199 = por %p197, %p198
      %p200 = scmp.ne.s32.totalorder %s188, %s189
      %p201 = scmp.eq.s32.totalorder %s29, 1
      %p202 = por %p200, %p201
      %p204 = scmp.ne.s32.totalorder %s189, %s203
      %p205 = scmp.eq.s32.totalorder %s29, 0
      %p206 = por %p204, %p205
      %s207 = ssub.s32 %s30, %s42
      %s208 = ssub.s32 %s31, %s38
      %s209 = sor.u32 %s207, %s208
      %p210 = scmp.eq.s32.totalorder %s209, 0
      %s212 = sadd.s32 %s211, 1
      %s213 = scalar_select %p210, %s211, %s212
      %p216 = pneg %p210
      %p217 = scmp.eq.s32.totalorder %s23, 1
      %p218 = por %p216, %p217
      %p219 = scmp.ne.s32.totalorder %s211, %s214
      %p220 = scmp.eq.s32.totalorder %s23, 0
      %p221 = por %p219, %p220
      %p222 = scmp.ne.s32.totalorder %s211, %s214
      %p223 = scmp.eq.s32.totalorder %s28, 1
      %p224 = por %p222, %p223
      %p225 = scmp.ne.s32.totalorder %s214, %s215
      %p226 = scmp.eq.s32.totalorder %s28, 0
      %p227 = por %p225, %p226
      %p228 = scmp.ne.s32.totalorder %s214, %s215
      %p229 = scmp.eq.s32.totalorder %s29, 1
      %p230 = por %p228, %p229
      %p232 = scmp.ne.s32.totalorder %s215, %s231
      %p233 = scmp.eq.s32.totalorder %s29, 0
      %p234 = por %p232, %p233
      %p235 = scmp.le.s32.totalorder 1, %s23
      %p236 = scmp.lt.s32.totalorder %s23, 3
      %p237 = pnand %p235, %p236
      %p238 = pneg %p237
      // Predicated region
      $region9: #{tpu_custom_call.1} parent=5 // pred_check
        _
      $region10: #{tpu_custom_call.1} parent=5 // pred_check_branch
        %240 = sbr.rel (%p237) target = $region12
      $region11: #{tpu_custom_call.1} parent=5 // pred_region
        %s241 = ssub.s32 %s23, 1
        // Predicated region
        $region13: #{tpu_custom_call.1} parent=11 // pred_check
          %p242 = pneg %p136
        $region14: #{tpu_custom_call.1} parent=11 // pred_check_branch
          %244 = sbr.rel (%p242) target = $region16
        $region15: #{tpu_custom_call.1} parent=11 // pred_region
          %s246 = ssub.s32 12288, 12288
          %247 = vsyncadd [#allocation10], %s246
          %s248 = sshll.u32 [#allocation9], 4
          %s249 = int_to_ptr.vmem [resolvable:$true] %s248
          %254 = dma.hbm_to_vmem [thread:$0]  %s3, 12288, %s249, [#allocation10], 128, 128, 8
        $region16: #{tpu_custom_call.1} parent=11 // pred_fallthru
          _
        // Predicated region
        $region17: #{tpu_custom_call.1} parent=11 // pred_check
          %p255 = pneg %p157
        $region18: #{tpu_custom_call.1} parent=11 // pred_check_branch
          %257 = sbr.rel (%p255) target = $region20
        $region19: #{tpu_custom_call.1} parent=11 // pred_region
          _
        $region20: #{tpu_custom_call.1} parent=11 // pred_fallthru
          _
        // Predicated region
        $region21: #{tpu_custom_call.1} parent=11 // pred_check
          %p258 = pneg %p178
        $region22: #{tpu_custom_call.1} parent=11 // pred_check_branch
          %260 = sbr.rel (%p258) target = $region24
        $region23: #{tpu_custom_call.1} parent=11 // pred_region
          %s262 = ssub.s32 4096, 4096
          %263 = vsyncadd [#allocation10], %s262
          %s264 = sshll.u32 [#allocation11], 4
          %s265 = int_to_ptr.vmem [resolvable:$true] %s264
          %270 = dma.hbm_to_vmem [thread:$0]  %s5, 4096, %s265, [#allocation10], 128, 128, 8
        $region24: #{tpu_custom_call.1} parent=11 // pred_fallthru
          _
        // Predicated region
        $region25: #{tpu_custom_call.1} parent=11 // pred_check
          %p271 = pneg %p199
        $region26: #{tpu_custom_call.1} parent=11 // pred_check_branch
          %273 = sbr.rel (%p271) target = $region28
        $region27: #{tpu_custom_call.1} parent=11 // pred_region
          _
        $region28: #{tpu_custom_call.1} parent=11 // pred_fallthru
          _
      $region12: #{tpu_custom_call.1} parent=5 // pred_fallthru
        _
      %p274 = scmp.lt.s32.totalorder %s23, 2
      // Predicated region
      $region29: #{tpu_custom_call.1} parent=5 // pred_check
        %p275 = pneg %p274
      $region30: #{tpu_custom_call.1} parent=5 // pred_check_branch
        %277 = sbr.rel (%p275) target = $region32
      $region31: #{tpu_custom_call.1} parent=5 // pred_region
        // Predicated region
        $region33: #{tpu_custom_call.1} parent=31 // pred_check
          %p278 = pneg %p57
        $region34: #{tpu_custom_call.1} parent=31 // pred_check_branch
          %280 = sbr.rel (%p278) target = $region36
        $region35: #{tpu_custom_call.1} parent=31 // pred_region
          %s281 = sand.u32 %s47, 1
          %s282 = scalar_lea.sflag [#allocation4], %s281
          %s283 = sand.u32 %s47, 1
          %s284 = smul.addr %s283, 256
          %s285 = scalar_lea.vmem [#allocation3], %s284
          %s286 = smul.u32 16, %s31
          %s288 = ssub.s32 4096, 4096
          %289 = vsyncadd %s282, %s288
          %s290 = smul.addr %s286, 2
          %s291 = smul.addr %s30, 32
          %s292 = sadd.s32 %s290, %s291
          %s293 = smul.addr %s292, 128
          %s294 = scalar_lea.hbm %s0, %s293
          %s295 = sshll.u32 %s285, 4
          %s296 = int_to_ptr.vmem [resolvable:$true] %s295
          %301 = dma.hbm_to_vmem [thread:$0]  %s294, 4096, %s296, %s282, 256, 256, 16
        $region36: #{tpu_custom_call.1} parent=31 // pred_fallthru
          _
        // Predicated region
        $region37: #{tpu_custom_call.1} parent=31 // pred_check
          %p302 = pneg %p83
        $region38: #{tpu_custom_call.1} parent=31 // pred_check_branch
          %304 = sbr.rel (%p302) target = $region40
        $region39: #{tpu_custom_call.1} parent=31 // pred_region
          %s305 = sand.u32 %s23, 1
          %s306 = scalar_lea.sflag [#allocation7], %s305
          %s307 = sand.u32 %s73, 1
          %s308 = smul.addr %s307, 256
          %s309 = scalar_lea.vmem [#allocation6], %s308
          %s311 = ssub.s32 4096, 4096
          %312 = vsyncadd %s306, %s311
          %s313 = smul.addr %s30, 32
          %s314 = smul.addr %s313, 128
          %s315 = scalar_lea.hbm %s1, %s314
          %s316 = sshll.u32 %s309, 4
          %s317 = int_to_ptr.vmem [resolvable:$true] %s316
          %322 = dma.hbm_to_vmem [thread:$0]  %s315, 4096, %s317, %s306, 256, 256, 16
        $region40: #{tpu_custom_call.1} parent=31 // pred_fallthru
          _
        // Predicated region
        $region41: #{tpu_custom_call.1} parent=31 // pred_check
          %p323 = pneg %p109
        $region42: #{tpu_custom_call.1} parent=31 // pred_check_branch
          %325 = sbr.rel (%p323) target = $region44
        $region43: #{tpu_custom_call.1} parent=31 // pred_region
          %s326 = sand.u32 %s23, 1
          %s327 = scalar_lea.sflag [#allocation7], %s326
          %s328 = sand.u32 %s99, 1
          %s329 = smul.addr %s328, 256
          %s330 = scalar_lea.vmem [#allocation8], %s329
          %s332 = ssub.s32 4096, 4096
          %333 = vsyncadd %s327, %s332
          %s334 = smul.addr %s30, 32
          %s335 = smul.addr %s334, 128
          %s336 = scalar_lea.hbm %s2, %s335
          %s337 = sshll.u32 %s330, 4
          %s338 = int_to_ptr.vmem [resolvable:$true] %s337
          %343 = dma.hbm_to_vmem [thread:$0]  %s336, 4096, %s338, %s327, 256, 256, 16
        $region44: #{tpu_custom_call.1} parent=31 // pred_fallthru
          _
      $region32: #{tpu_custom_call.1} parent=5 // pred_fallthru
        _
      %p344 = scmp.le.s32.totalorder 1, %s23
      %p345 = scmp.lt.s32.totalorder %s23, 3
      %p346 = pnand %p344, %p345
      %p347 = pneg %p346
      // Predicated region
      $region45: #{tpu_custom_call.1} parent=5 // pred_check
        _
      $region46: #{tpu_custom_call.1} parent=5 // pred_check_branch
        %349 = sbr.rel (%p346) target = $region48
      $region47: #{tpu_custom_call.1} parent=5 // pred_region
        %s350 = ssub.s32 %s23, 1
        %s351 = sand.u32 %s50, 1
        %s352 = scalar_lea.sflag [#allocation4], %s351
        %s353 = sand.u32 %s50, 1
        %s354 = smul.addr %s353, 256
        %s355 = scalar_lea.vmem [#allocation3], %s354
        // Predicated region
        $region49: #{tpu_custom_call.1} parent=47 // pred_check
          %p356 = pneg %p63
        $region50: #{tpu_custom_call.1} parent=47 // pred_check_branch
          %358 = sbr.rel (%p356) target = $region52
        $region51: #{tpu_custom_call.1} parent=47 // pred_region
          %359 = dma.done %s352, 4096
        $region52: #{tpu_custom_call.1} parent=47 // pred_fallthru
          _
        %s360 = sand.u32 %s28, 1
        %s361 = scalar_lea.sflag [#allocation7], %s360
        %s362 = sand.u32 %s76, 1
        %s363 = smul.addr %s362, 256
        %s364 = scalar_lea.vmem [#allocation6], %s363
        // Predicated region
        $region53: #{tpu_custom_call.1} parent=47 // pred_check
          %p365 = pneg %p89
        $region54: #{tpu_custom_call.1} parent=47 // pred_check_branch
          %367 = sbr.rel (%p365) target = $region56
        $region55: #{tpu_custom_call.1} parent=47 // pred_region
          %368 = dma.done %s361, 4096
        $region56: #{tpu_custom_call.1} parent=47 // pred_fallthru
          _
        %s369 = sand.u32 %s28, 1
        %s370 = scalar_lea.sflag [#allocation7], %s369
        %s371 = sand.u32 %s102, 1
        %s372 = smul.addr %s371, 256
        %s373 = scalar_lea.vmem [#allocation8], %s372
        // Predicated region
        $region57: #{tpu_custom_call.1} parent=47 // pred_check
          %p374 = pneg %p115
        $region58: #{tpu_custom_call.1} parent=47 // pred_check_branch
          %376 = sbr.rel (%p374) target = $region60
        $region59: #{tpu_custom_call.1} parent=47 // pred_region
          %377 = dma.done %s370, 4096
        $region60: #{tpu_custom_call.1} parent=47 // pred_fallthru
          _
        // Predicated region
        $region61: #{tpu_custom_call.1} parent=47 // pred_check
          %p378 = pneg %p136
        $region62: #{tpu_custom_call.1} parent=47 // pred_check_branch
          %380 = sbr.rel (%p378) target = $region64
        $region63: #{tpu_custom_call.1} parent=47 // pred_region
          %381 = dma.done [#allocation10], 12288
        $region64: #{tpu_custom_call.1} parent=47 // pred_fallthru
          _
        // Predicated region
        $region65: #{tpu_custom_call.1} parent=47 // pred_check
          %p382 = pneg %p178
        $region66: #{tpu_custom_call.1} parent=47 // pred_check_branch
          %384 = sbr.rel (%p382) target = $region68
        $region67: #{tpu_custom_call.1} parent=47 // pred_region
          %385 = dma.done [#allocation10], 4096
        $region68: #{tpu_custom_call.1} parent=47 // pred_fallthru
          _
        %s386 = sand.u32 %s50, 1
        %s387 = scalar_lea.sflag [#allocation4], %s386
        %s388 = sand.u32 %s50, 1
        %s389 = smul.addr %s388, 256
        %s390 = scalar_lea.vmem [#allocation3], %s389
        %p391 = pneg %p63
        %p392 = pneg %p60
        %s393 = sand.u32 %s28, 1
        %s394 = scalar_lea.sflag [#allocation7], %s393
        %s395 = sand.u32 %s76, 1
        %s396 = smul.addr %s395, 256
        %s397 = scalar_lea.vmem [#allocation6], %s396
        %p398 = pneg %p89
        %p399 = pneg %p86
        %s400 = sand.u32 %s28, 1
        %s401 = scalar_lea.sflag [#allocation7], %s400
        %s402 = sand.u32 %s102, 1
        %s403 = smul.addr %s402, 256
        %s404 = scalar_lea.vmem [#allocation8], %s403
        %p405 = pneg %p115
        %p406 = pneg %p112
        %p407 = pneg %p136
        %p408 = pneg %p133
        %p409 = pneg %p157
        %p410 = pneg %p154
        %p411 = pneg %p178
        %p412 = pneg %p175
        %p413 = pneg %p199
        %p414 = pneg %p196
        %p415 = pneg %p227
        %p416 = pneg %p224
        %s417 = sand.u32 %s214, 1
        %s418 = scalar_lea.sflag [#allocation5], %s417
        %s419 = sand.u32 %s214, 1
        %s420 = smul.addr %s419, 256
        %s421 = scalar_lea.vmem [#allocation12], %s420
        %s422 = smul.u32 16, %s33
        %s423 = smul.u32 16, %s33
        %p425 = scmp.eq.s32.totalorder %s33, 0
        // Predicated region
        $region69: #{tpu_custom_call.1} parent=47 // pred_check
          %p426 = pneg %p425
        $region70: #{tpu_custom_call.1} parent=47 // pred_check_branch
          %428 = sbr.rel (%p426) target = $region72
        $region71: #{tpu_custom_call.1} parent=47 // pred_region
          %v429 = vld [vmem:[%s364] sm:$0xff]
          %v430 = vld [vmem:[%s364 + $0x8] sm:$0xff]
          %v431 = vld [vmem:[%s364 + $0x10] sm:$0xff]
          %v432 = vld [vmem:[%s364 + $0x18] sm:$0xff]
          %v433 = vld [vmem:[%s364 + $0x20] sm:$0xff]
          %v434 = vld [vmem:[%s364 + $0x28] sm:$0xff]
          %v435 = vld [vmem:[%s364 + $0x30] sm:$0xff]
          %v436 = vld [vmem:[%s364 + $0x38] sm:$0xff]
          %v437 = vld [vmem:[%s364 + $0x40] sm:$0xff]
          %v438 = vld [vmem:[%s364 + $0x48] sm:$0xff]
          %v439 = vld [vmem:[%s364 + $0x50] sm:$0xff]
          %v440 = vld [vmem:[%s364 + $0x58] sm:$0xff]
          %v441 = vld [vmem:[%s364 + $0x60] sm:$0xff]
          %v442 = vld [vmem:[%s364 + $0x68] sm:$0xff]
          %v443 = vld [vmem:[%s364 + $0x70] sm:$0xff]
          %v444 = vld [vmem:[%s364 + $0x78] sm:$0xff]
          %v445 = vld [vmem:[%s364 + $0x80] sm:$0xff]
          %v446 = vld [vmem:[%s364 + $0x88] sm:$0xff]
          %v447 = vld [vmem:[%s364 + $0x90] sm:$0xff]
          %v448 = vld [vmem:[%s364 + $0x98] sm:$0xff]
          %v449 = vld [vmem:[%s364 + $0xa0] sm:$0xff]
          %v450 = vld [vmem:[%s364 + $0xa8] sm:$0xff]
          %v451 = vld [vmem:[%s364 + $0xb0] sm:$0xff]
          %v452 = vld [vmem:[%s364 + $0xb8] sm:$0xff]
          %v453 = vld [vmem:[%s364 + $0xc0] sm:$0xff]
          %v454 = vld [vmem:[%s364 + $0xc8] sm:$0xff]
          %v455 = vld [vmem:[%s364 + $0xd0] sm:$0xff]
          %v456 = vld [vmem:[%s364 + $0xd8] sm:$0xff]
          %v457 = vld [vmem:[%s364 + $0xe0] sm:$0xff]
          %v458 = vld [vmem:[%s364 + $0xe8] sm:$0xff]
          %v459 = vld [vmem:[%s364 + $0xf0] sm:$0xff]
          %v460 = vld [vmem:[%s364 + $0xf8] sm:$0xff]
          %v461 = vpack.c.bf16 %v431, %v429
          %v462 = vpack.c.bf16 %v432, %v430
          %v463 = vpack.c.bf16 %v435, %v433
          %v464 = vpack.c.bf16 %v436, %v434
          %v465 = vpack.c.bf16 %v439, %v437
          %v466 = vpack.c.bf16 %v440, %v438
          %v467 = vpack.c.bf16 %v443, %v441
          %v468 = vpack.c.bf16 %v444, %v442
          %v469 = vpack.c.bf16 %v447, %v445
          %v470 = vpack.c.bf16 %v448, %v446
          %v471 = vpack.c.bf16 %v451, %v449
          %v472 = vpack.c.bf16 %v452, %v450
          %v473 = vpack.c.bf16 %v455, %v453
          %v474 = vpack.c.bf16 %v456, %v454
          %v475 = vpack.c.bf16 %v459, %v457
          %v476 = vpack.c.bf16 %v460, %v458
          %s477 = scalar_lea.vmem [#allocation9], 256
          %v478 = vld [vmem:[%s477] sm:$0xff]
          %v479 = vld [vmem:[%s477 + $0x8] sm:$0xff]
          %v480 = vld [vmem:[%s477 + $0x10] sm:$0xff]
          %v481 = vld [vmem:[%s477 + $0x18] sm:$0xff]
          %v482 = vld [vmem:[%s477 + $0x20] sm:$0xff]
          %v483 = vld [vmem:[%s477 + $0x28] sm:$0xff]
          %v484 = vld [vmem:[%s477 + $0x30] sm:$0xff]
          %v485 = vld [vmem:[%s477 + $0x38] sm:$0xff]
          %v486 = vld [vmem:[%s477 + $0x40] sm:$0xff]
          %v487 = vld [vmem:[%s477 + $0x48] sm:$0xff]
          %v488 = vld [vmem:[%s477 + $0x50] sm:$0xff]
          %v489 = vld [vmem:[%s477 + $0x58] sm:$0xff]
          %v490 = vld [vmem:[%s477 + $0x60] sm:$0xff]
          %v491 = vld [vmem:[%s477 + $0x68] sm:$0xff]
          %v492 = vld [vmem:[%s477 + $0x70] sm:$0xff]
          %v493 = vld [vmem:[%s477 + $0x78] sm:$0xff]
          %v494 = vld [vmem:[%s477 + $0x80] sm:$0xff]
          %v495 = vld [vmem:[%s477 + $0x88] sm:$0xff]
          %v496 = vld [vmem:[%s477 + $0x90] sm:$0xff]
          %v497 = vld [vmem:[%s477 + $0x98] sm:$0xff]
          %v498 = vld [vmem:[%s477 + $0xa0] sm:$0xff]
          %v499 = vld [vmem:[%s477 + $0xa8] sm:$0xff]
          %v500 = vld [vmem:[%s477 + $0xb0] sm:$0xff]
          %v501 = vld [vmem:[%s477 + $0xb8] sm:$0xff]
          %v502 = vld [vmem:[%s477 + $0xc0] sm:$0xff]
          %v503 = vld [vmem:[%s477 + $0xc8] sm:$0xff]
          %v504 = vld [vmem:[%s477 + $0xd0] sm:$0xff]
          %v505 = vld [vmem:[%s477 + $0xd8] sm:$0xff]
          %v506 = vld [vmem:[%s477 + $0xe0] sm:$0xff]
          %v507 = vld [vmem:[%s477 + $0xe8] sm:$0xff]
          %v508 = vld [vmem:[%s477 + $0xf0] sm:$0xff]
          %v509 = vld [vmem:[%s477 + $0xf8] sm:$0xff]
          %s510 = scalar_lea.vmem %s4, 2
          %v511 = vld [vmem:[%s510] sm:$0x3]
          %v512 = vunpack.c.l.bf16 %v511
          %v514 = vlaneseq
          %v515 = vshrl.u32 %v514, 7
          %v516 = vsub.s32 0, %v515
          %v517 = vrot.slane %v512, %v516
          %v518 = vlaneseq
          %v519 = vshrl.u32 %v518, 7
          %v520 = vsub.s32 2, %v519
          %v521 = vrot.slane %v512, %v520
          %v524 = vlaneseq
          %v525 = vshrl.u32 %v524, 7
          %v526 = vsub.s32 0, %v525
          %v527 = vrot.slane %v517, %v526
          %v528 = vlaneseq
          %v529 = vshrl.u32 %v528, 7
          %v530 = vsub.s32 0, %v529
          %v531 = vrot.slane %v521, %v530
          %v564 = vunpack.c.l.b16 %v478
          %v565 = vunpack.c.h.b16 %v478
          %v566 = vunpack.c.l.b16 %v479
          %v567 = vunpack.c.h.b16 %v479
          %v568 = vunpack.c.l.b16 %v480
          %v569 = vunpack.c.h.b16 %v480
          %v570 = vunpack.c.l.b16 %v481
          %v571 = vunpack.c.h.b16 %v481
          %v572 = vunpack.c.l.b16 %v482
          %v573 = vunpack.c.h.b16 %v482
          %v574 = vunpack.c.l.b16 %v483
          %v575 = vunpack.c.h.b16 %v483
          %v576 = vunpack.c.l.b16 %v484
          %v577 = vunpack.c.h.b16 %v484
          %v578 = vunpack.c.l.b16 %v485
          %v579 = vunpack.c.h.b16 %v485
          %v580 = vunpack.c.l.b16 %v486
          %v581 = vunpack.c.h.b16 %v486
          %v582 = vunpack.c.l.b16 %v487
          %v583 = vunpack.c.h.b16 %v487
          %v584 = vunpack.c.l.b16 %v488
          %v585 = vunpack.c.h.b16 %v488
          %v586 = vunpack.c.l.b16 %v489
          %v587 = vunpack.c.h.b16 %v489
          %v588 = vunpack.c.l.b16 %v490
          %v589 = vunpack.c.h.b16 %v490
          %v590 = vunpack.c.l.b16 %v491
          %v591 = vunpack.c.h.b16 %v491
          %v592 = vunpack.c.l.b16 %v492
          %v593 = vunpack.c.h.b16 %v492
          %v594 = vunpack.c.l.b16 %v493
          %v595 = vunpack.c.h.b16 %v493
          %v596 = vunpack.c.l.b16 %v494
          %v597 = vunpack.c.h.b16 %v494
          %v598 = vunpack.c.l.b16 %v495
          %v599 = vunpack.c.h.b16 %v495
          %v600 = vunpack.c.l.b16 %v496
          %v601 = vunpack.c.h.b16 %v496
          %v602 = vunpack.c.l.b16 %v497
          %v603 = vunpack.c.h.b16 %v497
          %v604 = vunpack.c.l.b16 %v498
          %v605 = vunpack.c.h.b16 %v498
          %v606 = vunpack.c.l.b16 %v499
          %v607 = vunpack.c.h.b16 %v499
          %v608 = vunpack.c.l.b16 %v500
          %v609 = vunpack.c.h.b16 %v500
          %v610 = vunpack.c.l.b16 %v501
          %v611 = vunpack.c.h.b16 %v501
          %v612 = vunpack.c.l.b16 %v502
          %v613 = vunpack.c.h.b16 %v502
          %v614 = vunpack.c.l.b16 %v503
          %v615 = vunpack.c.h.b16 %v503
          %v616 = vunpack.c.l.b16 %v504
          %v617 = vunpack.c.h.b16 %v504
          %v618 = vunpack.c.l.b16 %v505
          %v619 = vunpack.c.h.b16 %v505
          %v620 = vunpack.c.l.b16 %v506
          %v621 = vunpack.c.h.b16 %v506
          %v622 = vunpack.c.l.b16 %v507
          %v623 = vunpack.c.h.b16 %v507
          %v624 = vunpack.c.l.b16 %v508
          %v625 = vunpack.c.h.b16 %v508
          %v626 = vunpack.c.l.b16 %v509
          %v627 = vunpack.c.h.b16 %v509
          %v628 = vpack.c.b16 %v566, %v564
          %v629 = vpack.c.b16 %v567, %v565
          %v630 = vpack.c.b16 %v570, %v568
          %v631 = vpack.c.b16 %v571, %v569
          %v632 = vpack.c.b16 %v574, %v572
          %v633 = vpack.c.b16 %v575, %v573
          %v634 = vpack.c.b16 %v578, %v576
          %v635 = vpack.c.b16 %v579, %v577
          %v636 = vpack.c.b16 %v582, %v580
          %v637 = vpack.c.b16 %v583, %v581
          %v638 = vpack.c.b16 %v586, %v584
          %v639 = vpack.c.b16 %v587, %v585
          %v640 = vpack.c.b16 %v590, %v588
          %v641 = vpack.c.b16 %v591, %v589
          %v642 = vpack.c.b16 %v594, %v592
          %v643 = vpack.c.b16 %v595, %v593
          %v644 = vpack.c.b16 %v598, %v596
          %v645 = vpack.c.b16 %v599, %v597
          %v646 = vpack.c.b16 %v602, %v600
          %v647 = vpack.c.b16 %v603, %v601
          %v648 = vpack.c.b16 %v606, %v604
          %v649 = vpack.c.b16 %v607, %v605
          %v650 = vpack.c.b16 %v610, %v608
          %v651 = vpack.c.b16 %v611, %v609
          %v652 = vpack.c.b16 %v614, %v612
          %v653 = vpack.c.b16 %v615, %v613
          %v654 = vpack.c.b16 %v618, %v616
          %v655 = vpack.c.b16 %v619, %v617
          %v656 = vpack.c.b16 %v622, %v620
          %v657 = vpack.c.b16 %v623, %v621
          %v658 = vpack.c.b16 %v626, %v624
          %v659 = vpack.c.b16 %v627, %v625
          %692 = vmatprep.subr.bf16.mxu0 %v629
          %693 = vmatpush1.bf16.msra.mxu0 %v628
          %694 = vmatprep.subr.bf16.mxu0 %v631
          %695 = vmatpush1.bf16.msra.mxu0 %v630
          %696 = vmatprep.subr.bf16.mxu0 %v633
          %697 = vmatpush1.bf16.msra.mxu0 %v632
          %698 = vmatprep.subr.bf16.mxu0 %v635
          %699 = vmatpush1.bf16.msra.mxu0 %v634
          %700 = vmatprep.subr.bf16.mxu0 %v637
          %701 = vmatpush1.bf16.msra.mxu0 %v636
          %702 = vmatprep.subr.bf16.mxu0 %v639
          %703 = vmatpush1.bf16.msra.mxu0 %v638
          %704 = vmatprep.subr.bf16.mxu0 %v641
          %705 = vmatpush1.bf16.msra.mxu0 %v640
          %706 = vmatprep.subr.bf16.mxu0 %v643
          %707 = vmatpush1.bf16.msra.mxu0 %v642
          %708 = vmatprep.subr.bf16.mxu0 %v645
          %709 = vmatpush1.bf16.msra.mxu0 %v644
          %710 = vmatprep.subr.bf16.mxu0 %v647
          %711 = vmatpush1.bf16.msra.mxu0 %v646
          %712 = vmatprep.subr.bf16.mxu0 %v649
          %713 = vmatpush1.bf16.msra.mxu0 %v648
          %714 = vmatprep.subr.bf16.mxu0 %v651
          %715 = vmatpush1.bf16.msra.mxu0 %v650
          %716 = vmatprep.subr.bf16.mxu0 %v653
          %717 = vmatpush1.bf16.msra.mxu0 %v652
          %718 = vmatprep.subr.bf16.mxu0 %v655
          %719 = vmatpush1.bf16.msra.mxu0 %v654
          %720 = vmatprep.subr.bf16.mxu0 %v657
          %721 = vmatpush1.bf16.msra.mxu0 %v656
          %722 = vmatprep.subr.bf16.mxu0 %v659
          %723 = vmatpush1.bf16.msra.mxu0 %v658
          %724 = vmatprep.mubr.bf16.mxu0 %v462
          %725 = vmatmul.mubr.bf16.gmra.mrb[0].mxu0 %v461
          %v726 = vpop.f32.mrb[0].mxu0
          %v727 = vadd.f32 %v527, %v726
          %v728 = vpop.f32.mrb[0].mxu0
          %v729 = vadd.f32 %v531, %v728
          %v730 = vpop.f32.mrb[0].mxu0
          %v731 = vadd.f32 %v527, %v730
          %v732 = vpop.f32.mrb[0].mxu0
          %v733 = vadd.f32 %v531, %v732
          %734 = vmatprep.mubr.bf16.mxu0 %v464
          %735 = vmatmul.mubr.bf16.gmra.mrb[0].mxu0 %v463
          %v736 = vpop.f32.mrb[0].mxu0
          %v737 = vadd.f32 %v527, %v736
          %v738 = vpop.f32.mrb[0].mxu0
          %v739 = vadd.f32 %v531, %v738
          %v740 = vpop.f32.mrb[0].mxu0
          %v741 = vadd.f32 %v527, %v740
          %v742 = vpop.f32.mrb[0].mxu0
          %v743 = vadd.f32 %v531, %v742
          %744 = vmatprep.mubr.bf16.mxu0 %v466
          %745 = vmatmul.mubr.bf16.gmra.mrb[0].mxu0 %v465
          %v746 = vpop.f32.mrb[0].mxu0
          %v747 = vadd.f32 %v527, %v746
          %v748 = vpop.f32.mrb[0].mxu0
          %v749 = vadd.f32 %v531, %v748
          %v750 = vpop.f32.mrb[0].mxu0
          %v751 = vadd.f32 %v527, %v750
          %v752 = vpop.f32.mrb[0].mxu0
          %v753 = vadd.f32 %v531, %v752
          %754 = vmatprep.mubr.bf16.mxu0 %v468
          %755 = vmatmul.mubr.bf16.gmra.mrb[0].mxu0 %v467
          %v756 = vpop.f32.mrb[0].mxu0
          %v757 = vadd.f32 %v527, %v756
          %v758 = vpop.f32.mrb[0].mxu0
          %v759 = vadd.f32 %v531, %v758
          %v760 = vpop.f32.mrb[0].mxu0
          %v761 = vadd.f32 %v527, %v760
          %v762 = vpop.f32.mrb[0].mxu0
          %v763 = vadd.f32 %v531, %v762
          %764 = vmatprep.mubr.bf16.mxu0 %v470
          %765 = vmatmul.mubr.bf16.gmra.mrb[0].mxu0 %v469
          %v766 = vpop.f32.mrb[0].mxu0
          %v767 = vadd.f32 %v527, %v766
          %v768 = vpop.f32.mrb[0].mxu0
          %v769 = vadd.f32 %v531, %v768
          %v770 = vpop.f32.mrb[0].mxu0
          %v771 = vadd.f32 %v527, %v770
          %v772 = vpop.f32.mrb[0].mxu0
          %v773 = vadd.f32 %v531, %v772
          %774 = vmatprep.mubr.bf16.mxu0 %v472
          %775 = vmatmul.mubr.bf16.gmra.mrb[0].mxu0 %v471
          %v776 = vpop.f32.mrb[0].mxu0
          %v777 = vadd.f32 %v527, %v776
          %v778 = vpop.f32.mrb[0].mxu0
          %v779 = vadd.f32 %v531, %v778
          %v780 = vpop.f32.mrb[0].mxu0
          %v781 = vadd.f32 %v527, %v780
          %v782 = vpop.f32.mrb[0].mxu0
          %v783 = vadd.f32 %v531, %v782
          %784 = vmatprep.mubr.bf16.mxu0 %v474
          %785 = vmatmul.mubr.bf16.gmra.mrb[0].mxu0 %v473
          %v786 = vpop.f32.mrb[0].mxu0
          %v787 = vadd.f32 %v527, %v786
          %v788 = vpop.f32.mrb[0].mxu0
          %v789 = vadd.f32 %v531, %v788
          %v790 = vpop.f32.mrb[0].mxu0
          %v791 = vadd.f32 %v527, %v790
          %v792 = vpop.f32.mrb[0].mxu0
          %v793 = vadd.f32 %v531, %v792
          %794 = vmatprep.mubr.bf16.mxu0 %v476
          %795 = vmatmul.mubr.bf16.gmra.mrb[0].mxu0 %v475
          %v796 = vpop.f32.mrb[0].mxu0
          %v797 = vadd.f32 %v527, %v796
          %v798 = vpop.f32.mrb[0].mxu0
          %v799 = vadd.f32 %v531, %v798
          %v800 = vpop.f32.mrb[0].mxu0
          %v801 = vadd.f32 %v527, %v800
          %v802 = vpop.f32.mrb[0].mxu0
          %v803 = vadd.f32 %v531, %v802
          %804 = vdwg.mxu0
          %v805 = vld [vmem:[%s373] sm:$0xff]
          %v806 = vld [vmem:[%s373 + $0x8] sm:$0xff]
          %v807 = vld [vmem:[%s373 + $0x10] sm:$0xff]
          %v808 = vld [vmem:[%s373 + $0x18] sm:$0xff]
          %v809 = vld [vmem:[%s373 + $0x20] sm:$0xff]
          %v810 = vld [vmem:[%s373 + $0x28] sm:$0xff]
          %v811 = vld [vmem:[%s373 + $0x30] sm:$0xff]
          %v812 = vld [vmem:[%s373 + $0x38] sm:$0xff]
          %v813 = vld [vmem:[%s373 + $0x40] sm:$0xff]
          %v814 = vld [vmem:[%s373 + $0x48] sm:$0xff]
          %v815 = vld [vmem:[%s373 + $0x50] sm:$0xff]
          %v816 = vld [vmem:[%s373 + $0x58] sm:$0xff]
          %v817 = vld [vmem:[%s373 + $0x60] sm:$0xff]
          %v818 = vld [vmem:[%s373 + $0x68] sm:$0xff]
          %v819 = vld [vmem:[%s373 + $0x70] sm:$0xff]
          %v820 = vld [vmem:[%s373 + $0x78] sm:$0xff]
          %v821 = vld [vmem:[%s373 + $0x80] sm:$0xff]
          %v822 = vld [vmem:[%s373 + $0x88] sm:$0xff]
          %v823 = vld [vmem:[%s373 + $0x90] sm:$0xff]
          %v824 = vld [vmem:[%s373 + $0x98] sm:$0xff]
          %v825 = vld [vmem:[%s373 + $0xa0] sm:$0xff]
          %v826 = vld [vmem:[%s373 + $0xa8] sm:$0xff]
          %v827 = vld [vmem:[%s373 + $0xb0] sm:$0xff]
          %v828 = vld [vmem:[%s373 + $0xb8] sm:$0xff]
          %v829 = vld [vmem:[%s373 + $0xc0] sm:$0xff]
          %v830 = vld [vmem:[%s373 + $0xc8] sm:$0xff]
          %v831 = vld [vmem:[%s373 + $0xd0] sm:$0xff]
          %v832 = vld [vmem:[%s373 + $0xd8] sm:$0xff]
          %v833 = vld [vmem:[%s373 + $0xe0] sm:$0xff]
          %v834 = vld [vmem:[%s373 + $0xe8] sm:$0xff]
          %v835 = vld [vmem:[%s373 + $0xf0] sm:$0xff]
          %v836 = vld [vmem:[%s373 + $0xf8] sm:$0xff]
          %v837 = vpack.c.bf16 %v807, %v805
          %v838 = vpack.c.bf16 %v808, %v806
          %v839 = vpack.c.bf16 %v811, %v809
          %v840 = vpack.c.bf16 %v812, %v810
          %v841 = vpack.c.bf16 %v815, %v813
          %v842 = vpack.c.bf16 %v816, %v814
          %v843 = vpack.c.bf16 %v819, %v817
          %v844 = vpack.c.bf16 %v820, %v818
          %v845 = vpack.c.bf16 %v823, %v821
          %v846 = vpack.c.bf16 %v824, %v822
          %v847 = vpack.c.bf16 %v827, %v825
          %v848 = vpack.c.bf16 %v828, %v826
          %v849 = vpack.c.bf16 %v831, %v829
          %v850 = vpack.c.bf16 %v832, %v830
          %v851 = vpack.c.bf16 %v835, %v833
          %v852 = vpack.c.bf16 %v836, %v834
          %s853 = scalar_lea.vmem [#allocation9], 512
          %v854 = vld [vmem:[%s853] sm:$0xff]
          %v855 = vld [vmem:[%s853 + $0x8] sm:$0xff]
          %v856 = vld [vmem:[%s853 + $0x10] sm:$0xff]
          %v857 = vld [vmem:[%s853 + $0x18] sm:$0xff]
          %v858 = vld [vmem:[%s853 + $0x20] sm:$0xff]
          %v859 = vld [vmem:[%s853 + $0x28] sm:$0xff]
          %v860 = vld [vmem:[%s853 + $0x30] sm:$0xff]
          %v861 = vld [vmem:[%s853 + $0x38] sm:$0xff]
          %v862 = vld [vmem:[%s853 + $0x40] sm:$0xff]
          %v863 = vld [vmem:[%s853 + $0x48] sm:$0xff]
          %v864 = vld [vmem:[%s853 + $0x50] sm:$0xff]
          %v865 = vld [vmem:[%s853 + $0x58] sm:$0xff]
          %v866 = vld [vmem:[%s853 + $0x60] sm:$0xff]
          %v867 = vld [vmem:[%s853 + $0x68] sm:$0xff]
          %v868 = vld [vmem:[%s853 + $0x70] sm:$0xff]
          %v869 = vld [vmem:[%s853 + $0x78] sm:$0xff]
          %v870 = vld [vmem:[%s853 + $0x80] sm:$0xff]
          %v871 = vld [vmem:[%s853 + $0x88] sm:$0xff]
          %v872 = vld [vmem:[%s853 + $0x90] sm:$0xff]
          %v873 = vld [vmem:[%s853 + $0x98] sm:$0xff]
          %v874 = vld [vmem:[%s853 + $0xa0] sm:$0xff]
          %v875 = vld [vmem:[%s853 + $0xa8] sm:$0xff]
          %v876 = vld [vmem:[%s853 + $0xb0] sm:$0xff]
          %v877 = vld [vmem:[%s853 + $0xb8] sm:$0xff]
          %v878 = vld [vmem:[%s853 + $0xc0] sm:$0xff]
          %v879 = vld [vmem:[%s853 + $0xc8] sm:$0xff]
          %v880 = vld [vmem:[%s853 + $0xd0] sm:$0xff]
          %v881 = vld [vmem:[%s853 + $0xd8] sm:$0xff]
          %v882 = vld [vmem:[%s853 + $0xe0] sm:$0xff]
          %v883 = vld [vmem:[%s853 + $0xe8] sm:$0xff]
          %v884 = vld [vmem:[%s853 + $0xf0] sm:$0xff]
          %v885 = vld [vmem:[%s853 + $0xf8] sm:$0xff]
          %s886 = scalar_lea.vmem %s4, 4
          %v887 = vld [vmem:[%s886] sm:$0x3]
          %v888 = vunpack.c.l.bf16 %v887
          %v890 = vlaneseq
          %v891 = vshrl.u32 %v890, 7
          %v892 = vsub.s32 0, %v891
          %v893 = vrot.slane %v888, %v892
          %v894 = vlaneseq
          %v895 = vshrl.u32 %v894, 7
          %v896 = vsub.s32 2, %v895
          %v897 = vrot.slane %v888, %v896
          %v900 = vlaneseq
          %v901 = vshrl.u32 %v900, 7
          %v902 = vsub.s32 0, %v901
          %v903 = vrot.slane %v893, %v902
          %v904 = vlaneseq
          %v905 = vshrl.u32 %v904, 7
          %v906 = vsub.s32 0, %v905
          %v907 = vrot.slane %v897, %v906
          %v940 = vunpack.c.l.b16 %v854
          %v941 = vunpack.c.h.b16 %v854
          %v942 = vunpack.c.l.b16 %v855
          %v943 = vunpack.c.h.b16 %v855
          %v944 = vunpack.c.l.b16 %v856
          %v945 = vunpack.c.h.b16 %v856
          %v946 = vunpack.c.l.b16 %v857
          %v947 = vunpack.c.h.b16 %v857
          %v948 = vunpack.c.l.b16 %v858
          %v949 = vunpack.c.h.b16 %v858
          %v950 = vunpack.c.l.b16 %v859
          %v951 = vunpack.c.h.b16 %v859
          %v952 = vunpack.c.l.b16 %v860
          %v953 = vunpack.c.h.b16 %v860
          %v954 = vunpack.c.l.b16 %v861
          %v955 = vunpack.c.h.b16 %v861
          %v956 = vunpack.c.l.b16 %v862
          %v957 = vunpack.c.h.b16 %v862
          %v958 = vunpack.c.l.b16 %v863
          %v959 = vunpack.c.h.b16 %v863
          %v960 = vunpack.c.l.b16 %v864
          %v961 = vunpack.c.h.b16 %v864
          %v962 = vunpack.c.l.b16 %v865
          %v963 = vunpack.c.h.b16 %v865
          %v964 = vunpack.c.l.b16 %v866
          %v965 = vunpack.c.h.b16 %v866
          %v966 = vunpack.c.l.b16 %v867
          %v967 = vunpack.c.h.b16 %v867
          %v968 = vunpack.c.l.b16 %v868
          %v969 = vunpack.c.h.b16 %v868
          %v970 = vunpack.c.l.b16 %v869
          %v971 = vunpack.c.h.b16 %v869
          %v972 = vunpack.c.l.b16 %v870
          %v973 = vunpack.c.h.b16 %v870
          %v974 = vunpack.c.l.b16 %v871
          %v975 = vunpack.c.h.b16 %v871
          %v976 = vunpack.c.l.b16 %v872
          %v977 = vunpack.c.h.b16 %v872
          %v978 = vunpack.c.l.b16 %v873
          %v979 = vunpack.c.h.b16 %v873
          %v980 = vunpack.c.l.b16 %v874
          %v981 = vunpack.c.h.b16 %v874
          %v982 = vunpack.c.l.b16 %v875
          %v983 = vunpack.c.h.b16 %v875
          %v984 = vunpack.c.l.b16 %v876
          %v985 = vunpack.c.h.b16 %v876
          %v986 = vunpack.c.l.b16 %v877
          %v987 = vunpack.c.h.b16 %v877
          %v988 = vunpack.c.l.b16 %v878
          %v989 = vunpack.c.h.b16 %v878
          %v990 = vunpack.c.l.b16 %v879
          %v991 = vunpack.c.h.b16 %v879
          %v992 = vunpack.c.l.b16 %v880
          %v993 = vunpack.c.h.b16 %v880
          %v994 = vunpack.c.l.b16 %v881
          %v995 = vunpack.c.h.b16 %v881
          %v996 = vunpack.c.l.b16 %v882
          %v997 = vunpack.c.h.b16 %v882
          %v998 = vunpack.c.l.b16 %v883
          %v999 = vunpack.c.h.b16 %v883
          %v1000 = vunpack.c.l.b16 %v884
          %v1001 = vunpack.c.h.b16 %v884
          %v1002 = vunpack.c.l.b16 %v885
          %v1003 = vunpack.c.h.b16 %v885
          %v1004 = vpack.c.b16 %v942, %v940
          %v1005 = vpack.c.b16 %v943, %v941
          %v1006 = vpack.c.b16 %v946, %v944
          %v1007 = vpack.c.b16 %v947, %v945
          %v1008 = vpack.c.b16 %v950, %v948
          %v1009 = vpack.c.b16 %v951, %v949
          %v1010 = vpack.c.b16 %v954, %v952
          %v1011 = vpack.c.b16 %v955, %v953
          %v1012 = vpack.c.b16 %v958, %v956
          %v1013 = vpack.c.b16 %v959, %v957
          %v1014 = vpack.c.b16 %v962, %v960
          %v1015 = vpack.c.b16 %v963, %v961
          %v1016 = vpack.c.b16 %v966, %v964
          %v1017 = vpack.c.b16 %v967, %v965
          %v1018 = vpack.c.b16 %v970, %v968
          %v1019 = vpack.c.b16 %v971, %v969
          %v1020 = vpack.c.b16 %v974, %v972
          %v1021 = vpack.c.b16 %v975, %v973
          %v1022 = vpack.c.b16 %v978, %v976
          %v1023 = vpack.c.b16 %v979, %v977
          %v1024 = vpack.c.b16 %v982, %v980
          %v1025 = vpack.c.b16 %v983, %v981
          %v1026 = vpack.c.b16 %v986, %v984
          %v1027 = vpack.c.b16 %v987, %v985
          %v1028 = vpack.c.b16 %v990, %v988
          %v1029 = vpack.c.b16 %v991, %v989
          %v1030 = vpack.c.b16 %v994, %v992
          %v1031 = vpack.c.b16 %v995, %v993
          %v1032 = vpack.c.b16 %v998, %v996
          %v1033 = vpack.c.b16 %v999, %v997
          %v1034 = vpack.c.b16 %v1002, %v1000
          %v1035 = vpack.c.b16 %v1003, %v1001
          %1068 = vmatprep.subr.bf16.mxu0 %v1005
          %1069 = vmatpush1.bf16.msra.mxu0 %v1004
          %1070 = vmatprep.subr.bf16.mxu0 %v1007
          %1071 = vmatpush1.bf16.msra.mxu0 %v1006
          %1072 = vmatprep.subr.bf16.mxu0 %v1009
          %1073 = vmatpush1.bf16.msra.mxu0 %v1008
          %1074 = vmatprep.subr.bf16.mxu0 %v1011
          %1075 = vmatpush1.bf16.msra.mxu0 %v1010
          %1076 = vmatprep.subr.bf16.mxu0 %v1013
          %1077 = vmatpush1.bf16.msra.mxu0 %v1012
          %1078 = vmatprep.subr.bf16.mxu0 %v1015
          %1079 = vmatpush1.bf16.msra.mxu0 %v1014
          %1080 = vmatprep.subr.bf16.mxu0 %v1017
          %1081 = vmatpush1.bf16.msra.mxu0 %v1016
          %1082 = vmatprep.subr.bf16.mxu0 %v1019
          %1083 = vmatpush1.bf16.msra.mxu0 %v1018
          %1084 = vmatprep.subr.bf16.mxu0 %v1021
          %1085 = vmatpush1.bf16.msra.mxu0 %v1020
          %1086 = vmatprep.subr.bf16.mxu0 %v1023
          %1087 = vmatpush1.bf16.msra.mxu0 %v1022
          %1088 = vmatprep.subr.bf16.mxu0 %v1025
          %1089 = vmatpush1.bf16.msra.mxu0 %v1024
          %1090 = vmatprep.subr.bf16.mxu0 %v1027
          %1091 = vmatpush1.bf16.msra.mxu0 %v1026
          %1092 = vmatprep.subr.bf16.mxu0 %v1029
          %1093 = vmatpush1.bf16.msra.mxu0 %v1028
          %1094 = vmatprep.subr.bf16.mxu0 %v1031
          %1095 = vmatpush1.bf16.msra.mxu0 %v1030
          %1096 = vmatprep.subr.bf16.mxu0 %v1033
          %1097 = vmatpush1.bf16.msra.mxu0 %v1032
          %1098 = vmatprep.subr.bf16.mxu0 %v1035
          %1099 = vmatpush1.bf16.msra.mxu0 %v1034
          %1100 = vmatprep.mubr.bf16.mxu0 %v838
          %1101 = vmatmul.mubr.bf16.gmra.mrb[0].mxu0 %v837
          %v1102 = vpop.f32.mrb[0].mxu0
          %v1103 = vadd.f32 %v903, %v1102
          %v1104 = vpop.f32.mrb[0].mxu0
          %v1105 = vadd.f32 %v907, %v1104
          %v1106 = vpop.f32.mrb[0].mxu0
          %v1107 = vadd.f32 %v903, %v1106
          %v1108 = vpop.f32.mrb[0].mxu0
          %v1109 = vadd.f32 %v907, %v1108
          %1110 = vmatprep.mubr.bf16.mxu0 %v840
          %1111 = vmatmul.mubr.bf16.gmra.mrb[0].mxu0 %v839
          %v1112 = vpop.f32.mrb[0].mxu0
          %v1113 = vadd.f32 %v903, %v1112
          %v1114 = vpop.f32.mrb[0].mxu0
          %v1115 = vadd.f32 %v907, %v1114
          %v1116 = vpop.f32.mrb[0].mxu0
          %v1117 = vadd.f32 %v903, %v1116
          %v1118 = vpop.f32.mrb[0].mxu0
          %v1119 = vadd.f32 %v907, %v1118
          %1120 = vmatprep.mubr.bf16.mxu0 %v842
          %1121 = vmatmul.mubr.bf16.gmra.mrb[0].mxu0 %v841
          %v1122 = vpop.f32.mrb[0].mxu0
          %v1123 = vadd.f32 %v903, %v1122
          %v1124 = vpop.f32.mrb[0].mxu0
          %v1125 = vadd.f32 %v907, %v1124
          %v1126 = vpop.f32.mrb[0].mxu0
          %v1127 = vadd.f32 %v903, %v1126
          %v1128 = vpop.f32.mrb[0].mxu0
          %v1129 = vadd.f32 %v907, %v1128
          %1130 = vmatprep.mubr.bf16.mxu0 %v844
          %1131 = vmatmul.mubr.bf16.gmra.mrb[0].mxu0 %v843
          %v1132 = vpop.f32.mrb[0].mxu0
          %v1133 = vadd.f32 %v903, %v1132
          %v1134 = vpop.f32.mrb[0].mxu0
          %v1135 = vadd.f32 %v907, %v1134
          %v1136 = vpop.f32.mrb[0].mxu0
          %v1137 = vadd.f32 %v903, %v1136
          %v1138 = vpop.f32.mrb[0].mxu0
          %v1139 = vadd.f32 %v907, %v1138
          %1140 = vmatprep.mubr.bf16.mxu0 %v846
          %1141 = vmatmul.mubr.bf16.gmra.mrb[0].mxu0 %v845
          %v1142 = vpop.f32.mrb[0].mxu0
          %v1143 = vadd.f32 %v903, %v1142
          %v1144 = vpop.f32.mrb[0].mxu0
          %v1145 = vadd.f32 %v907, %v1144
          %v1146 = vpop.f32.mrb[0].mxu0
          %v1147 = vadd.f32 %v903, %v1146
          %v1148 = vpop.f32.mrb[0].mxu0
          %v1149 = vadd.f32 %v907, %v1148
          %1150 = vmatprep.mubr.bf16.mxu0 %v848
          %1151 = vmatmul.mubr.bf16.gmra.mrb[0].mxu0 %v847
          %v1152 = vpop.f32.mrb[0].mxu0
          %v1153 = vadd.f32 %v903, %v1152
          %v1154 = vpop.f32.mrb[0].mxu0
          %v1155 = vadd.f32 %v907, %v1154
          %v1156 = vpop.f32.mrb[0].mxu0
          %v1157 = vadd.f32 %v903, %v1156
          %v1158 = vpop.f32.mrb[0].mxu0
          %v1159 = vadd.f32 %v907, %v1158
          %1160 = vmatprep.mubr.bf16.mxu0 %v850
          %1161 = vmatmul.mubr.bf16.gmra.mrb[0].mxu0 %v849
          %v1162 = vpop.f32.mrb[0].mxu0
          %v1163 = vadd.f32 %v903, %v1162
          %v1164 = vpop.f32.mrb[0].mxu0
          %v1165 = vadd.f32 %v907, %v1164
          %v1166 = vpop.f32.mrb[0].mxu0
          %v1167 = vadd.f32 %v903, %v1166
          %v1168 = vpop.f32.mrb[0].mxu0
          %v1169 = vadd.f32 %v907, %v1168
          %1170 = vmatprep.mubr.bf16.mxu0 %v852
          %1171 = vmatmul.mubr.bf16.gmra.mrb[0].mxu0 %v851
          %v1172 = vpop.f32.mrb[0].mxu0
          %v1173 = vadd.f32 %v903, %v1172
          %v1174 = vpop.f32.mrb[0].mxu0
          %v1175 = vadd.f32 %v907, %v1174
          %v1176 = vpop.f32.mrb[0].mxu0
          %v1177 = vadd.f32 %v903, %v1176
          %v1178 = vpop.f32.mrb[0].mxu0
          %v1179 = vadd.f32 %v907, %v1178
          %1180 = vdwg.mxu0
          %v1181 = vpack.c.bf16 %v731, %v727
          %v1182 = vpack.c.bf16 %v733, %v729
          %v1183 = vpack.c.bf16 %v741, %v737
          %v1184 = vpack.c.bf16 %v743, %v739
          %v1185 = vpack.c.bf16 %v751, %v747
          %v1186 = vpack.c.bf16 %v753, %v749
          %v1187 = vpack.c.bf16 %v761, %v757
          %v1188 = vpack.c.bf16 %v763, %v759
          %v1189 = vpack.c.bf16 %v771, %v767
          %v1190 = vpack.c.bf16 %v773, %v769
          %v1191 = vpack.c.bf16 %v781, %v777
          %v1192 = vpack.c.bf16 %v783, %v779
          %v1193 = vpack.c.bf16 %v791, %v787
          %v1194 = vpack.c.bf16 %v793, %v789
          %v1195 = vpack.c.bf16 %v801, %v797
          %v1196 = vpack.c.bf16 %v803, %v799
          %1197 = vst [vmem:[#allocation2] sm:$0xff] %v1181
          %1198 = vst [vmem:[#allocation2 + $0x8] sm:$0xff] %v1182
          %1199 = vst [vmem:[#allocation2 + $0x10] sm:$0xff] %v1183
          %1200 = vst [vmem:[#allocation2 + $0x18] sm:$0xff] %v1184
          %1201 = vst [vmem:[#allocation2 + $0x20] sm:$0xff] %v1185
          %1202 = vst [vmem:[#allocation2 + $0x28] sm:$0xff] %v1186
          %1203 = vst [vmem:[#allocation2 + $0x30] sm:$0xff] %v1187
          %1204 = vst [vmem:[#allocation2 + $0x38] sm:$0xff] %v1188
          %1205 = vst [vmem:[#allocation2 + $0x40] sm:$0xff] %v1189
          %1206 = vst [vmem:[#allocation2 + $0x48] sm:$0xff] %v1190
          %1207 = vst [vmem:[#allocation2 + $0x50] sm:$0xff] %v1191
          %1208 = vst [vmem:[#allocation2 + $0x58] sm:$0xff] %v1192
          %1209 = vst [vmem:[#allocation2 + $0x60] sm:$0xff] %v1193
          %1210 = vst [vmem:[#allocation2 + $0x68] sm:$0xff] %v1194
          %1211 = vst [vmem:[#allocation2 + $0x70] sm:$0xff] %v1195
          %1212 = vst [vmem:[#allocation2 + $0x78] sm:$0xff] %v1196
          %v1213 = vpack.c.bf16 %v1107, %v1103
          %v1214 = vpack.c.bf16 %v1109, %v1105
          %v1215 = vpack.c.bf16 %v1117, %v1113
          %v1216 = vpack.c.bf16 %v1119, %v1115
          %v1217 = vpack.c.bf16 %v1127, %v1123
          %v1218 = vpack.c.bf16 %v1129, %v1125
          %v1219 = vpack.c.bf16 %v1137, %v1133
          %v1220 = vpack.c.bf16 %v1139, %v1135
          %v1221 = vpack.c.bf16 %v1147, %v1143
          %v1222 = vpack.c.bf16 %v1149, %v1145
          %v1223 = vpack.c.bf16 %v1157, %v1153
          %v1224 = vpack.c.bf16 %v1159, %v1155
          %v1225 = vpack.c.bf16 %v1167, %v1163
          %v1226 = vpack.c.bf16 %v1169, %v1165
          %v1227 = vpack.c.bf16 %v1177, %v1173
          %v1228 = vpack.c.bf16 %v1179, %v1175
          %s1229 = scalar_lea.vmem [#allocation2], 128
          %1230 = vst [vmem:[%s1229] sm:$0xff] %v1213
          %1231 = vst [vmem:[%s1229 + $0x8] sm:$0xff] %v1214
          %1232 = vst [vmem:[%s1229 + $0x10] sm:$0xff] %v1215
          %1233 = vst [vmem:[%s1229 + $0x18] sm:$0xff] %v1216
          %1234 = vst [vmem:[%s1229 + $0x20] sm:$0xff] %v1217
          %1235 = vst [vmem:[%s1229 + $0x28] sm:$0xff] %v1218
          %1236 = vst [vmem:[%s1229 + $0x30] sm:$0xff] %v1219
          %1237 = vst [vmem:[%s1229 + $0x38] sm:$0xff] %v1220
          %1238 = vst [vmem:[%s1229 + $0x40] sm:$0xff] %v1221
          %1239 = vst [vmem:[%s1229 + $0x48] sm:$0xff] %v1222
          %1240 = vst [vmem:[%s1229 + $0x50] sm:$0xff] %v1223
          %1241 = vst [vmem:[%s1229 + $0x58] sm:$0xff] %v1224
          %1242 = vst [vmem:[%s1229 + $0x60] sm:$0xff] %v1225
          %1243 = vst [vmem:[%s1229 + $0x68] sm:$0xff] %v1226
          %1244 = vst [vmem:[%s1229 + $0x70] sm:$0xff] %v1227
          %1245 = vst [vmem:[%s1229 + $0x78] sm:$0xff] %v1228
        $region72: #{tpu_custom_call.1} parent=47 // pred_fallthru
          _
        %v1246 = vld [vmem:[%s355] sm:$0xff]
        %v1247 = vld [vmem:[%s355 + $0x8] sm:$0xff]
        %v1248 = vld [vmem:[%s355 + $0x10] sm:$0xff]
        %v1249 = vld [vmem:[%s355 + $0x18] sm:$0xff]
        %v1250 = vld [vmem:[%s355 + $0x20] sm:$0xff]
        %v1251 = vld [vmem:[%s355 + $0x28] sm:$0xff]
        %v1252 = vld [vmem:[%s355 + $0x30] sm:$0xff]
        %v1253 = vld [vmem:[%s355 + $0x38] sm:$0xff]
        %v1254 = vld [vmem:[%s355 + $0x40] sm:$0xff]
        %v1255 = vld [vmem:[%s355 + $0x48] sm:$0xff]
        %v1256 = vld [vmem:[%s355 + $0x50] sm:$0xff]
        %v1257 = vld [vmem:[%s355 + $0x58] sm:$0xff]
        %v1258 = vld [vmem:[%s355 + $0x60] sm:$0xff]
        %v1259 = vld [vmem:[%s355 + $0x68] sm:$0xff]
        %v1260 = vld [vmem:[%s355 + $0x70] sm:$0xff]
        %v1261 = vld [vmem:[%s355 + $0x78] sm:$0xff]
        %v1262 = vld [vmem:[%s355 + $0x80] sm:$0xff]
        %v1263 = vld [vmem:[%s355 + $0x88] sm:$0xff]
        %v1264 = vld [vmem:[%s355 + $0x90] sm:$0xff]
        %v1265 = vld [vmem:[%s355 + $0x98] sm:$0xff]
        %v1266 = vld [vmem:[%s355 + $0xa0] sm:$0xff]
        %v1267 = vld [vmem:[%s355 + $0xa8] sm:$0xff]
        %v1268 = vld [vmem:[%s355 + $0xb0] sm:$0xff]
        %v1269 = vld [vmem:[%s355 + $0xb8] sm:$0xff]
        %v1270 = vld [vmem:[%s355 + $0xc0] sm:$0xff]
        %v1271 = vld [vmem:[%s355 + $0xc8] sm:$0xff]
        %v1272 = vld [vmem:[%s355 + $0xd0] sm:$0xff]
        %v1273 = vld [vmem:[%s355 + $0xd8] sm:$0xff]
        %v1274 = vld [vmem:[%s355 + $0xe0] sm:$0xff]
        %v1275 = vld [vmem:[%s355 + $0xe8] sm:$0xff]
        %v1276 = vld [vmem:[%s355 + $0xf0] sm:$0xff]
        %v1277 = vld [vmem:[%s355 + $0xf8] sm:$0xff]
        %v1278 = vpack.c.bf16 %v1248, %v1246
        %v1279 = vpack.c.bf16 %v1249, %v1247
        %v1280 = vpack.c.bf16 %v1252, %v1250
        %v1281 = vpack.c.bf16 %v1253, %v1251
        %v1282 = vpack.c.bf16 %v1256, %v1254
        %v1283 = vpack.c.bf16 %v1257, %v1255
        %v1284 = vpack.c.bf16 %v1260, %v1258
        %v1285 = vpack.c.bf16 %v1261, %v1259
        %v1286 = vpack.c.bf16 %v1264, %v1262
        %v1287 = vpack.c.bf16 %v1265, %v1263
        %v1288 = vpack.c.bf16 %v1268, %v1266
        %v1289 = vpack.c.bf16 %v1269, %v1267
        %v1290 = vpack.c.bf16 %v1272, %v1270
        %v1291 = vpack.c.bf16 %v1273, %v1271
        %v1292 = vpack.c.bf16 %v1276, %v1274
        %v1293 = vpack.c.bf16 %v1277, %v1275
        %v1294 = vld [vmem:[#allocation9] sm:$0xff]
        %v1295 = vld [vmem:[#allocation9 + $0x8] sm:$0xff]
        %v1296 = vld [vmem:[#allocation9 + $0x10] sm:$0xff]
        %v1297 = vld [vmem:[#allocation9 + $0x18] sm:$0xff]
        %v1298 = vld [vmem:[#allocation9 + $0x20] sm:$0xff]
        %v1299 = vld [vmem:[#allocation9 + $0x28] sm:$0xff]
        %v1300 = vld [vmem:[#allocation9 + $0x30] sm:$0xff]
        %v1301 = vld [vmem:[#allocation9 + $0x38] sm:$0xff]
        %v1302 = vld [vmem:[#allocation9 + $0x40] sm:$0xff]
        %v1303 = vld [vmem:[#allocation9 + $0x48] sm:$0xff]
        %v1304 = vld [vmem:[#allocation9 + $0x50] sm:$0xff]
        %v1305 = vld [vmem:[#allocation9 + $0x58] sm:$0xff]
        %v1306 = vld [vmem:[#allocation9 + $0x60] sm:$0xff]
        %v1307 = vld [vmem:[#allocation9 + $0x68] sm:$0xff]
        %v1308 = vld [vmem:[#allocation9 + $0x70] sm:$0xff]
        %v1309 = vld [vmem:[#allocation9 + $0x78] sm:$0xff]
        %v1310 = vld [vmem:[#allocation9 + $0x80] sm:$0xff]
        %v1311 = vld [vmem:[#allocation9 + $0x88] sm:$0xff]
        %v1312 = vld [vmem:[#allocation9 + $0x90] sm:$0xff]
        %v1313 = vld [vmem:[#allocation9 + $0x98] sm:$0xff]
        %v1314 = vld [vmem:[#allocation9 + $0xa0] sm:$0xff]
        %v1315 = vld [vmem:[#allocation9 + $0xa8] sm:$0xff]
        %v1316 = vld [vmem:[#allocation9 + $0xb0] sm:$0xff]
        %v1317 = vld [vmem:[#allocation9 + $0xb8] sm:$0xff]
        %v1318 = vld [vmem:[#allocation9 + $0xc0] sm:$0xff]
        %v1319 = vld [vmem:[#allocation9 + $0xc8] sm:$0xff]
        %v1320 = vld [vmem:[#allocation9 + $0xd0] sm:$0xff]
        %v1321 = vld [vmem:[#allocation9 + $0xd8] sm:$0xff]
        %v1322 = vld [vmem:[#allocation9 + $0xe0] sm:$0xff]
        %v1323 = vld [vmem:[#allocation9 + $0xe8] sm:$0xff]
        %v1324 = vld [vmem:[#allocation9 + $0xf0] sm:$0xff]
        %v1325 = vld [vmem:[#allocation9 + $0xf8] sm:$0xff]
        %v1326 = vld [vmem:[%s4] sm:$0x3]
        %v1327 = vunpack.c.l.bf16 %v1326
        %v1329 = vlaneseq
        %v1330 = vshrl.u32 %v1329, 7
        %v1331 = vsub.s32 0, %v1330
        %v1332 = vrot.slane %v1327, %v1331
        %v1333 = vlaneseq
        %v1334 = vshrl.u32 %v1333, 7
        %v1335 = vsub.s32 2, %v1334
        %v1336 = vrot.slane %v1327, %v1335
        %v1339 = vlaneseq
        %v1340 = vshrl.u32 %v1339, 7
        %v1341 = vsub.s32 0, %v1340
        %v1342 = vrot.slane %v1332, %v1341
        %v1343 = vlaneseq
        %v1344 = vshrl.u32 %v1343, 7
        %v1345 = vsub.s32 0, %v1344
        %v1346 = vrot.slane %v1336, %v1345
        %v1379 = vunpack.c.l.b16 %v1294
        %v1380 = vunpack.c.h.b16 %v1294
        %v1381 = vunpack.c.l.b16 %v1295
        %v1382 = vunpack.c.h.b16 %v1295
        %v1383 = vunpack.c.l.b16 %v1296
        %v1384 = vunpack.c.h.b16 %v1296
        %v1385 = vunpack.c.l.b16 %v1297
        %v1386 = vunpack.c.h.b16 %v1297
        %v1387 = vunpack.c.l.b16 %v1298
        %v1388 = vunpack.c.h.b16 %v1298
        %v1389 = vunpack.c.l.b16 %v1299
        %v1390 = vunpack.c.h.b16 %v1299
        %v1391 = vunpack.c.l.b16 %v1300
        %v1392 = vunpack.c.h.b16 %v1300
        %v1393 = vunpack.c.l.b16 %v1301
        %v1394 = vunpack.c.h.b16 %v1301
        %v1395 = vunpack.c.l.b16 %v1302
        %v1396 = vunpack.c.h.b16 %v1302
        %v1397 = vunpack.c.l.b16 %v1303
        %v1398 = vunpack.c.h.b16 %v1303
        %v1399 = vunpack.c.l.b16 %v1304
        %v1400 = vunpack.c.h.b16 %v1304
        %v1401 = vunpack.c.l.b16 %v1305
        %v1402 = vunpack.c.h.b16 %v1305
        %v1403 = vunpack.c.l.b16 %v1306
        %v1404 = vunpack.c.h.b16 %v1306
        %v1405 = vunpack.c.l.b16 %v1307
        %v1406 = vunpack.c.h.b16 %v1307
        %v1407 = vunpack.c.l.b16 %v1308
        %v1408 = vunpack.c.h.b16 %v1308
        %v1409 = vunpack.c.l.b16 %v1309
        %v1410 = vunpack.c.h.b16 %v1309
        %v1411 = vunpack.c.l.b16 %v1310
        %v1412 = vunpack.c.h.b16 %v1310
        %v1413 = vunpack.c.l.b16 %v1311
        %v1414 = vunpack.c.h.b16 %v1311
        %v1415 = vunpack.c.l.b16 %v1312
        %v1416 = vunpack.c.h.b16 %v1312
        %v1417 = vunpack.c.l.b16 %v1313
        %v1418 = vunpack.c.h.b16 %v1313
        %v1419 = vunpack.c.l.b16 %v1314
        %v1420 = vunpack.c.h.b16 %v1314
        %v1421 = vunpack.c.l.b16 %v1315
        %v1422 = vunpack.c.h.b16 %v1315
        %v1423 = vunpack.c.l.b16 %v1316
        %v1424 = vunpack.c.h.b16 %v1316
        %v1425 = vunpack.c.l.b16 %v1317
        %v1426 = vunpack.c.h.b16 %v1317
        %v1427 = vunpack.c.l.b16 %v1318
        %v1428 = vunpack.c.h.b16 %v1318
        %v1429 = vunpack.c.l.b16 %v1319
        %v1430 = vunpack.c.h.b16 %v1319
        %v1431 = vunpack.c.l.b16 %v1320
        %v1432 = vunpack.c.h.b16 %v1320
        %v1433 = vunpack.c.l.b16 %v1321
        %v1434 = vunpack.c.h.b16 %v1321
        %v1435 = vunpack.c.l.b16 %v1322
        %v1436 = vunpack.c.h.b16 %v1322
        %v1437 = vunpack.c.l.b16 %v1323
        %v1438 = vunpack.c.h.b16 %v1323
        %v1439 = vunpack.c.l.b16 %v1324
        %v1440 = vunpack.c.h.b16 %v1324
        %v1441 = vunpack.c.l.b16 %v1325
        %v1442 = vunpack.c.h.b16 %v1325
        %v1443 = vpack.c.b16 %v1381, %v1379
        %v1444 = vpack.c.b16 %v1382, %v1380
        %v1445 = vpack.c.b16 %v1385, %v1383
        %v1446 = vpack.c.b16 %v1386, %v1384
        %v1447 = vpack.c.b16 %v1389, %v1387
        %v1448 = vpack.c.b16 %v1390, %v1388
        %v1449 = vpack.c.b16 %v1393, %v1391
        %v1450 = vpack.c.b16 %v1394, %v1392
        %v1451 = vpack.c.b16 %v1397, %v1395
        %v1452 = vpack.c.b16 %v1398, %v1396
        %v1453 = vpack.c.b16 %v1401, %v1399
        %v1454 = vpack.c.b16 %v1402, %v1400
        %v1455 = vpack.c.b16 %v1405, %v1403
        %v1456 = vpack.c.b16 %v1406, %v1404
        %v1457 = vpack.c.b16 %v1409, %v1407
        %v1458 = vpack.c.b16 %v1410, %v1408
        %v1459 = vpack.c.b16 %v1413, %v1411
        %v1460 = vpack.c.b16 %v1414, %v1412
        %v1461 = vpack.c.b16 %v1417, %v1415
        %v1462 = vpack.c.b16 %v1418, %v1416
        %v1463 = vpack.c.b16 %v1421, %v1419
        %v1464 = vpack.c.b16 %v1422, %v1420
        %v1465 = vpack.c.b16 %v1425, %v1423
        %v1466 = vpack.c.b16 %v1426, %v1424
        %v1467 = vpack.c.b16 %v1429, %v1427
        %v1468 = vpack.c.b16 %v1430, %v1428
        %v1469 = vpack.c.b16 %v1433, %v1431
        %v1470 = vpack.c.b16 %v1434, %v1432
        %v1471 = vpack.c.b16 %v1437, %v1435
        %v1472 = vpack.c.b16 %v1438, %v1436
        %v1473 = vpack.c.b16 %v1441, %v1439
        %v1474 = vpack.c.b16 %v1442, %v1440
        %1507 = vmatprep.subr.bf16.mxu0 %v1444
        %1508 = vmatpush1.bf16.msra.mxu0 %v1443
        %1509 = vmatprep.subr.bf16.mxu0 %v1446
        %1510 = vmatpush1.bf16.msra.mxu0 %v1445
        %1511 = vmatprep.subr.bf16.mxu0 %v1448
        %1512 = vmatpush1.bf16.msra.mxu0 %v1447
        %1513 = vmatprep.subr.bf16.mxu0 %v1450
        %1514 = vmatpush1.bf16.msra.mxu0 %v1449
        %1515 = vmatprep.subr.bf16.mxu0 %v1452
        %1516 = vmatpush1.bf16.msra.mxu0 %v1451
        %1517 = vmatprep.subr.bf16.mxu0 %v1454
        %1518 = vmatpush1.bf16.msra.mxu0 %v1453
        %1519 = vmatprep.subr.bf16.mxu0 %v1456
        %1520 = vmatpush1.bf16.msra.mxu0 %v1455
        %1521 = vmatprep.subr.bf16.mxu0 %v1458
        %1522 = vmatpush1.bf16.msra.mxu0 %v1457
        %1523 = vmatprep.subr.bf16.mxu0 %v1460
        %1524 = vmatpush1.bf16.msra.mxu0 %v1459
        %1525 = vmatprep.subr.bf16.mxu0 %v1462
        %1526 = vmatpush1.bf16.msra.mxu0 %v1461
        %1527 = vmatprep.subr.bf16.mxu0 %v1464
        %1528 = vmatpush1.bf16.msra.mxu0 %v1463
        %1529 = vmatprep.subr.bf16.mxu0 %v1466
        %1530 = vmatpush1.bf16.msra.mxu0 %v1465
        %1531 = vmatprep.subr.bf16.mxu0 %v1468
        %1532 = vmatpush1.bf16.msra.mxu0 %v1467
        %1533 = vmatprep.subr.bf16.mxu0 %v1470
        %1534 = vmatpush1.bf16.msra.mxu0 %v1469
        %1535 = vmatprep.subr.bf16.mxu0 %v1472
        %1536 = vmatpush1.bf16.msra.mxu0 %v1471
        %1537 = vmatprep.subr.bf16.mxu0 %v1474
        %1538 = vmatpush1.bf16.msra.mxu0 %v1473
        %1539 = vmatprep.mubr.bf16.mxu0 %v1279
        %1540 = vmatmul.mubr.bf16.gmra.mrb[0].mxu0 %v1278
        %v1541 = vpop.f32.mrb[0].mxu0
        %v1542 = vadd.f32 %v1342, %v1541
        %v1543 = vpop.f32.mrb[0].mxu0
        %v1544 = vadd.f32 %v1346, %v1543
        %v1545 = vpop.f32.mrb[0].mxu0
        %v1546 = vadd.f32 %v1342, %v1545
        %v1547 = vpop.f32.mrb[0].mxu0
        %v1548 = vadd.f32 %v1346, %v1547
        %1549 = vmatprep.mubr.bf16.mxu0 %v1281
        %1550 = vmatmul.mubr.bf16.gmra.mrb[0].mxu0 %v1280
        %v1551 = vpop.f32.mrb[0].mxu0
        %v1552 = vadd.f32 %v1342, %v1551
        %v1553 = vpop.f32.mrb[0].mxu0
        %v1554 = vadd.f32 %v1346, %v1553
        %v1555 = vpop.f32.mrb[0].mxu0
        %v1556 = vadd.f32 %v1342, %v1555
        %v1557 = vpop.f32.mrb[0].mxu0
        %v1558 = vadd.f32 %v1346, %v1557
        %1559 = vmatprep.mubr.bf16.mxu0 %v1283
        %1560 = vmatmul.mubr.bf16.gmra.mrb[0].mxu0 %v1282
        %v1561 = vpop.f32.mrb[0].mxu0
        %v1562 = vadd.f32 %v1342, %v1561
        %v1563 = vpop.f32.mrb[0].mxu0
        %v1564 = vadd.f32 %v1346, %v1563
        %v1565 = vpop.f32.mrb[0].mxu0
        %v1566 = vadd.f32 %v1342, %v1565
        %v1567 = vpop.f32.mrb[0].mxu0
        %v1568 = vadd.f32 %v1346, %v1567
        %1569 = vmatprep.mubr.bf16.mxu0 %v1285
        %1570 = vmatmul.mubr.bf16.gmra.mrb[0].mxu0 %v1284
        %v1571 = vpop.f32.mrb[0].mxu0
        %v1572 = vadd.f32 %v1342, %v1571
        %v1573 = vpop.f32.mrb[0].mxu0
        %v1574 = vadd.f32 %v1346, %v1573
        %v1575 = vpop.f32.mrb[0].mxu0
        %v1576 = vadd.f32 %v1342, %v1575
        %v1577 = vpop.f32.mrb[0].mxu0
        %v1578 = vadd.f32 %v1346, %v1577
        %1579 = vmatprep.mubr.bf16.mxu0 %v1287
        %1580 = vmatmul.mubr.bf16.gmra.mrb[0].mxu0 %v1286
        %v1581 = vpop.f32.mrb[0].mxu0
        %v1582 = vadd.f32 %v1342, %v1581
        %v1583 = vpop.f32.mrb[0].mxu0
        %v1584 = vadd.f32 %v1346, %v1583
        %v1585 = vpop.f32.mrb[0].mxu0
        %v1586 = vadd.f32 %v1342, %v1585
        %v1587 = vpop.f32.mrb[0].mxu0
        %v1588 = vadd.f32 %v1346, %v1587
        %1589 = vmatprep.mubr.bf16.mxu0 %v1289
        %1590 = vmatmul.mubr.bf16.gmra.mrb[0].mxu0 %v1288
        %v1591 = vpop.f32.mrb[0].mxu0
        %v1592 = vadd.f32 %v1342, %v1591
        %v1593 = vpop.f32.mrb[0].mxu0
        %v1594 = vadd.f32 %v1346, %v1593
        %v1595 = vpop.f32.mrb[0].mxu0
        %v1596 = vadd.f32 %v1342, %v1595
        %v1597 = vpop.f32.mrb[0].mxu0
        %v1598 = vadd.f32 %v1346, %v1597
        %1599 = vmatprep.mubr.bf16.mxu0 %v1291
        %1600 = vmatmul.mubr.bf16.gmra.mrb[0].mxu0 %v1290
        %v1601 = vpop.f32.mrb[0].mxu0
        %v1602 = vadd.f32 %v1342, %v1601
        %v1603 = vpop.f32.mrb[0].mxu0
        %v1604 = vadd.f32 %v1346, %v1603
        %v1605 = vpop.f32.mrb[0].mxu0
        %v1606 = vadd.f32 %v1342, %v1605
        %v1607 = vpop.f32.mrb[0].mxu0
        %v1608 = vadd.f32 %v1346, %v1607
        %1609 = vmatprep.mubr.bf16.mxu0 %v1293
        %1610 = vmatmul.mubr.bf16.gmra.mrb[0].mxu0 %v1292
        %v1611 = vpop.f32.mrb[0].mxu0
        %v1612 = vadd.f32 %v1342, %v1611
        %v1613 = vpop.f32.mrb[0].mxu0
        %v1614 = vadd.f32 %v1346, %v1613
        %v1615 = vpop.f32.mrb[0].mxu0
        %v1616 = vadd.f32 %v1342, %v1615
        %v1617 = vpop.f32.mrb[0].mxu0
        %v1618 = vadd.f32 %v1346, %v1617
        %1619 = vdwg.mxu0
        %v1620 = vmul.f32 %v1542, 0.125
        %v1621 = vmul.f32 %v1544, 0.125
        %v1622 = vmul.f32 %v1546, 0.125
        %v1623 = vmul.f32 %v1548, 0.125
        %v1624 = vmul.f32 %v1552, 0.125
        %v1625 = vmul.f32 %v1554, 0.125
        %v1626 = vmul.f32 %v1556, 0.125
        %v1627 = vmul.f32 %v1558, 0.125
        %v1628 = vmul.f32 %v1562, 0.125
        %v1629 = vmul.f32 %v1564, 0.125
        %v1630 = vmul.f32 %v1566, 0.125
        %v1631 = vmul.f32 %v1568, 0.125
        %v1632 = vmul.f32 %v1572, 0.125
        %v1633 = vmul.f32 %v1574, 0.125
        %v1634 = vmul.f32 %v1576, 0.125
        %v1635 = vmul.f32 %v1578, 0.125
        %v1636 = vmul.f32 %v1582, 0.125
        %v1637 = vmul.f32 %v1584, 0.125
        %v1638 = vmul.f32 %v1586, 0.125
        %v1639 = vmul.f32 %v1588, 0.125
        %v1640 = vmul.f32 %v1592, 0.125
        %v1641 = vmul.f32 %v1594, 0.125
        %v1642 = vmul.f32 %v1596, 0.125
        %v1643 = vmul.f32 %v1598, 0.125
        %v1644 = vmul.f32 %v1602, 0.125
        %v1645 = vmul.f32 %v1604, 0.125
        %v1646 = vmul.f32 %v1606, 0.125
        %v1647 = vmul.f32 %v1608, 0.125
        %v1648 = vmul.f32 %v1612, 0.125
        %v1649 = vmul.f32 %v1614, 0.125
        %v1650 = vmul.f32 %v1616, 0.125
        %v1651 = vmul.f32 %v1618, 0.125
        %v1652 = vpack.c.bf16 %v1622, %v1620
        %v1653 = vpack.c.bf16 %v1623, %v1621
        %v1654 = vpack.c.bf16 %v1626, %v1624
        %v1655 = vpack.c.bf16 %v1627, %v1625
        %v1656 = vpack.c.bf16 %v1630, %v1628
        %v1657 = vpack.c.bf16 %v1631, %v1629
        %v1658 = vpack.c.bf16 %v1634, %v1632
        %v1659 = vpack.c.bf16 %v1635, %v1633
        %v1660 = vpack.c.bf16 %v1638, %v1636
        %v1661 = vpack.c.bf16 %v1639, %v1637
        %v1662 = vpack.c.bf16 %v1642, %v1640
        %v1663 = vpack.c.bf16 %v1643, %v1641
        %v1664 = vpack.c.bf16 %v1646, %v1644
        %v1665 = vpack.c.bf16 %v1647, %v1645
        %v1666 = vpack.c.bf16 %v1650, %v1648
        %v1667 = vpack.c.bf16 %v1651, %v1649
        %v1668 = vld [vmem:[#allocation2] sm:$0xff]
        %v1669 = vld [vmem:[#allocation2 + $0x8] sm:$0xff]
        %v1670 = vld [vmem:[#allocation2 + $0x10] sm:$0xff]
        %v1671 = vld [vmem:[#allocation2 + $0x18] sm:$0xff]
        %v1672 = vld [vmem:[#allocation2 + $0x20] sm:$0xff]
        %v1673 = vld [vmem:[#allocation2 + $0x28] sm:$0xff]
        %v1674 = vld [vmem:[#allocation2 + $0x30] sm:$0xff]
        %v1675 = vld [vmem:[#allocation2 + $0x38] sm:$0xff]
        %v1676 = vld [vmem:[#allocation2 + $0x40] sm:$0xff]
        %v1677 = vld [vmem:[#allocation2 + $0x48] sm:$0xff]
        %v1678 = vld [vmem:[#allocation2 + $0x50] sm:$0xff]
        %v1679 = vld [vmem:[#allocation2 + $0x58] sm:$0xff]
        %v1680 = vld [vmem:[#allocation2 + $0x60] sm:$0xff]
        %v1681 = vld [vmem:[#allocation2 + $0x68] sm:$0xff]
        %v1682 = vld [vmem:[#allocation2 + $0x70] sm:$0xff]
        %v1683 = vld [vmem:[#allocation2 + $0x78] sm:$0xff]
        %s1684 = scalar_lea.vmem [#allocation2], 128
        %v1685 = vld [vmem:[%s1684] sm:$0xff]
        %v1686 = vld [vmem:[%s1684 + $0x8] sm:$0xff]
        %v1687 = vld [vmem:[%s1684 + $0x10] sm:$0xff]
        %v1688 = vld [vmem:[%s1684 + $0x18] sm:$0xff]
        %v1689 = vld [vmem:[%s1684 + $0x20] sm:$0xff]
        %v1690 = vld [vmem:[%s1684 + $0x28] sm:$0xff]
        %v1691 = vld [vmem:[%s1684 + $0x30] sm:$0xff]
        %v1692 = vld [vmem:[%s1684 + $0x38] sm:$0xff]
        %v1693 = vld [vmem:[%s1684 + $0x40] sm:$0xff]
        %v1694 = vld [vmem:[%s1684 + $0x48] sm:$0xff]
        %v1695 = vld [vmem:[%s1684 + $0x50] sm:$0xff]
        %v1696 = vld [vmem:[%s1684 + $0x58] sm:$0xff]
        %v1697 = vld [vmem:[%s1684 + $0x60] sm:$0xff]
        %v1698 = vld [vmem:[%s1684 + $0x68] sm:$0xff]
        %v1699 = vld [vmem:[%s1684 + $0x70] sm:$0xff]
        %v1700 = vld [vmem:[%s1684 + $0x78] sm:$0xff]
        %v1701 = vld [vmem:[#allocation11] sm:$0xff]
        %v1702 = vld [vmem:[#allocation11 + $0x8] sm:$0xff]
        %v1703 = vld [vmem:[#allocation11 + $0x10] sm:$0xff]
        %v1704 = vld [vmem:[#allocation11 + $0x18] sm:$0xff]
        %v1705 = vld [vmem:[#allocation11 + $0x20] sm:$0xff]
        %v1706 = vld [vmem:[#allocation11 + $0x28] sm:$0xff]
        %v1707 = vld [vmem:[#allocation11 + $0x30] sm:$0xff]
        %v1708 = vld [vmem:[#allocation11 + $0x38] sm:$0xff]
        %v1709 = vld [vmem:[#allocation11 + $0x40] sm:$0xff]
        %v1710 = vld [vmem:[#allocation11 + $0x48] sm:$0xff]
        %v1711 = vld [vmem:[#allocation11 + $0x50] sm:$0xff]
        %v1712 = vld [vmem:[#allocation11 + $0x58] sm:$0xff]
        %v1713 = vld [vmem:[#allocation11 + $0x60] sm:$0xff]
        %v1714 = vld [vmem:[#allocation11 + $0x68] sm:$0xff]
        %v1715 = vld [vmem:[#allocation11 + $0x70] sm:$0xff]
        %v1716 = vld [vmem:[#allocation11 + $0x78] sm:$0xff]
        %v1717 = vld [vmem:[#allocation11 + $0x80] sm:$0xff]
        %v1718 = vld [vmem:[#allocation11 + $0x88] sm:$0xff]
        %v1719 = vld [vmem:[#allocation11 + $0x90] sm:$0xff]
        %v1720 = vld [vmem:[#allocation11 + $0x98] sm:$0xff]
        %v1721 = vld [vmem:[#allocation11 + $0xa0] sm:$0xff]
        %v1722 = vld [vmem:[#allocation11 + $0xa8] sm:$0xff]
        %v1723 = vld [vmem:[#allocation11 + $0xb0] sm:$0xff]
        %v1724 = vld [vmem:[#allocation11 + $0xb8] sm:$0xff]
        %v1725 = vld [vmem:[#allocation11 + $0xc0] sm:$0xff]
        %v1726 = vld [vmem:[#allocation11 + $0xc8] sm:$0xff]
        %v1727 = vld [vmem:[#allocation11 + $0xd0] sm:$0xff]
        %v1728 = vld [vmem:[#allocation11 + $0xd8] sm:$0xff]
        %v1729 = vld [vmem:[#allocation11 + $0xe0] sm:$0xff]
        %v1730 = vld [vmem:[#allocation11 + $0xe8] sm:$0xff]
        %v1731 = vld [vmem:[#allocation11 + $0xf0] sm:$0xff]
        %v1732 = vld [vmem:[#allocation11 + $0xf8] sm:$0xff]
        %vm1733 = vcmask 523264
        %v1735 = vsel %vm1733, %v1652, 0
        %v1738 = vsel %vm1733, %v1654, 0
        %v1741 = vsel %vm1733, %v1656, 0
        %v1744 = vsel %vm1733, %v1658, 0
        %v1747 = vsel %vm1733, %v1660, 0
        %v1750 = vsel %vm1733, %v1662, 0
        %v1753 = vsel %vm1733, %v1664, 0
        %v1756 = vsel %vm1733, %v1666, 0
        %v1759 = vsel %vm1733, %v1668, 0
        %v1762 = vsel %vm1733, %v1670, 0
        %v1765 = vsel %vm1733, %v1672, 0
        %v1768 = vsel %vm1733, %v1674, 0
        %v1771 = vsel %vm1733, %v1676, 0
        %v1774 = vsel %vm1733, %v1678, 0
        %v1777 = vsel %vm1733, %v1680, 0
        %v1780 = vsel %vm1733, %v1682, 0
        %1782 = vmatprep.subr.bf16.mxu0 0
        %1783 = vmatpush1.bf16.xpose.msra.mxu0 %v1759
        %1784 = vmatprep.subr.bf16.mxu0 0
        %1785 = vmatpush1.bf16.xpose.msra.mxu0 %v1762
        %1786 = vmatprep.subr.bf16.mxu0 0
        %1787 = vmatpush1.bf16.xpose.msra.mxu0 %v1765
        %1788 = vmatprep.subr.bf16.mxu0 0
        %1789 = vmatpush1.bf16.xpose.msra.mxu0 %v1768
        %1790 = vmatprep.subr.bf16.mxu0 0
        %1791 = vmatpush1.bf16.xpose.msra.mxu0 %v1771
        %1792 = vmatprep.subr.bf16.mxu0 0
        %1793 = vmatpush1.bf16.xpose.msra.mxu0 %v1774
        %1794 = vmatprep.subr.bf16.mxu0 0
        %1795 = vmatpush1.bf16.xpose.msra.mxu0 %v1777
        %1796 = vmatprep.subr.bf16.mxu0 0
        %1797 = vmatpush1.bf16.xpose.msra.mxu0 %v1780
        %1798 = vmatprep.subr.bf16.mxu0 0
        %1799 = vmatpush1.bf16.xpose.msra.mxu0 0
        %1800 = vmatprep.subr.bf16.mxu0 0
        %1801 = vmatpush1.bf16.xpose.msra.mxu0 0
        %1802 = vmatprep.subr.bf16.mxu0 0
        %1803 = vmatpush1.bf16.xpose.msra.mxu0 0
        %1804 = vmatprep.subr.bf16.mxu0 0
        %1805 = vmatpush1.bf16.xpose.msra.mxu0 0
        %1806 = vmatprep.subr.bf16.mxu0 0
        %1807 = vmatpush1.bf16.xpose.msra.mxu0 0
        %1808 = vmatprep.subr.bf16.mxu0 0
        %1809 = vmatpush1.bf16.xpose.msra.mxu0 0
        %1810 = vmatprep.subr.bf16.mxu0 0
        %1811 = vmatpush1.bf16.xpose.msra.mxu0 0
        %1812 = vmatprep.subr.bf16.mxu0 0
        %1813 = vmatpush1.bf16.xpose.msra.mxu0 0
        %1814 = vmatprep.mubr.bf16.mxu0 0
        %1815 = vmatmul.mubr.bf16.gmra.mrb[0].mxu0 %v1735
        %v1816 = vpop.f32.mrb[0].mxu0
        %v1817 = vadd.f32 0.0, %v1816
        %v1818 = vpop.f32.mrb[0].mxu0
        %v1819 = vpop.f32.mrb[0].mxu0
        %v1820 = vadd.f32 0.0, %v1819
        %v1821 = vpop.f32.mrb[0].mxu0
        %1822 = vmatprep.mubr.bf16.mxu0 0
        %1823 = vmatmul.mubr.bf16.gmra.mrb[0].mxu0 %v1738
        %v1824 = vpop.f32.mrb[0].mxu0
        %v1825 = vadd.f32 0.0, %v1824
        %v1826 = vpop.f32.mrb[0].mxu0
        %v1827 = vpop.f32.mrb[0].mxu0
        %v1828 = vadd.f32 0.0, %v1827
        %v1829 = vpop.f32.mrb[0].mxu0
        %1830 = vmatprep.mubr.bf16.mxu0 0
        %1831 = vmatmul.mubr.bf16.gmra.mrb[0].mxu0 %v1741
        %v1832 = vpop.f32.mrb[0].mxu0
        %v1833 = vadd.f32 0.0, %v1832
        %v1834 = vpop.f32.mrb[0].mxu0
        %v1835 = vpop.f32.mrb[0].mxu0
        %v1836 = vadd.f32 0.0, %v1835
        %v1837 = vpop.f32.mrb[0].mxu0
        %1838 = vmatprep.mubr.bf16.mxu0 0
        %1839 = vmatmul.mubr.bf16.gmra.mrb[0].mxu0 %v1744
        %v1840 = vpop.f32.mrb[0].mxu0
        %v1841 = vadd.f32 0.0, %v1840
        %v1842 = vpop.f32.mrb[0].mxu0
        %v1843 = vpop.f32.mrb[0].mxu0
        %v1844 = vadd.f32 0.0, %v1843
        %v1845 = vpop.f32.mrb[0].mxu0
        %1846 = vmatprep.mubr.bf16.mxu0 0
        %1847 = vmatmul.mubr.bf16.gmra.mrb[0].mxu0 %v1747
        %v1848 = vpop.f32.mrb[0].mxu0
        %v1849 = vadd.f32 0.0, %v1848
        %v1850 = vpop.f32.mrb[0].mxu0
        %v1851 = vpop.f32.mrb[0].mxu0
        %v1852 = vadd.f32 0.0, %v1851
        %v1853 = vpop.f32.mrb[0].mxu0
        %1854 = vmatprep.mubr.bf16.mxu0 0
        %1855 = vmatmul.mubr.bf16.gmra.mrb[0].mxu0 %v1750
        %v1856 = vpop.f32.mrb[0].mxu0
        %v1857 = vadd.f32 0.0, %v1856
        %v1858 = vpop.f32.mrb[0].mxu0
        %v1859 = vpop.f32.mrb[0].mxu0
        %v1860 = vadd.f32 0.0, %v1859
        %v1861 = vpop.f32.mrb[0].mxu0
        %1862 = vmatprep.mubr.bf16.mxu0 0
        %1863 = vmatmul.mubr.bf16.gmra.mrb[0].mxu0 %v1753
        %v1864 = vpop.f32.mrb[0].mxu0
        %v1865 = vadd.f32 0.0, %v1864
        %v1866 = vpop.f32.mrb[0].mxu0
        %v1867 = vpop.f32.mrb[0].mxu0
        %v1868 = vadd.f32 0.0, %v1867
        %v1869 = vpop.f32.mrb[0].mxu0
        %1870 = vmatprep.mubr.bf16.mxu0 0
        %1871 = vmatmul.mubr.bf16.gmra.mrb[0].mxu0 %v1756
        %v1872 = vpop.f32.mrb[0].mxu0
        %v1873 = vadd.f32 0.0, %v1872
        %v1874 = vpop.f32.mrb[0].mxu0
        %v1875 = vpop.f32.mrb[0].mxu0
        %v1876 = vadd.f32 0.0, %v1875
        %v1877 = vpop.f32.mrb[0].mxu0
        %1878 = vdwg.mxu0
        %1879 = vmax.xlane.f32.xlu0 %v1817
        %v1880 = vpop.xlane.xlu0 %1879
        %1881 = vmax.xlane.f32.xlu0 %v1820
        %v1882 = vpop.xlane.xlu0 %1881
        %1883 = vmax.xlane.f32.xlu0 %v1825
        %v1884 = vpop.xlane.xlu0 %1883
        %1885 = vmax.xlane.f32.xlu0 %v1828
        %v1886 = vpop.xlane.xlu0 %1885
        %1887 = vmax.xlane.f32.xlu0 %v1833
        %v1888 = vpop.xlane.xlu0 %1887
        %1889 = vmax.xlane.f32.xlu0 %v1836
        %v1890 = vpop.xlane.xlu0 %1889
        %1891 = vmax.xlane.f32.xlu0 %v1841
        %v1892 = vpop.xlane.xlu0 %1891
        %1893 = vmax.xlane.f32.xlu0 %v1844
        %v1894 = vpop.xlane.xlu0 %1893
        %1895 = vmax.xlane.f32.xlu0 %v1849
        %v1896 = vpop.xlane.xlu0 %1895
        %1897 = vmax.xlane.f32.xlu0 %v1852
        %v1898 = vpop.xlane.xlu0 %1897
        %1899 = vmax.xlane.f32.xlu0 %v1857
        %v1900 = vpop.xlane.xlu0 %1899
        %1901 = vmax.xlane.f32.xlu0 %v1860
        %v1902 = vpop.xlane.xlu0 %1901
        %1903 = vmax.xlane.f32.xlu0 %v1865
        %v1904 = vpop.xlane.xlu0 %1903
        %1905 = vmax.xlane.f32.xlu0 %v1868
        %v1906 = vpop.xlane.xlu0 %1905
        %1907 = vmax.xlane.f32.xlu0 %v1873
        %v1908 = vpop.xlane.xlu0 %1907
        %1909 = vmax.xlane.f32.xlu0 %v1876
        %v1910 = vpop.xlane.xlu0 %1909
        %v1911 = vsub.f32 %v1817, %v1880
        %v1912 = vsub.f32 %v1820, %v1882
        %v1913 = vsub.f32 %v1825, %v1884
        %v1914 = vsub.f32 %v1828, %v1886
        %v1915 = vsub.f32 %v1833, %v1888
        %v1916 = vsub.f32 %v1836, %v1890
        %v1917 = vsub.f32 %v1841, %v1892
        %v1918 = vsub.f32 %v1844, %v1894
        %v1919 = vsub.f32 %v1849, %v1896
        %v1920 = vsub.f32 %v1852, %v1898
        %v1921 = vsub.f32 %v1857, %v1900
        %v1922 = vsub.f32 %v1860, %v1902
        %v1923 = vsub.f32 %v1865, %v1904
        %v1924 = vsub.f32 %v1868, %v1906
        %v1925 = vsub.f32 %v1873, %v1908
        %v1926 = vsub.f32 %v1876, %v1910
        %v1927 = vmul.f32 %v1911, 1.442695
        %v1928 = vpow.pop %v1927
        %v1929 = vmul.f32 %v1912, 1.442695
        %v1930 = vpow.pop %v1929
        %v1931 = vmul.f32 %v1913, 1.442695
        %v1932 = vpow.pop %v1931
        %v1933 = vmul.f32 %v1914, 1.442695
        %v1934 = vpow.pop %v1933
        %v1935 = vmul.f32 %v1915, 1.442695
        %v1936 = vpow.pop %v1935
        %v1937 = vmul.f32 %v1916, 1.442695
        %v1938 = vpow.pop %v1937
        %v1939 = vmul.f32 %v1917, 1.442695
        %v1940 = vpow.pop %v1939
        %v1941 = vmul.f32 %v1918, 1.442695
        %v1942 = vpow.pop %v1941
        %v1943 = vmul.f32 %v1919, 1.442695
        %v1944 = vpow.pop %v1943
        %v1945 = vmul.f32 %v1920, 1.442695
        %v1946 = vpow.pop %v1945
        %v1947 = vmul.f32 %v1921, 1.442695
        %v1948 = vpow.pop %v1947
        %v1949 = vmul.f32 %v1922, 1.442695
        %v1950 = vpow.pop %v1949
        %v1951 = vmul.f32 %v1923, 1.442695
        %v1952 = vpow.pop %v1951
        %v1953 = vmul.f32 %v1924, 1.442695
        %v1954 = vpow.pop %v1953
        %v1955 = vmul.f32 %v1925, 1.442695
        %v1956 = vpow.pop %v1955
        %v1957 = vmul.f32 %v1926, 1.442695
        %v1958 = vpow.pop %v1957
        %1959 = vadd.xlane.f32.xlu0 %v1928
        %v1960 = vpop.xlane.xlu0 %1959
        %1961 = vadd.xlane.f32.xlu0 %v1930
        %v1962 = vpop.xlane.xlu0 %1961
        %1963 = vadd.xlane.f32.xlu0 %v1932
        %v1964 = vpop.xlane.xlu0 %1963
        %1965 = vadd.xlane.f32.xlu0 %v1934
        %v1966 = vpop.xlane.xlu0 %1965
        %1967 = vadd.xlane.f32.xlu0 %v1936
        %v1968 = vpop.xlane.xlu0 %1967
        %1969 = vadd.xlane.f32.xlu0 %v1938
        %v1970 = vpop.xlane.xlu0 %1969
        %1971 = vadd.xlane.f32.xlu0 %v1940
        %v1972 = vpop.xlane.xlu0 %1971
        %1973 = vadd.xlane.f32.xlu0 %v1942
        %v1974 = vpop.xlane.xlu0 %1973
        %1975 = vadd.xlane.f32.xlu0 %v1944
        %v1976 = vpop.xlane.xlu0 %1975
        %1977 = vadd.xlane.f32.xlu0 %v1946
        %v1978 = vpop.xlane.xlu0 %1977
        %1979 = vadd.xlane.f32.xlu0 %v1948
        %v1980 = vpop.xlane.xlu0 %1979
        %1981 = vadd.xlane.f32.xlu0 %v1950
        %v1982 = vpop.xlane.xlu0 %1981
        %1983 = vadd.xlane.f32.xlu0 %v1952
        %v1984 = vpop.xlane.xlu0 %1983
        %1985 = vadd.xlane.f32.xlu0 %v1954
        %v1986 = vpop.xlane.xlu0 %1985
        %1987 = vadd.xlane.f32.xlu0 %v1956
        %v1988 = vpop.xlane.xlu0 %1987
        %1989 = vadd.xlane.f32.xlu0 %v1958
        %v1990 = vpop.xlane.xlu0 %1989
        %v1991 = vrcp.pop %v1960
        %v1992 = vrcp.pop %v1962
        %v1993 = vrcp.pop %v1964
        %v1994 = vrcp.pop %v1966
        %v1995 = vrcp.pop %v1968
        %v1996 = vrcp.pop %v1970
        %v1997 = vrcp.pop %v1972
        %v1998 = vrcp.pop %v1974
        %v1999 = vrcp.pop %v1976
        %v2000 = vrcp.pop %v1978
        %v2001 = vrcp.pop %v1980
        %v2002 = vrcp.pop %v1982
        %v2003 = vrcp.pop %v1984
        %v2004 = vrcp.pop %v1986
        %v2005 = vrcp.pop %v1988
        %v2006 = vrcp.pop %v1990
        %v2007 = vmul.f32 %v1928, %v1991
        %v2008 = vmul.f32 %v1930, %v1992
        %v2009 = vmul.f32 %v1932, %v1993
        %v2010 = vmul.f32 %v1934, %v1994
        %v2011 = vmul.f32 %v1936, %v1995
        %v2012 = vmul.f32 %v1938, %v1996
        %v2013 = vmul.f32 %v1940, %v1997
        %v2014 = vmul.f32 %v1942, %v1998
        %v2015 = vmul.f32 %v1944, %v1999
        %v2016 = vmul.f32 %v1946, %v2000
        %v2017 = vmul.f32 %v1948, %v2001
        %v2018 = vmul.f32 %v1950, %v2002
        %v2019 = vmul.f32 %v1952, %v2003
        %v2020 = vmul.f32 %v1954, %v2004
        %v2021 = vmul.f32 %v1956, %v2005
        %v2022 = vmul.f32 %v1958, %v2006
        %v2023 = vpack.c.bf16 %v2008, %v2007
        %v2024 = vpack.c.bf16 %v2010, %v2009
        %v2025 = vpack.c.bf16 %v2012, %v2011
        %v2026 = vpack.c.bf16 %v2014, %v2013
        %v2027 = vpack.c.bf16 %v2016, %v2015
        %v2028 = vpack.c.bf16 %v2018, %v2017
        %v2029 = vpack.c.bf16 %v2020, %v2019
        %v2030 = vpack.c.bf16 %v2022, %v2021
        %2031 = vmatprep.subr.bf16.mxu0 0
        %2032 = vmatpush1.bf16.msra.mxu0 %v1685
        %2033 = vmatprep.subr.bf16.mxu0 0
        %2034 = vmatpush1.bf16.msra.mxu0 %v1687
        %2035 = vmatprep.subr.bf16.mxu0 0
        %2036 = vmatpush1.bf16.msra.mxu0 %v1689
        %2037 = vmatprep.subr.bf16.mxu0 0
        %2038 = vmatpush1.bf16.msra.mxu0 %v1691
        %2039 = vmatprep.subr.bf16.mxu0 0
        %2040 = vmatpush1.bf16.msra.mxu0 %v1693
        %2041 = vmatprep.subr.bf16.mxu0 0
        %2042 = vmatpush1.bf16.msra.mxu0 %v1695
        %2043 = vmatprep.subr.bf16.mxu0 0
        %2044 = vmatpush1.bf16.msra.mxu0 %v1697
        %2045 = vmatprep.subr.bf16.mxu0 0
        %2046 = vmatpush1.bf16.msra.mxu0 %v1699
        %2047 = vmatprep.subr.bf16.mxu0 0
        %2048 = vmatpush1.bf16.msra.mxu0 0
        %2049 = vmatprep.subr.bf16.mxu0 0
        %2050 = vmatpush1.bf16.msra.mxu0 0
        %2051 = vmatprep.subr.bf16.mxu0 0
        %2052 = vmatpush1.bf16.msra.mxu0 0
        %2053 = vmatprep.subr.bf16.mxu0 0
        %2054 = vmatpush1.bf16.msra.mxu0 0
        %2055 = vmatprep.subr.bf16.mxu0 0
        %2056 = vmatpush1.bf16.msra.mxu0 0
        %2057 = vmatprep.subr.bf16.mxu0 0
        %2058 = vmatpush1.bf16.msra.mxu0 0
        %2059 = vmatprep.subr.bf16.mxu0 0
        %2060 = vmatpush1.bf16.msra.mxu0 0
        %2061 = vmatprep.subr.bf16.mxu0 0
        %2062 = vmatpush1.bf16.msra.mxu0 0
        %2063 = vmatprep.mubr.bf16.mxu0 0
        %2064 = vmatmul.mubr.bf16.gmra.mrb[0].mxu0 %v2023
        %v2065 = vpop.f32.mrb[0].mxu0
        %v2066 = vadd.f32 0.0, %v2065
        %v2067 = vpop.f32.mrb[0].mxu0
        %v2068 = vpop.f32.mrb[0].mxu0
        %v2069 = vadd.f32 0.0, %v2068
        %v2070 = vpop.f32.mrb[0].mxu0
        %2071 = vmatprep.mubr.bf16.mxu0 0
        %2072 = vmatmul.mubr.bf16.gmra.mrb[0].mxu0 %v2024
        %v2073 = vpop.f32.mrb[0].mxu0
        %v2074 = vadd.f32 0.0, %v2073
        %v2075 = vpop.f32.mrb[0].mxu0
        %v2076 = vpop.f32.mrb[0].mxu0
        %v2077 = vadd.f32 0.0, %v2076
        %v2078 = vpop.f32.mrb[0].mxu0
        %2079 = vmatprep.mubr.bf16.mxu0 0
        %2080 = vmatmul.mubr.bf16.gmra.mrb[0].mxu0 %v2025
        %v2081 = vpop.f32.mrb[0].mxu0
        %v2082 = vadd.f32 0.0, %v2081
        %v2083 = vpop.f32.mrb[0].mxu0
        %v2084 = vpop.f32.mrb[0].mxu0
        %v2085 = vadd.f32 0.0, %v2084
        %v2086 = vpop.f32.mrb[0].mxu0
        %2087 = vmatprep.mubr.bf16.mxu0 0
        %2088 = vmatmul.mubr.bf16.gmra.mrb[0].mxu0 %v2026
        %v2089 = vpop.f32.mrb[0].mxu0
        %v2090 = vadd.f32 0.0, %v2089
        %v2091 = vpop.f32.mrb[0].mxu0
        %v2092 = vpop.f32.mrb[0].mxu0
        %v2093 = vadd.f32 0.0, %v2092
        %v2094 = vpop.f32.mrb[0].mxu0
        %2095 = vmatprep.mubr.bf16.mxu0 0
        %2096 = vmatmul.mubr.bf16.gmra.mrb[0].mxu0 %v2027
        %v2097 = vpop.f32.mrb[0].mxu0
        %v2098 = vadd.f32 0.0, %v2097
        %v2099 = vpop.f32.mrb[0].mxu0
        %v2100 = vpop.f32.mrb[0].mxu0
        %v2101 = vadd.f32 0.0, %v2100
        %v2102 = vpop.f32.mrb[0].mxu0
        %2103 = vmatprep.mubr.bf16.mxu0 0
        %2104 = vmatmul.mubr.bf16.gmra.mrb[0].mxu0 %v2028
        %v2105 = vpop.f32.mrb[0].mxu0
        %v2106 = vadd.f32 0.0, %v2105
        %v2107 = vpop.f32.mrb[0].mxu0
        %v2108 = vpop.f32.mrb[0].mxu0
        %v2109 = vadd.f32 0.0, %v2108
        %v2110 = vpop.f32.mrb[0].mxu0
        %2111 = vmatprep.mubr.bf16.mxu0 0
        %2112 = vmatmul.mubr.bf16.gmra.mrb[0].mxu0 %v2029
        %v2113 = vpop.f32.mrb[0].mxu0
        %v2114 = vadd.f32 0.0, %v2113
        %v2115 = vpop.f32.mrb[0].mxu0
        %v2116 = vpop.f32.mrb[0].mxu0
        %v2117 = vadd.f32 0.0, %v2116
        %v2118 = vpop.f32.mrb[0].mxu0
        %2119 = vmatprep.mubr.bf16.mxu0 0
        %2120 = vmatmul.mubr.bf16.gmra.mrb[0].mxu0 %v2030
        %v2121 = vpop.f32.mrb[0].mxu0
        %v2122 = vadd.f32 0.0, %v2121
        %v2123 = vpop.f32.mrb[0].mxu0
        %v2124 = vpop.f32.mrb[0].mxu0
        %v2125 = vadd.f32 0.0, %v2124
        %v2126 = vpop.f32.mrb[0].mxu0
        %2127 = vdwg.mxu0
        %v2128 = vpack.c.bf16 %v2069, %v2066
        %v2129 = vpack.c.bf16 %v2077, %v2074
        %v2130 = vpack.c.bf16 %v2085, %v2082
        %v2131 = vpack.c.bf16 %v2093, %v2090
        %v2132 = vpack.c.bf16 %v2101, %v2098
        %v2133 = vpack.c.bf16 %v2109, %v2106
        %v2134 = vpack.c.bf16 %v2117, %v2114
        %v2135 = vpack.c.bf16 %v2125, %v2122
        %2144 = vrot.lane.b32.xlu0 %v1652, 64
        %v2145 = vpop.permute.xlu0 %2144
        %2146 = vrot.lane.b32.xlu0 %v1654, 64
        %v2147 = vpop.permute.xlu0 %2146
        %2148 = vrot.lane.b32.xlu0 %v1656, 64
        %v2149 = vpop.permute.xlu0 %2148
        %2150 = vrot.lane.b32.xlu0 %v1658, 64
        %v2151 = vpop.permute.xlu0 %2150
        %2152 = vrot.lane.b32.xlu0 %v1660, 64
        %v2153 = vpop.permute.xlu0 %2152
        %2154 = vrot.lane.b32.xlu0 %v1662, 64
        %v2155 = vpop.permute.xlu0 %2154
        %2156 = vrot.lane.b32.xlu0 %v1664, 64
        %v2157 = vpop.permute.xlu0 %2156
        %2158 = vrot.lane.b32.xlu0 %v1666, 64
        %v2159 = vpop.permute.xlu0 %2158
        %2168 = vrot.lane.b32.xlu0 %v1668, 64
        %v2169 = vpop.permute.xlu0 %2168
        %2170 = vrot.lane.b32.xlu0 %v1670, 64
        %v2171 = vpop.permute.xlu0 %2170
        %2172 = vrot.lane.b32.xlu0 %v1672, 64
        %v2173 = vpop.permute.xlu0 %2172
        %2174 = vrot.lane.b32.xlu0 %v1674, 64
        %v2175 = vpop.permute.xlu0 %2174
        %2176 = vrot.lane.b32.xlu0 %v1676, 64
        %v2177 = vpop.permute.xlu0 %2176
        %2178 = vrot.lane.b32.xlu0 %v1678, 64
        %v2179 = vpop.permute.xlu0 %2178
        %2180 = vrot.lane.b32.xlu0 %v1680, 64
        %v2181 = vpop.permute.xlu0 %2180
        %2182 = vrot.lane.b32.xlu0 %v1682, 64
        %v2183 = vpop.permute.xlu0 %2182
        %v2185 = vsel %vm1733, %v2145, 0
        %v2188 = vsel %vm1733, %v2147, 0
        %v2191 = vsel %vm1733, %v2149, 0
        %v2194 = vsel %vm1733, %v2151, 0
        %v2197 = vsel %vm1733, %v2153, 0
        %v2200 = vsel %vm1733, %v2155, 0
        %v2203 = vsel %vm1733, %v2157, 0
        %v2206 = vsel %vm1733, %v2159, 0
        %v2209 = vsel %vm1733, %v2169, 0
        %v2212 = vsel %vm1733, %v2171, 0
        %v2215 = vsel %vm1733, %v2173, 0
        %v2218 = vsel %vm1733, %v2175, 0
        %v2221 = vsel %vm1733, %v2177, 0
        %v2224 = vsel %vm1733, %v2179, 0
        %v2227 = vsel %vm1733, %v2181, 0
        %v2230 = vsel %vm1733, %v2183, 0
        %2232 = vmatprep.subr.bf16.mxu0 0
        %2233 = vmatpush1.bf16.xpose.msra.mxu0 %v2209
        %2234 = vmatprep.subr.bf16.mxu0 0
        %2235 = vmatpush1.bf16.xpose.msra.mxu0 %v2212
        %2236 = vmatprep.subr.bf16.mxu0 0
        %2237 = vmatpush1.bf16.xpose.msra.mxu0 %v2215
        %2238 = vmatprep.subr.bf16.mxu0 0
        %2239 = vmatpush1.bf16.xpose.msra.mxu0 %v2218
        %2240 = vmatprep.subr.bf16.mxu0 0
        %2241 = vmatpush1.bf16.xpose.msra.mxu0 %v2221
        %2242 = vmatprep.subr.bf16.mxu0 0
        %2243 = vmatpush1.bf16.xpose.msra.mxu0 %v2224
        %2244 = vmatprep.subr.bf16.mxu0 0
        %2245 = vmatpush1.bf16.xpose.msra.mxu0 %v2227
        %2246 = vmatprep.subr.bf16.mxu0 0
        %2247 = vmatpush1.bf16.xpose.msra.mxu0 %v2230
        %2248 = vmatprep.subr.bf16.mxu0 0
        %2249 = vmatpush1.bf16.xpose.msra.mxu0 0
        %2250 = vmatprep.subr.bf16.mxu0 0
        %2251 = vmatpush1.bf16.xpose.msra.mxu0 0
        %2252 = vmatprep.subr.bf16.mxu0 0
        %2253 = vmatpush1.bf16.xpose.msra.mxu0 0
        %2254 = vmatprep.subr.bf16.mxu0 0
        %2255 = vmatpush1.bf16.xpose.msra.mxu0 0
        %2256 = vmatprep.subr.bf16.mxu0 0
        %2257 = vmatpush1.bf16.xpose.msra.mxu0 0
        %2258 = vmatprep.subr.bf16.mxu0 0
        %2259 = vmatpush1.bf16.xpose.msra.mxu0 0
        %2260 = vmatprep.subr.bf16.mxu0 0
        %2261 = vmatpush1.bf16.xpose.msra.mxu0 0
        %2262 = vmatprep.subr.bf16.mxu0 0
        %2263 = vmatpush1.bf16.xpose.msra.mxu0 0
        %2264 = vmatprep.mubr.bf16.mxu0 0
        %2265 = vmatmul.mubr.bf16.gmra.mrb[0].mxu0 %v2185
        %v2266 = vpop.f32.mrb[0].mxu0
        %v2267 = vadd.f32 0.0, %v2266
        %v2268 = vpop.f32.mrb[0].mxu0
        %v2269 = vpop.f32.mrb[0].mxu0
        %v2270 = vadd.f32 0.0, %v2269
        %v2271 = vpop.f32.mrb[0].mxu0
        %2272 = vmatprep.mubr.bf16.mxu0 0
        %2273 = vmatmul.mubr.bf16.gmra.mrb[0].mxu0 %v2188
        %v2274 = vpop.f32.mrb[0].mxu0
        %v2275 = vadd.f32 0.0, %v2274
        %v2276 = vpop.f32.mrb[0].mxu0
        %v2277 = vpop.f32.mrb[0].mxu0
        %v2278 = vadd.f32 0.0, %v2277
        %v2279 = vpop.f32.mrb[0].mxu0
        %2280 = vmatprep.mubr.bf16.mxu0 0
        %2281 = vmatmul.mubr.bf16.gmra.mrb[0].mxu0 %v2191
        %v2282 = vpop.f32.mrb[0].mxu0
        %v2283 = vadd.f32 0.0, %v2282
        %v2284 = vpop.f32.mrb[0].mxu0
        %v2285 = vpop.f32.mrb[0].mxu0
        %v2286 = vadd.f32 0.0, %v2285
        %v2287 = vpop.f32.mrb[0].mxu0
        %2288 = vmatprep.mubr.bf16.mxu0 0
        %2289 = vmatmul.mubr.bf16.gmra.mrb[0].mxu0 %v2194
        %v2290 = vpop.f32.mrb[0].mxu0
        %v2291 = vadd.f32 0.0, %v2290
        %v2292 = vpop.f32.mrb[0].mxu0
        %v2293 = vpop.f32.mrb[0].mxu0
        %v2294 = vadd.f32 0.0, %v2293
        %v2295 = vpop.f32.mrb[0].mxu0
        %2296 = vmatprep.mubr.bf16.mxu0 0
        %2297 = vmatmul.mubr.bf16.gmra.mrb[0].mxu0 %v2197
        %v2298 = vpop.f32.mrb[0].mxu0
        %v2299 = vadd.f32 0.0, %v2298
        %v2300 = vpop.f32.mrb[0].mxu0
        %v2301 = vpop.f32.mrb[0].mxu0
        %v2302 = vadd.f32 0.0, %v2301
        %v2303 = vpop.f32.mrb[0].mxu0
        %2304 = vmatprep.mubr.bf16.mxu0 0
        %2305 = vmatmul.mubr.bf16.gmra.mrb[0].mxu0 %v2200
        %v2306 = vpop.f32.mrb[0].mxu0
        %v2307 = vadd.f32 0.0, %v2306
        %v2308 = vpop.f32.mrb[0].mxu0
        %v2309 = vpop.f32.mrb[0].mxu0
        %v2310 = vadd.f32 0.0, %v2309
        %v2311 = vpop.f32.mrb[0].mxu0
        %2312 = vmatprep.mubr.bf16.mxu0 0
        %2313 = vmatmul.mubr.bf16.gmra.mrb[0].mxu0 %v2203
        %v2314 = vpop.f32.mrb[0].mxu0
        %v2315 = vadd.f32 0.0, %v2314
        %v2316 = vpop.f32.mrb[0].mxu0
        %v2317 = vpop.f32.mrb[0].mxu0
        %v2318 = vadd.f32 0.0, %v2317
        %v2319 = vpop.f32.mrb[0].mxu0
        %2320 = vmatprep.mubr.bf16.mxu0 0
        %2321 = vmatmul.mubr.bf16.gmra.mrb[0].mxu0 %v2206
        %v2322 = vpop.f32.mrb[0].mxu0
        %v2323 = vadd.f32 0.0, %v2322
        %v2324 = vpop.f32.mrb[0].mxu0
        %v2325 = vpop.f32.mrb[0].mxu0
        %v2326 = vadd.f32 0.0, %v2325
        %v2327 = vpop.f32.mrb[0].mxu0
        %2328 = vdwg.mxu0
        %2329 = vmax.xlane.f32.xlu0 %v2267
        %v2330 = vpop.xlane.xlu0 %2329
        %2331 = vmax.xlane.f32.xlu0 %v2270
        %v2332 = vpop.xlane.xlu0 %2331
        %2333 = vmax.xlane.f32.xlu0 %v2275
        %v2334 = vpop.xlane.xlu0 %2333
        %2335 = vmax.xlane.f32.xlu0 %v2278
        %v2336 = vpop.xlane.xlu0 %2335
        %2337 = vmax.xlane.f32.xlu0 %v2283
        %v2338 = vpop.xlane.xlu0 %2337
        %2339 = vmax.xlane.f32.xlu0 %v2286
        %v2340 = vpop.xlane.xlu0 %2339
        %2341 = vmax.xlane.f32.xlu0 %v2291
        %v2342 = vpop.xlane.xlu0 %2341
        %2343 = vmax.xlane.f32.xlu0 %v2294
        %v2344 = vpop.xlane.xlu0 %2343
        %2345 = vmax.xlane.f32.xlu0 %v2299
        %v2346 = vpop.xlane.xlu0 %2345
        %2347 = vmax.xlane.f32.xlu0 %v2302
        %v2348 = vpop.xlane.xlu0 %2347
        %2349 = vmax.xlane.f32.xlu0 %v2307
        %v2350 = vpop.xlane.xlu0 %2349
        %2351 = vmax.xlane.f32.xlu0 %v2310
        %v2352 = vpop.xlane.xlu0 %2351
        %2353 = vmax.xlane.f32.xlu0 %v2315
        %v2354 = vpop.xlane.xlu0 %2353
        %2355 = vmax.xlane.f32.xlu0 %v2318
        %v2356 = vpop.xlane.xlu0 %2355
        %2357 = vmax.xlane.f32.xlu0 %v2323
        %v2358 = vpop.xlane.xlu0 %2357
        %2359 = vmax.xlane.f32.xlu0 %v2326
        %v2360 = vpop.xlane.xlu0 %2359
        %v2361 = vsub.f32 %v2267, %v2330
        %v2362 = vsub.f32 %v2270, %v2332
        %v2363 = vsub.f32 %v2275, %v2334
        %v2364 = vsub.f32 %v2278, %v2336
        %v2365 = vsub.f32 %v2283, %v2338
        %v2366 = vsub.f32 %v2286, %v2340
        %v2367 = vsub.f32 %v2291, %v2342
        %v2368 = vsub.f32 %v2294, %v2344
        %v2369 = vsub.f32 %v2299, %v2346
        %v2370 = vsub.f32 %v2302, %v2348
        %v2371 = vsub.f32 %v2307, %v2350
        %v2372 = vsub.f32 %v2310, %v2352
        %v2373 = vsub.f32 %v2315, %v2354
        %v2374 = vsub.f32 %v2318, %v2356
        %v2375 = vsub.f32 %v2323, %v2358
        %v2376 = vsub.f32 %v2326, %v2360
        %v2377 = vmul.f32 %v2361, 1.442695
        %v2378 = vpow.pop %v2377
        %v2379 = vmul.f32 %v2362, 1.442695
        %v2380 = vpow.pop %v2379
        %v2381 = vmul.f32 %v2363, 1.442695
        %v2382 = vpow.pop %v2381
        %v2383 = vmul.f32 %v2364, 1.442695
        %v2384 = vpow.pop %v2383
        %v2385 = vmul.f32 %v2365, 1.442695
        %v2386 = vpow.pop %v2385
        %v2387 = vmul.f32 %v2366, 1.442695
        %v2388 = vpow.pop %v2387
        %v2389 = vmul.f32 %v2367, 1.442695
        %v2390 = vpow.pop %v2389
        %v2391 = vmul.f32 %v2368, 1.442695
        %v2392 = vpow.pop %v2391
        %v2393 = vmul.f32 %v2369, 1.442695
        %v2394 = vpow.pop %v2393
        %v2395 = vmul.f32 %v2370, 1.442695
        %v2396 = vpow.pop %v2395
        %v2397 = vmul.f32 %v2371, 1.442695
        %v2398 = vpow.pop %v2397
        %v2399 = vmul.f32 %v2372, 1.442695
        %v2400 = vpow.pop %v2399
        %v2401 = vmul.f32 %v2373, 1.442695
        %v2402 = vpow.pop %v2401
        %v2403 = vmul.f32 %v2374, 1.442695
        %v2404 = vpow.pop %v2403
        %v2405 = vmul.f32 %v2375, 1.442695
        %v2406 = vpow.pop %v2405
        %v2407 = vmul.f32 %v2376, 1.442695
        %v2408 = vpow.pop %v2407
        %2409 = vadd.xlane.f32.xlu0 %v2378
        %v2410 = vpop.xlane.xlu0 %2409
        %2411 = vadd.xlane.f32.xlu0 %v2380
        %v2412 = vpop.xlane.xlu0 %2411
        %2413 = vadd.xlane.f32.xlu0 %v2382
        %v2414 = vpop.xlane.xlu0 %2413
        %2415 = vadd.xlane.f32.xlu0 %v2384
        %v2416 = vpop.xlane.xlu0 %2415
        %2417 = vadd.xlane.f32.xlu0 %v2386
        %v2418 = vpop.xlane.xlu0 %2417
        %2419 = vadd.xlane.f32.xlu0 %v2388
        %v2420 = vpop.xlane.xlu0 %2419
        %2421 = vadd.xlane.f32.xlu0 %v2390
        %v2422 = vpop.xlane.xlu0 %2421
        %2423 = vadd.xlane.f32.xlu0 %v2392
        %v2424 = vpop.xlane.xlu0 %2423
        %2425 = vadd.xlane.f32.xlu0 %v2394
        %v2426 = vpop.xlane.xlu0 %2425
        %2427 = vadd.xlane.f32.xlu0 %v2396
        %v2428 = vpop.xlane.xlu0 %2427
        %2429 = vadd.xlane.f32.xlu0 %v2398
        %v2430 = vpop.xlane.xlu0 %2429
        %2431 = vadd.xlane.f32.xlu0 %v2400
        %v2432 = vpop.xlane.xlu0 %2431
        %2433 = vadd.xlane.f32.xlu0 %v2402
        %v2434 = vpop.xlane.xlu0 %2433
        %2435 = vadd.xlane.f32.xlu0 %v2404
        %v2436 = vpop.xlane.xlu0 %2435
        %2437 = vadd.xlane.f32.xlu0 %v2406
        %v2438 = vpop.xlane.xlu0 %2437
        %2439 = vadd.xlane.f32.xlu0 %v2408
        %v2440 = vpop.xlane.xlu0 %2439
        %v2441 = vrcp.pop %v2410
        %v2442 = vrcp.pop %v2412
        %v2443 = vrcp.pop %v2414
        %v2444 = vrcp.pop %v2416
        %v2445 = vrcp.pop %v2418
        %v2446 = vrcp.pop %v2420
        %v2447 = vrcp.pop %v2422
        %v2448 = vrcp.pop %v2424
        %v2449 = vrcp.pop %v2426
        %v2450 = vrcp.pop %v2428
        %v2451 = vrcp.pop %v2430
        %v2452 = vrcp.pop %v2432
        %v2453 = vrcp.pop %v2434
        %v2454 = vrcp.pop %v2436
        %v2455 = vrcp.pop %v2438
        %v2456 = vrcp.pop %v2440
        %v2457 = vmul.f32 %v2378, %v2441
        %v2458 = vmul.f32 %v2380, %v2442
        %v2459 = vmul.f32 %v2382, %v2443
        %v2460 = vmul.f32 %v2384, %v2444
        %v2461 = vmul.f32 %v2386, %v2445
        %v2462 = vmul.f32 %v2388, %v2446
        %v2463 = vmul.f32 %v2390, %v2447
        %v2464 = vmul.f32 %v2392, %v2448
        %v2465 = vmul.f32 %v2394, %v2449
        %v2466 = vmul.f32 %v2396, %v2450
        %v2467 = vmul.f32 %v2398, %v2451
        %v2468 = vmul.f32 %v2400, %v2452
        %v2469 = vmul.f32 %v2402, %v2453
        %v2470 = vmul.f32 %v2404, %v2454
        %v2471 = vmul.f32 %v2406, %v2455
        %v2472 = vmul.f32 %v2408, %v2456
        %v2473 = vpack.c.bf16 %v2458, %v2457
        %v2474 = vpack.c.bf16 %v2460, %v2459
        %v2475 = vpack.c.bf16 %v2462, %v2461
        %v2476 = vpack.c.bf16 %v2464, %v2463
        %v2477 = vpack.c.bf16 %v2466, %v2465
        %v2478 = vpack.c.bf16 %v2468, %v2467
        %v2479 = vpack.c.bf16 %v2470, %v2469
        %v2480 = vpack.c.bf16 %v2472, %v2471
        %2489 = vrot.lane.b32.xlu0 %v1685, 64
        %v2490 = vpop.permute.xlu0 %2489
        %2491 = vrot.lane.b32.xlu0 %v1687, 64
        %v2492 = vpop.permute.xlu0 %2491
        %2493 = vrot.lane.b32.xlu0 %v1689, 64
        %v2494 = vpop.permute.xlu0 %2493
        %2495 = vrot.lane.b32.xlu0 %v1691, 64
        %v2496 = vpop.permute.xlu0 %2495
        %2497 = vrot.lane.b32.xlu0 %v1693, 64
        %v2498 = vpop.permute.xlu0 %2497
        %2499 = vrot.lane.b32.xlu0 %v1695, 64
        %v2500 = vpop.permute.xlu0 %2499
        %2501 = vrot.lane.b32.xlu0 %v1697, 64
        %v2502 = vpop.permute.xlu0 %2501
        %2503 = vrot.lane.b32.xlu0 %v1699, 64
        %v2504 = vpop.permute.xlu0 %2503
        %2513 = vmatprep.subr.bf16.mxu0 0
        %2514 = vmatpush1.bf16.msra.mxu0 %v2490
        %2515 = vmatprep.subr.bf16.mxu0 0
        %2516 = vmatpush1.bf16.msra.mxu0 %v2492
        %2517 = vmatprep.subr.bf16.mxu0 0
        %2518 = vmatpush1.bf16.msra.mxu0 %v2494
        %2519 = vmatprep.subr.bf16.mxu0 0
        %2520 = vmatpush1.bf16.msra.mxu0 %v2496
        %2521 = vmatprep.subr.bf16.mxu0 0
        %2522 = vmatpush1.bf16.msra.mxu0 %v2498
        %2523 = vmatprep.subr.bf16.mxu0 0
        %2524 = vmatpush1.bf16.msra.mxu0 %v2500
        %2525 = vmatprep.subr.bf16.mxu0 0
        %2526 = vmatpush1.bf16.msra.mxu0 %v2502
        %2527 = vmatprep.subr.bf16.mxu0 0
        %2528 = vmatpush1.bf16.msra.mxu0 %v2504
        %2529 = vmatprep.subr.bf16.mxu0 0
        %2530 = vmatpush1.bf16.msra.mxu0 0
        %2531 = vmatprep.subr.bf16.mxu0 0
        %2532 = vmatpush1.bf16.msra.mxu0 0
        %2533 = vmatprep.subr.bf16.mxu0 0
        %2534 = vmatpush1.bf16.msra.mxu0 0
        %2535 = vmatprep.subr.bf16.mxu0 0
        %2536 = vmatpush1.bf16.msra.mxu0 0
        %2537 = vmatprep.subr.bf16.mxu0 0
        %2538 = vmatpush1.bf16.msra.mxu0 0
        %2539 = vmatprep.subr.bf16.mxu0 0
        %2540 = vmatpush1.bf16.msra.mxu0 0
        %2541 = vmatprep.subr.bf16.mxu0 0
        %2542 = vmatpush1.bf16.msra.mxu0 0
        %2543 = vmatprep.subr.bf16.mxu0 0
        %2544 = vmatpush1.bf16.msra.mxu0 0
        %2545 = vmatprep.mubr.bf16.mxu0 0
        %2546 = vmatmul.mubr.bf16.gmra.mrb[0].mxu0 %v2473
        %v2547 = vpop.f32.mrb[0].mxu0
        %v2548 = vadd.f32 0.0, %v2547
        %v2549 = vpop.f32.mrb[0].mxu0
        %v2550 = vpop.f32.mrb[0].mxu0
        %v2551 = vadd.f32 0.0, %v2550
        %v2552 = vpop.f32.mrb[0].mxu0
        %2553 = vmatprep.mubr.bf16.mxu0 0
        %2554 = vmatmul.mubr.bf16.gmra.mrb[0].mxu0 %v2474
        %v2555 = vpop.f32.mrb[0].mxu0
        %v2556 = vadd.f32 0.0, %v2555
        %v2557 = vpop.f32.mrb[0].mxu0
        %v2558 = vpop.f32.mrb[0].mxu0
        %v2559 = vadd.f32 0.0, %v2558
        %v2560 = vpop.f32.mrb[0].mxu0
        %2561 = vmatprep.mubr.bf16.mxu0 0
        %2562 = vmatmul.mubr.bf16.gmra.mrb[0].mxu0 %v2475
        %v2563 = vpop.f32.mrb[0].mxu0
        %v2564 = vadd.f32 0.0, %v2563
        %v2565 = vpop.f32.mrb[0].mxu0
        %v2566 = vpop.f32.mrb[0].mxu0
        %v2567 = vadd.f32 0.0, %v2566
        %v2568 = vpop.f32.mrb[0].mxu0
        %2569 = vmatprep.mubr.bf16.mxu0 0
        %2570 = vmatmul.mubr.bf16.gmra.mrb[0].mxu0 %v2476
        %v2571 = vpop.f32.mrb[0].mxu0
        %v2572 = vadd.f32 0.0, %v2571
        %v2573 = vpop.f32.mrb[0].mxu0
        %v2574 = vpop.f32.mrb[0].mxu0
        %v2575 = vadd.f32 0.0, %v2574
        %v2576 = vpop.f32.mrb[0].mxu0
        %2577 = vmatprep.mubr.bf16.mxu0 0
        %2578 = vmatmul.mubr.bf16.gmra.mrb[0].mxu0 %v2477
        %v2579 = vpop.f32.mrb[0].mxu0
        %v2580 = vadd.f32 0.0, %v2579
        %v2581 = vpop.f32.mrb[0].mxu0
        %v2582 = vpop.f32.mrb[0].mxu0
        %v2583 = vadd.f32 0.0, %v2582
        %v2584 = vpop.f32.mrb[0].mxu0
        %2585 = vmatprep.mubr.bf16.mxu0 0
        %2586 = vmatmul.mubr.bf16.gmra.mrb[0].mxu0 %v2478
        %v2587 = vpop.f32.mrb[0].mxu0
        %v2588 = vadd.f32 0.0, %v2587
        %v2589 = vpop.f32.mrb[0].mxu0
        %v2590 = vpop.f32.mrb[0].mxu0
        %v2591 = vadd.f32 0.0, %v2590
        %v2592 = vpop.f32.mrb[0].mxu0
        %2593 = vmatprep.mubr.bf16.mxu0 0
        %2594 = vmatmul.mubr.bf16.gmra.mrb[0].mxu0 %v2479
        %v2595 = vpop.f32.mrb[0].mxu0
        %v2596 = vadd.f32 0.0, %v2595
        %v2597 = vpop.f32.mrb[0].mxu0
        %v2598 = vpop.f32.mrb[0].mxu0
        %v2599 = vadd.f32 0.0, %v2598
        %v2600 = vpop.f32.mrb[0].mxu0
        %2601 = vmatprep.mubr.bf16.mxu0 0
        %2602 = vmatmul.mubr.bf16.gmra.mrb[0].mxu0 %v2480
        %v2603 = vpop.f32.mrb[0].mxu0
        %v2604 = vadd.f32 0.0, %v2603
        %v2605 = vpop.f32.mrb[0].mxu0
        %v2606 = vpop.f32.mrb[0].mxu0
        %v2607 = vadd.f32 0.0, %v2606
        %v2608 = vpop.f32.mrb[0].mxu0
        %2609 = vdwg.mxu0
        %v2610 = vpack.c.bf16 %v2551, %v2548
        %v2611 = vpack.c.bf16 %v2559, %v2556
        %v2612 = vpack.c.bf16 %v2567, %v2564
        %v2613 = vpack.c.bf16 %v2575, %v2572
        %v2614 = vpack.c.bf16 %v2583, %v2580
        %v2615 = vpack.c.bf16 %v2591, %v2588
        %v2616 = vpack.c.bf16 %v2599, %v2596
        %v2617 = vpack.c.bf16 %v2607, %v2604
        %v2626 = vunpack.c.l.b16 %v1709
        %v2627 = vunpack.c.h.b16 %v1709
        %v2628 = vunpack.c.l.b16 %v1710
        %v2629 = vunpack.c.h.b16 %v1710
        %v2630 = vunpack.c.l.b16 %v1711
        %v2631 = vunpack.c.h.b16 %v1711
        %v2632 = vunpack.c.l.b16 %v1712
        %v2633 = vunpack.c.h.b16 %v1712
        %v2634 = vunpack.c.l.b16 %v1713
        %v2635 = vunpack.c.h.b16 %v1713
        %v2636 = vunpack.c.l.b16 %v1714
        %v2637 = vunpack.c.h.b16 %v1714
        %v2638 = vunpack.c.l.b16 %v1715
        %v2639 = vunpack.c.h.b16 %v1715
        %v2640 = vunpack.c.l.b16 %v1716
        %v2641 = vunpack.c.h.b16 %v1716
        %v2642 = vpack.c.b16 %v2628, %v2626
        %v2643 = vpack.c.b16 %v2629, %v2627
        %v2644 = vpack.c.b16 %v2632, %v2630
        %v2645 = vpack.c.b16 %v2633, %v2631
        %v2646 = vpack.c.b16 %v2636, %v2634
        %v2647 = vpack.c.b16 %v2637, %v2635
        %v2648 = vpack.c.b16 %v2640, %v2638
        %v2649 = vpack.c.b16 %v2641, %v2639
        %v2659 = vsel %vm1733, %v2610, 0
        %v2662 = vsel %vm1733, %v2611, 0
        %v2665 = vsel %vm1733, %v2612, 0
        %v2668 = vsel %vm1733, %v2613, 0
        %v2671 = vsel %vm1733, %v2614, 0
        %v2674 = vsel %vm1733, %v2615, 0
        %v2677 = vsel %vm1733, %v2616, 0
        %v2680 = vsel %vm1733, %v2617, 0
        %2682 = vmatprep.subr.bf16.mxu0 %v2643
        %2683 = vmatpush1.bf16.msra.mxu0 %v2642
        %2684 = vmatprep.subr.bf16.mxu0 %v2645
        %2685 = vmatpush1.bf16.msra.mxu0 %v2644
        %2686 = vmatprep.subr.bf16.mxu0 %v2647
        %2687 = vmatpush1.bf16.msra.mxu0 %v2646
        %2688 = vmatprep.subr.bf16.mxu0 %v2649
        %2689 = vmatpush1.bf16.msra.mxu0 %v2648
        %2690 = vmatprep.subr.bf16.mxu0 0
        %2691 = vmatpush1.bf16.msra.mxu0 0
        %2692 = vmatprep.subr.bf16.mxu0 0
        %2693 = vmatpush1.bf16.msra.mxu0 0
        %2694 = vmatprep.subr.bf16.mxu0 0
        %2695 = vmatpush1.bf16.msra.mxu0 0
        %2696 = vmatprep.subr.bf16.mxu0 0
        %2697 = vmatpush1.bf16.msra.mxu0 0
        %2698 = vmatprep.subr.bf16.mxu0 0
        %2699 = vmatpush1.bf16.msra.mxu0 0
        %2700 = vmatprep.subr.bf16.mxu0 0
        %2701 = vmatpush1.bf16.msra.mxu0 0
        %2702 = vmatprep.subr.bf16.mxu0 0
        %2703 = vmatpush1.bf16.msra.mxu0 0
        %2704 = vmatprep.subr.bf16.mxu0 0
        %2705 = vmatpush1.bf16.msra.mxu0 0
        %2706 = vmatprep.subr.bf16.mxu0 0
        %2707 = vmatpush1.bf16.msra.mxu0 0
        %2708 = vmatprep.subr.bf16.mxu0 0
        %2709 = vmatpush1.bf16.msra.mxu0 0
        %2710 = vmatprep.subr.bf16.mxu0 0
        %2711 = vmatpush1.bf16.msra.mxu0 0
        %2712 = vmatprep.subr.bf16.mxu0 0
        %2713 = vmatpush1.bf16.msra.mxu0 0
        %2714 = vmatprep.mubr.bf16.mxu0 0
        %2715 = vmatmul.mubr.bf16.gmra.mrb[0].mxu0 %v2659
        %v2716 = vpop.f32.mrb[0].mxu0
        %v2717 = vadd.f32 0.0, %v2716
        %v2718 = vpop.f32.mrb[0].mxu0
        %v2719 = vadd.f32 0.0, %v2718
        %v2720 = vpop.f32.mrb[0].mxu0
        %v2721 = vadd.f32 0.0, %v2720
        %v2722 = vpop.f32.mrb[0].mxu0
        %v2723 = vadd.f32 0.0, %v2722
        %2724 = vmatprep.mubr.bf16.mxu0 0
        %2725 = vmatmul.mubr.bf16.gmra.mrb[0].mxu0 %v2662
        %v2726 = vpop.f32.mrb[0].mxu0
        %v2727 = vadd.f32 0.0, %v2726
        %v2728 = vpop.f32.mrb[0].mxu0
        %v2729 = vadd.f32 0.0, %v2728
        %v2730 = vpop.f32.mrb[0].mxu0
        %v2731 = vadd.f32 0.0, %v2730
        %v2732 = vpop.f32.mrb[0].mxu0
        %v2733 = vadd.f32 0.0, %v2732
        %2734 = vmatprep.mubr.bf16.mxu0 0
        %2735 = vmatmul.mubr.bf16.gmra.mrb[0].mxu0 %v2665
        %v2736 = vpop.f32.mrb[0].mxu0
        %v2737 = vadd.f32 0.0, %v2736
        %v2738 = vpop.f32.mrb[0].mxu0
        %v2739 = vadd.f32 0.0, %v2738
        %v2740 = vpop.f32.mrb[0].mxu0
        %v2741 = vadd.f32 0.0, %v2740
        %v2742 = vpop.f32.mrb[0].mxu0
        %v2743 = vadd.f32 0.0, %v2742
        %2744 = vmatprep.mubr.bf16.mxu0 0
        %2745 = vmatmul.mubr.bf16.gmra.mrb[0].mxu0 %v2668
        %v2746 = vpop.f32.mrb[0].mxu0
        %v2747 = vadd.f32 0.0, %v2746
        %v2748 = vpop.f32.mrb[0].mxu0
        %v2749 = vadd.f32 0.0, %v2748
        %v2750 = vpop.f32.mrb[0].mxu0
        %v2751 = vadd.f32 0.0, %v2750
        %v2752 = vpop.f32.mrb[0].mxu0
        %v2753 = vadd.f32 0.0, %v2752
        %2754 = vmatprep.mubr.bf16.mxu0 0
        %2755 = vmatmul.mubr.bf16.gmra.mrb[0].mxu0 %v2671
        %v2756 = vpop.f32.mrb[0].mxu0
        %v2757 = vadd.f32 0.0, %v2756
        %v2758 = vpop.f32.mrb[0].mxu0
        %v2759 = vadd.f32 0.0, %v2758
        %v2760 = vpop.f32.mrb[0].mxu0
        %v2761 = vadd.f32 0.0, %v2760
        %v2762 = vpop.f32.mrb[0].mxu0
        %v2763 = vadd.f32 0.0, %v2762
        %2764 = vmatprep.mubr.bf16.mxu0 0
        %2765 = vmatmul.mubr.bf16.gmra.mrb[0].mxu0 %v2674
        %v2766 = vpop.f32.mrb[0].mxu0
        %v2767 = vadd.f32 0.0, %v2766
        %v2768 = vpop.f32.mrb[0].mxu0
        %v2769 = vadd.f32 0.0, %v2768
        %v2770 = vpop.f32.mrb[0].mxu0
        %v2771 = vadd.f32 0.0, %v2770
        %v2772 = vpop.f32.mrb[0].mxu0
        %v2773 = vadd.f32 0.0, %v2772
        %2774 = vmatprep.mubr.bf16.mxu0 0
        %2775 = vmatmul.mubr.bf16.gmra.mrb[0].mxu0 %v2677
        %v2776 = vpop.f32.mrb[0].mxu0
        %v2777 = vadd.f32 0.0, %v2776
        %v2778 = vpop.f32.mrb[0].mxu0
        %v2779 = vadd.f32 0.0, %v2778
        %v2780 = vpop.f32.mrb[0].mxu0
        %v2781 = vadd.f32 0.0, %v2780
        %v2782 = vpop.f32.mrb[0].mxu0
        %v2783 = vadd.f32 0.0, %v2782
        %2784 = vmatprep.mubr.bf16.mxu0 0
        %2785 = vmatmul.mubr.bf16.gmra.mrb[0].mxu0 %v2680
        %v2786 = vpop.f32.mrb[0].mxu0
        %v2787 = vadd.f32 0.0, %v2786
        %v2788 = vpop.f32.mrb[0].mxu0
        %v2789 = vadd.f32 0.0, %v2788
        %v2790 = vpop.f32.mrb[0].mxu0
        %v2791 = vadd.f32 0.0, %v2790
        %v2792 = vpop.f32.mrb[0].mxu0
        %v2793 = vadd.f32 0.0, %v2792
        %2794 = vdwg.mxu0
        %v2803 = vunpack.c.l.b16 %v1701
        %v2804 = vunpack.c.h.b16 %v1701
        %v2805 = vunpack.c.l.b16 %v1702
        %v2806 = vunpack.c.h.b16 %v1702
        %v2807 = vunpack.c.l.b16 %v1703
        %v2808 = vunpack.c.h.b16 %v1703
        %v2809 = vunpack.c.l.b16 %v1704
        %v2810 = vunpack.c.h.b16 %v1704
        %v2811 = vunpack.c.l.b16 %v1705
        %v2812 = vunpack.c.h.b16 %v1705
        %v2813 = vunpack.c.l.b16 %v1706
        %v2814 = vunpack.c.h.b16 %v1706
        %v2815 = vunpack.c.l.b16 %v1707
        %v2816 = vunpack.c.h.b16 %v1707
        %v2817 = vunpack.c.l.b16 %v1708
        %v2818 = vunpack.c.h.b16 %v1708
        %v2819 = vpack.c.b16 %v2805, %v2803
        %v2820 = vpack.c.b16 %v2806, %v2804
        %v2821 = vpack.c.b16 %v2809, %v2807
        %v2822 = vpack.c.b16 %v2810, %v2808
        %v2823 = vpack.c.b16 %v2813, %v2811
        %v2824 = vpack.c.b16 %v2814, %v2812
        %v2825 = vpack.c.b16 %v2817, %v2815
        %v2826 = vpack.c.b16 %v2818, %v2816
        %v2836 = vsel %vm1733, %v2128, 0
        %v2839 = vsel %vm1733, %v2129, 0
        %v2842 = vsel %vm1733, %v2130, 0
        %v2845 = vsel %vm1733, %v2131, 0
        %v2848 = vsel %vm1733, %v2132, 0
        %v2851 = vsel %vm1733, %v2133, 0
        %v2854 = vsel %vm1733, %v2134, 0
        %v2857 = vsel %vm1733, %v2135, 0
        %2859 = vmatprep.subr.bf16.mxu0 %v2820
        %2860 = vmatpush1.bf16.msra.mxu0 %v2819
        %2861 = vmatprep.subr.bf16.mxu0 %v2822
        %2862 = vmatpush1.bf16.msra.mxu0 %v2821
        %2863 = vmatprep.subr.bf16.mxu0 %v2824
        %2864 = vmatpush1.bf16.msra.mxu0 %v2823
        %2865 = vmatprep.subr.bf16.mxu0 %v2826
        %2866 = vmatpush1.bf16.msra.mxu0 %v2825
        %2867 = vmatprep.subr.bf16.mxu0 0
        %2868 = vmatpush1.bf16.msra.mxu0 0
        %2869 = vmatprep.subr.bf16.mxu0 0
        %2870 = vmatpush1.bf16.msra.mxu0 0
        %2871 = vmatprep.subr.bf16.mxu0 0
        %2872 = vmatpush1.bf16.msra.mxu0 0
        %2873 = vmatprep.subr.bf16.mxu0 0
        %2874 = vmatpush1.bf16.msra.mxu0 0
        %2875 = vmatprep.subr.bf16.mxu0 0
        %2876 = vmatpush1.bf16.msra.mxu0 0
        %2877 = vmatprep.subr.bf16.mxu0 0
        %2878 = vmatpush1.bf16.msra.mxu0 0
        %2879 = vmatprep.subr.bf16.mxu0 0
        %2880 = vmatpush1.bf16.msra.mxu0 0
        %2881 = vmatprep.subr.bf16.mxu0 0
        %2882 = vmatpush1.bf16.msra.mxu0 0
        %2883 = vmatprep.subr.bf16.mxu0 0
        %2884 = vmatpush1.bf16.msra.mxu0 0
        %2885 = vmatprep.subr.bf16.mxu0 0
        %2886 = vmatpush1.bf16.msra.mxu0 0
        %2887 = vmatprep.subr.bf16.mxu0 0
        %2888 = vmatpush1.bf16.msra.mxu0 0
        %2889 = vmatprep.subr.bf16.mxu0 0
        %2890 = vmatpush1.bf16.msra.mxu0 0
        %2891 = vmatprep.mubr.bf16.mxu0 0
        %2892 = vmatmul.mubr.bf16.gmra.mrb[0].mxu0 %v2836
        %v2893 = vpop.f32.mrb[0].mxu0
        %v2894 = vadd.f32 %v2717, %v2893
        %v2895 = vpop.f32.mrb[0].mxu0
        %v2896 = vadd.f32 %v2719, %v2895
        %v2897 = vpop.f32.mrb[0].mxu0
        %v2898 = vadd.f32 %v2721, %v2897
        %v2899 = vpop.f32.mrb[0].mxu0
        %v2900 = vadd.f32 %v2723, %v2899
        %2901 = vmatprep.mubr.bf16.mxu0 0
        %2902 = vmatmul.mubr.bf16.gmra.mrb[0].mxu0 %v2839
        %v2903 = vpop.f32.mrb[0].mxu0
        %v2904 = vadd.f32 %v2727, %v2903
        %v2905 = vpop.f32.mrb[0].mxu0
        %v2906 = vadd.f32 %v2729, %v2905
        %v2907 = vpop.f32.mrb[0].mxu0
        %v2908 = vadd.f32 %v2731, %v2907
        %v2909 = vpop.f32.mrb[0].mxu0
        %v2910 = vadd.f32 %v2733, %v2909
        %2911 = vmatprep.mubr.bf16.mxu0 0
        %2912 = vmatmul.mubr.bf16.gmra.mrb[0].mxu0 %v2842
        %v2913 = vpop.f32.mrb[0].mxu0
        %v2914 = vadd.f32 %v2737, %v2913
        %v2915 = vpop.f32.mrb[0].mxu0
        %v2916 = vadd.f32 %v2739, %v2915
        %v2917 = vpop.f32.mrb[0].mxu0
        %v2918 = vadd.f32 %v2741, %v2917
        %v2919 = vpop.f32.mrb[0].mxu0
        %v2920 = vadd.f32 %v2743, %v2919
        %2921 = vmatprep.mubr.bf16.mxu0 0
        %2922 = vmatmul.mubr.bf16.gmra.mrb[0].mxu0 %v2845
        %v2923 = vpop.f32.mrb[0].mxu0
        %v2924 = vadd.f32 %v2747, %v2923
        %v2925 = vpop.f32.mrb[0].mxu0
        %v2926 = vadd.f32 %v2749, %v2925
        %v2927 = vpop.f32.mrb[0].mxu0
        %v2928 = vadd.f32 %v2751, %v2927
        %v2929 = vpop.f32.mrb[0].mxu0
        %v2930 = vadd.f32 %v2753, %v2929
        %2931 = vmatprep.mubr.bf16.mxu0 0
        %2932 = vmatmul.mubr.bf16.gmra.mrb[0].mxu0 %v2848
        %v2933 = vpop.f32.mrb[0].mxu0
        %v2934 = vadd.f32 %v2757, %v2933
        %v2935 = vpop.f32.mrb[0].mxu0
        %v2936 = vadd.f32 %v2759, %v2935
        %v2937 = vpop.f32.mrb[0].mxu0
        %v2938 = vadd.f32 %v2761, %v2937
        %v2939 = vpop.f32.mrb[0].mxu0
        %v2940 = vadd.f32 %v2763, %v2939
        %2941 = vmatprep.mubr.bf16.mxu0 0
        %2942 = vmatmul.mubr.bf16.gmra.mrb[0].mxu0 %v2851
        %v2943 = vpop.f32.mrb[0].mxu0
        %v2944 = vadd.f32 %v2767, %v2943
        %v2945 = vpop.f32.mrb[0].mxu0
        %v2946 = vadd.f32 %v2769, %v2945
        %v2947 = vpop.f32.mrb[0].mxu0
        %v2948 = vadd.f32 %v2771, %v2947
        %v2949 = vpop.f32.mrb[0].mxu0
        %v2950 = vadd.f32 %v2773, %v2949
        %2951 = vmatprep.mubr.bf16.mxu0 0
        %2952 = vmatmul.mubr.bf16.gmra.mrb[0].mxu0 %v2854
        %v2953 = vpop.f32.mrb[0].mxu0
        %v2954 = vadd.f32 %v2777, %v2953
        %v2955 = vpop.f32.mrb[0].mxu0
        %v2956 = vadd.f32 %v2779, %v2955
        %v2957 = vpop.f32.mrb[0].mxu0
        %v2958 = vadd.f32 %v2781, %v2957
        %v2959 = vpop.f32.mrb[0].mxu0
        %v2960 = vadd.f32 %v2783, %v2959
        %2961 = vmatprep.mubr.bf16.mxu0 0
        %2962 = vmatmul.mubr.bf16.gmra.mrb[0].mxu0 %v2857
        %v2963 = vpop.f32.mrb[0].mxu0
        %v2964 = vadd.f32 %v2787, %v2963
        %v2965 = vpop.f32.mrb[0].mxu0
        %v2966 = vadd.f32 %v2789, %v2965
        %v2967 = vpop.f32.mrb[0].mxu0
        %v2968 = vadd.f32 %v2791, %v2967
        %v2969 = vpop.f32.mrb[0].mxu0
        %v2970 = vadd.f32 %v2793, %v2969
        %2971 = vdwg.mxu0
        %v2973 = vsel %vm1733, %v1653, 0
        %v2976 = vsel %vm1733, %v1655, 0
        %v2979 = vsel %vm1733, %v1657, 0
        %v2982 = vsel %vm1733, %v1659, 0
        %v2985 = vsel %vm1733, %v1661, 0
        %v2988 = vsel %vm1733, %v1663, 0
        %v2991 = vsel %vm1733, %v1665, 0
        %v2994 = vsel %vm1733, %v1667, 0
        %v2997 = vsel %vm1733, %v1669, 0
        %v3000 = vsel %vm1733, %v1671, 0
        %v3003 = vsel %vm1733, %v1673, 0
        %v3006 = vsel %vm1733, %v1675, 0
        %v3009 = vsel %vm1733, %v1677, 0
        %v3012 = vsel %vm1733, %v1679, 0
        %v3015 = vsel %vm1733, %v1681, 0
        %v3018 = vsel %vm1733, %v1683, 0
        %3020 = vmatprep.subr.bf16.mxu0 0
        %3021 = vmatpush1.bf16.xpose.msra.mxu0 %v2997
        %3022 = vmatprep.subr.bf16.mxu0 0
        %3023 = vmatpush1.bf16.xpose.msra.mxu0 %v3000
        %3024 = vmatprep.subr.bf16.mxu0 0
        %3025 = vmatpush1.bf16.xpose.msra.mxu0 %v3003
        %3026 = vmatprep.subr.bf16.mxu0 0
        %3027 = vmatpush1.bf16.xpose.msra.mxu0 %v3006
        %3028 = vmatprep.subr.bf16.mxu0 0
        %3029 = vmatpush1.bf16.xpose.msra.mxu0 %v3009
        %3030 = vmatprep.subr.bf16.mxu0 0
        %3031 = vmatpush1.bf16.xpose.msra.mxu0 %v3012
        %3032 = vmatprep.subr.bf16.mxu0 0
        %3033 = vmatpush1.bf16.xpose.msra.mxu0 %v3015
        %3034 = vmatprep.subr.bf16.mxu0 0
        %3035 = vmatpush1.bf16.xpose.msra.mxu0 %v3018
        %3036 = vmatprep.subr.bf16.mxu0 0
        %3037 = vmatpush1.bf16.xpose.msra.mxu0 0
        %3038 = vmatprep.subr.bf16.mxu0 0
        %3039 = vmatpush1.bf16.xpose.msra.mxu0 0
        %3040 = vmatprep.subr.bf16.mxu0 0
        %3041 = vmatpush1.bf16.xpose.msra.mxu0 0
        %3042 = vmatprep.subr.bf16.mxu0 0
        %3043 = vmatpush1.bf16.xpose.msra.mxu0 0
        %3044 = vmatprep.subr.bf16.mxu0 0
        %3045 = vmatpush1.bf16.xpose.msra.mxu0 0
        %3046 = vmatprep.subr.bf16.mxu0 0
        %3047 = vmatpush1.bf16.xpose.msra.mxu0 0
        %3048 = vmatprep.subr.bf16.mxu0 0
        %3049 = vmatpush1.bf16.xpose.msra.mxu0 0
        %3050 = vmatprep.subr.bf16.mxu0 0
        %3051 = vmatpush1.bf16.xpose.msra.mxu0 0
        %3052 = vmatprep.mubr.bf16.mxu0 0
        %3053 = vmatmul.mubr.bf16.gmra.mrb[0].mxu0 %v2973
        %v3054 = vpop.f32.mrb[0].mxu0
        %v3055 = vadd.f32 0.0, %v3054
        %v3056 = vpop.f32.mrb[0].mxu0
        %v3057 = vpop.f32.mrb[0].mxu0
        %v3058 = vadd.f32 0.0, %v3057
        %v3059 = vpop.f32.mrb[0].mxu0
        %3060 = vmatprep.mubr.bf16.mxu0 0
        %3061 = vmatmul.mubr.bf16.gmra.mrb[0].mxu0 %v2976
        %v3062 = vpop.f32.mrb[0].mxu0
        %v3063 = vadd.f32 0.0, %v3062
        %v3064 = vpop.f32.mrb[0].mxu0
        %v3065 = vpop.f32.mrb[0].mxu0
        %v3066 = vadd.f32 0.0, %v3065
        %v3067 = vpop.f32.mrb[0].mxu0
        %3068 = vmatprep.mubr.bf16.mxu0 0
        %3069 = vmatmul.mubr.bf16.gmra.mrb[0].mxu0 %v2979
        %v3070 = vpop.f32.mrb[0].mxu0
        %v3071 = vadd.f32 0.0, %v3070
        %v3072 = vpop.f32.mrb[0].mxu0
        %v3073 = vpop.f32.mrb[0].mxu0
        %v3074 = vadd.f32 0.0, %v3073
        %v3075 = vpop.f32.mrb[0].mxu0
        %3076 = vmatprep.mubr.bf16.mxu0 0
        %3077 = vmatmul.mubr.bf16.gmra.mrb[0].mxu0 %v2982
        %v3078 = vpop.f32.mrb[0].mxu0
        %v3079 = vadd.f32 0.0, %v3078
        %v3080 = vpop.f32.mrb[0].mxu0
        %v3081 = vpop.f32.mrb[0].mxu0
        %v3082 = vadd.f32 0.0, %v3081
        %v3083 = vpop.f32.mrb[0].mxu0
        %3084 = vmatprep.mubr.bf16.mxu0 0
        %3085 = vmatmul.mubr.bf16.gmra.mrb[0].mxu0 %v2985
        %v3086 = vpop.f32.mrb[0].mxu0
        %v3087 = vadd.f32 0.0, %v3086
        %v3088 = vpop.f32.mrb[0].mxu0
        %v3089 = vpop.f32.mrb[0].mxu0
        %v3090 = vadd.f32 0.0, %v3089
        %v3091 = vpop.f32.mrb[0].mxu0
        %3092 = vmatprep.mubr.bf16.mxu0 0
        %3093 = vmatmul.mubr.bf16.gmra.mrb[0].mxu0 %v2988
        %v3094 = vpop.f32.mrb[0].mxu0
        %v3095 = vadd.f32 0.0, %v3094
        %v3096 = vpop.f32.mrb[0].mxu0
        %v3097 = vpop.f32.mrb[0].mxu0
        %v3098 = vadd.f32 0.0, %v3097
        %v3099 = vpop.f32.mrb[0].mxu0
        %3100 = vmatprep.mubr.bf16.mxu0 0
        %3101 = vmatmul.mubr.bf16.gmra.mrb[0].mxu0 %v2991
        %v3102 = vpop.f32.mrb[0].mxu0
        %v3103 = vadd.f32 0.0, %v3102
        %v3104 = vpop.f32.mrb[0].mxu0
        %v3105 = vpop.f32.mrb[0].mxu0
        %v3106 = vadd.f32 0.0, %v3105
        %v3107 = vpop.f32.mrb[0].mxu0
        %3108 = vmatprep.mubr.bf16.mxu0 0
        %3109 = vmatmul.mubr.bf16.gmra.mrb[0].mxu0 %v2994
        %v3110 = vpop.f32.mrb[0].mxu0
        %v3111 = vadd.f32 0.0, %v3110
        %v3112 = vpop.f32.mrb[0].mxu0
        %v3113 = vpop.f32.mrb[0].mxu0
        %v3114 = vadd.f32 0.0, %v3113
        %v3115 = vpop.f32.mrb[0].mxu0
        %3116 = vdwg.mxu0
        %3117 = vmax.xlane.f32.xlu0 %v3055
        %v3118 = vpop.xlane.xlu0 %3117
        %3119 = vmax.xlane.f32.xlu0 %v3058
        %v3120 = vpop.xlane.xlu0 %3119
        %3121 = vmax.xlane.f32.xlu0 %v3063
        %v3122 = vpop.xlane.xlu0 %3121
        %3123 = vmax.xlane.f32.xlu0 %v3066
        %v3124 = vpop.xlane.xlu0 %3123
        %3125 = vmax.xlane.f32.xlu0 %v3071
        %v3126 = vpop.xlane.xlu0 %3125
        %3127 = vmax.xlane.f32.xlu0 %v3074
        %v3128 = vpop.xlane.xlu0 %3127
        %3129 = vmax.xlane.f32.xlu0 %v3079
        %v3130 = vpop.xlane.xlu0 %3129
        %3131 = vmax.xlane.f32.xlu0 %v3082
        %v3132 = vpop.xlane.xlu0 %3131
        %3133 = vmax.xlane.f32.xlu0 %v3087
        %v3134 = vpop.xlane.xlu0 %3133
        %3135 = vmax.xlane.f32.xlu0 %v3090
        %v3136 = vpop.xlane.xlu0 %3135
        %3137 = vmax.xlane.f32.xlu0 %v3095
        %v3138 = vpop.xlane.xlu0 %3137
        %3139 = vmax.xlane.f32.xlu0 %v3098
        %v3140 = vpop.xlane.xlu0 %3139
        %3141 = vmax.xlane.f32.xlu0 %v3103
        %v3142 = vpop.xlane.xlu0 %3141
        %3143 = vmax.xlane.f32.xlu0 %v3106
        %v3144 = vpop.xlane.xlu0 %3143
        %3145 = vmax.xlane.f32.xlu0 %v3111
        %v3146 = vpop.xlane.xlu0 %3145
        %3147 = vmax.xlane.f32.xlu0 %v3114
        %v3148 = vpop.xlane.xlu0 %3147
        %v3149 = vsub.f32 %v3055, %v3118
        %v3150 = vsub.f32 %v3058, %v3120
        %v3151 = vsub.f32 %v3063, %v3122
        %v3152 = vsub.f32 %v3066, %v3124
        %v3153 = vsub.f32 %v3071, %v3126
        %v3154 = vsub.f32 %v3074, %v3128
        %v3155 = vsub.f32 %v3079, %v3130
        %v3156 = vsub.f32 %v3082, %v3132
        %v3157 = vsub.f32 %v3087, %v3134
        %v3158 = vsub.f32 %v3090, %v3136
        %v3159 = vsub.f32 %v3095, %v3138
        %v3160 = vsub.f32 %v3098, %v3140
        %v3161 = vsub.f32 %v3103, %v3142
        %v3162 = vsub.f32 %v3106, %v3144
        %v3163 = vsub.f32 %v3111, %v3146
        %v3164 = vsub.f32 %v3114, %v3148
        %v3165 = vmul.f32 %v3149, 1.442695
        %v3166 = vpow.pop %v3165
        %v3167 = vmul.f32 %v3150, 1.442695
        %v3168 = vpow.pop %v3167
        %v3169 = vmul.f32 %v3151, 1.442695
        %v3170 = vpow.pop %v3169
        %v3171 = vmul.f32 %v3152, 1.442695
        %v3172 = vpow.pop %v3171
        %v3173 = vmul.f32 %v3153, 1.442695
        %v3174 = vpow.pop %v3173
        %v3175 = vmul.f32 %v3154, 1.442695
        %v3176 = vpow.pop %v3175
        %v3177 = vmul.f32 %v3155, 1.442695
        %v3178 = vpow.pop %v3177
        %v3179 = vmul.f32 %v3156, 1.442695
        %v3180 = vpow.pop %v3179
        %v3181 = vmul.f32 %v3157, 1.442695
        %v3182 = vpow.pop %v3181
        %v3183 = vmul.f32 %v3158, 1.442695
        %v3184 = vpow.pop %v3183
        %v3185 = vmul.f32 %v3159, 1.442695
        %v3186 = vpow.pop %v3185
        %v3187 = vmul.f32 %v3160, 1.442695
        %v3188 = vpow.pop %v3187
        %v3189 = vmul.f32 %v3161, 1.442695
        %v3190 = vpow.pop %v3189
        %v3191 = vmul.f32 %v3162, 1.442695
        %v3192 = vpow.pop %v3191
        %v3193 = vmul.f32 %v3163, 1.442695
        %v3194 = vpow.pop %v3193
        %v3195 = vmul.f32 %v3164, 1.442695
        %v3196 = vpow.pop %v3195
        %3197 = vadd.xlane.f32.xlu0 %v3166
        %v3198 = vpop.xlane.xlu0 %3197
        %3199 = vadd.xlane.f32.xlu0 %v3168
        %v3200 = vpop.xlane.xlu0 %3199
        %3201 = vadd.xlane.f32.xlu0 %v3170
        %v3202 = vpop.xlane.xlu0 %3201
        %3203 = vadd.xlane.f32.xlu0 %v3172
        %v3204 = vpop.xlane.xlu0 %3203
        %3205 = vadd.xlane.f32.xlu0 %v3174
        %v3206 = vpop.xlane.xlu0 %3205
        %3207 = vadd.xlane.f32.xlu0 %v3176
        %v3208 = vpop.xlane.xlu0 %3207
        %3209 = vadd.xlane.f32.xlu0 %v3178
        %v3210 = vpop.xlane.xlu0 %3209
        %3211 = vadd.xlane.f32.xlu0 %v3180
        %v3212 = vpop.xlane.xlu0 %3211
        %3213 = vadd.xlane.f32.xlu0 %v3182
        %v3214 = vpop.xlane.xlu0 %3213
        %3215 = vadd.xlane.f32.xlu0 %v3184
        %v3216 = vpop.xlane.xlu0 %3215
        %3217 = vadd.xlane.f32.xlu0 %v3186
        %v3218 = vpop.xlane.xlu0 %3217
        %3219 = vadd.xlane.f32.xlu0 %v3188
        %v3220 = vpop.xlane.xlu0 %3219
        %3221 = vadd.xlane.f32.xlu0 %v3190
        %v3222 = vpop.xlane.xlu0 %3221
        %3223 = vadd.xlane.f32.xlu0 %v3192
        %v3224 = vpop.xlane.xlu0 %3223
        %3225 = vadd.xlane.f32.xlu0 %v3194
        %v3226 = vpop.xlane.xlu0 %3225
        %3227 = vadd.xlane.f32.xlu0 %v3196
        %v3228 = vpop.xlane.xlu0 %3227
        %v3229 = vrcp.pop %v3198
        %v3230 = vrcp.pop %v3200
        %v3231 = vrcp.pop %v3202
        %v3232 = vrcp.pop %v3204
        %v3233 = vrcp.pop %v3206
        %v3234 = vrcp.pop %v3208
        %v3235 = vrcp.pop %v3210
        %v3236 = vrcp.pop %v3212
        %v3237 = vrcp.pop %v3214
        %v3238 = vrcp.pop %v3216
        %v3239 = vrcp.pop %v3218
        %v3240 = vrcp.pop %v3220
        %v3241 = vrcp.pop %v3222
        %v3242 = vrcp.pop %v3224
        %v3243 = vrcp.pop %v3226
        %v3244 = vrcp.pop %v3228
        %v3245 = vmul.f32 %v3166, %v3229
        %v3246 = vmul.f32 %v3168, %v3230
        %v3247 = vmul.f32 %v3170, %v3231
        %v3248 = vmul.f32 %v3172, %v3232
        %v3249 = vmul.f32 %v3174, %v3233
        %v3250 = vmul.f32 %v3176, %v3234
        %v3251 = vmul.f32 %v3178, %v3235
        %v3252 = vmul.f32 %v3180, %v3236
        %v3253 = vmul.f32 %v3182, %v3237
        %v3254 = vmul.f32 %v3184, %v3238
        %v3255 = vmul.f32 %v3186, %v3239
        %v3256 = vmul.f32 %v3188, %v3240
        %v3257 = vmul.f32 %v3190, %v3241
        %v3258 = vmul.f32 %v3192, %v3242
        %v3259 = vmul.f32 %v3194, %v3243
        %v3260 = vmul.f32 %v3196, %v3244
        %v3261 = vpack.c.bf16 %v3246, %v3245
        %v3262 = vpack.c.bf16 %v3248, %v3247
        %v3263 = vpack.c.bf16 %v3250, %v3249
        %v3264 = vpack.c.bf16 %v3252, %v3251
        %v3265 = vpack.c.bf16 %v3254, %v3253
        %v3266 = vpack.c.bf16 %v3256, %v3255
        %v3267 = vpack.c.bf16 %v3258, %v3257
        %v3268 = vpack.c.bf16 %v3260, %v3259
        %3269 = vmatprep.subr.bf16.mxu0 0
        %3270 = vmatpush1.bf16.msra.mxu0 %v1686
        %3271 = vmatprep.subr.bf16.mxu0 0
        %3272 = vmatpush1.bf16.msra.mxu0 %v1688
        %3273 = vmatprep.subr.bf16.mxu0 0
        %3274 = vmatpush1.bf16.msra.mxu0 %v1690
        %3275 = vmatprep.subr.bf16.mxu0 0
        %3276 = vmatpush1.bf16.msra.mxu0 %v1692
        %3277 = vmatprep.subr.bf16.mxu0 0
        %3278 = vmatpush1.bf16.msra.mxu0 %v1694
        %3279 = vmatprep.subr.bf16.mxu0 0
        %3280 = vmatpush1.bf16.msra.mxu0 %v1696
        %3281 = vmatprep.subr.bf16.mxu0 0
        %3282 = vmatpush1.bf16.msra.mxu0 %v1698
        %3283 = vmatprep.subr.bf16.mxu0 0
        %3284 = vmatpush1.bf16.msra.mxu0 %v1700
        %3285 = vmatprep.subr.bf16.mxu0 0
        %3286 = vmatpush1.bf16.msra.mxu0 0
        %3287 = vmatprep.subr.bf16.mxu0 0
        %3288 = vmatpush1.bf16.msra.mxu0 0
        %3289 = vmatprep.subr.bf16.mxu0 0
        %3290 = vmatpush1.bf16.msra.mxu0 0
        %3291 = vmatprep.subr.bf16.mxu0 0
        %3292 = vmatpush1.bf16.msra.mxu0 0
        %3293 = vmatprep.subr.bf16.mxu0 0
        %3294 = vmatpush1.bf16.msra.mxu0 0
        %3295 = vmatprep.subr.bf16.mxu0 0
        %3296 = vmatpush1.bf16.msra.mxu0 0
        %3297 = vmatprep.subr.bf16.mxu0 0
        %3298 = vmatpush1.bf16.msra.mxu0 0
        %3299 = vmatprep.subr.bf16.mxu0 0
        %3300 = vmatpush1.bf16.msra.mxu0 0
        %3301 = vmatprep.mubr.bf16.mxu0 0
        %3302 = vmatmul.mubr.bf16.gmra.mrb[0].mxu0 %v3261
        %v3303 = vpop.f32.mrb[0].mxu0
        %v3304 = vadd.f32 0.0, %v3303
        %v3305 = vpop.f32.mrb[0].mxu0
        %v3306 = vpop.f32.mrb[0].mxu0
        %v3307 = vadd.f32 0.0, %v3306
        %v3308 = vpop.f32.mrb[0].mxu0
        %3309 = vmatprep.mubr.bf16.mxu0 0
        %3310 = vmatmul.mubr.bf16.gmra.mrb[0].mxu0 %v3262
        %v3311 = vpop.f32.mrb[0].mxu0
        %v3312 = vadd.f32 0.0, %v3311
        %v3313 = vpop.f32.mrb[0].mxu0
        %v3314 = vpop.f32.mrb[0].mxu0
        %v3315 = vadd.f32 0.0, %v3314
        %v3316 = vpop.f32.mrb[0].mxu0
        %3317 = vmatprep.mubr.bf16.mxu0 0
        %3318 = vmatmul.mubr.bf16.gmra.mrb[0].mxu0 %v3263
        %v3319 = vpop.f32.mrb[0].mxu0
        %v3320 = vadd.f32 0.0, %v3319
        %v3321 = vpop.f32.mrb[0].mxu0
        %v3322 = vpop.f32.mrb[0].mxu0
        %v3323 = vadd.f32 0.0, %v3322
        %v3324 = vpop.f32.mrb[0].mxu0
        %3325 = vmatprep.mubr.bf16.mxu0 0
        %3326 = vmatmul.mubr.bf16.gmra.mrb[0].mxu0 %v3264
        %v3327 = vpop.f32.mrb[0].mxu0
        %v3328 = vadd.f32 0.0, %v3327
        %v3329 = vpop.f32.mrb[0].mxu0
        %v3330 = vpop.f32.mrb[0].mxu0
        %v3331 = vadd.f32 0.0, %v3330
        %v3332 = vpop.f32.mrb[0].mxu0
        %3333 = vmatprep.mubr.bf16.mxu0 0
        %3334 = vmatmul.mubr.bf16.gmra.mrb[0].mxu0 %v3265
        %v3335 = vpop.f32.mrb[0].mxu0
        %v3336 = vadd.f32 0.0, %v3335
        %v3337 = vpop.f32.mrb[0].mxu0
        %v3338 = vpop.f32.mrb[0].mxu0
        %v3339 = vadd.f32 0.0, %v3338
        %v3340 = vpop.f32.mrb[0].mxu0
        %3341 = vmatprep.mubr.bf16.mxu0 0
        %3342 = vmatmul.mubr.bf16.gmra.mrb[0].mxu0 %v3266
        %v3343 = vpop.f32.mrb[0].mxu0
        %v3344 = vadd.f32 0.0, %v3343
        %v3345 = vpop.f32.mrb[0].mxu0
        %v3346 = vpop.f32.mrb[0].mxu0
        %v3347 = vadd.f32 0.0, %v3346
        %v3348 = vpop.f32.mrb[0].mxu0
        %3349 = vmatprep.mubr.bf16.mxu0 0
        %3350 = vmatmul.mubr.bf16.gmra.mrb[0].mxu0 %v3267
        %v3351 = vpop.f32.mrb[0].mxu0
        %v3352 = vadd.f32 0.0, %v3351
        %v3353 = vpop.f32.mrb[0].mxu0
        %v3354 = vpop.f32.mrb[0].mxu0
        %v3355 = vadd.f32 0.0, %v3354
        %v3356 = vpop.f32.mrb[0].mxu0
        %3357 = vmatprep.mubr.bf16.mxu0 0
        %3358 = vmatmul.mubr.bf16.gmra.mrb[0].mxu0 %v3268
        %v3359 = vpop.f32.mrb[0].mxu0
        %v3360 = vadd.f32 0.0, %v3359
        %v3361 = vpop.f32.mrb[0].mxu0
        %v3362 = vpop.f32.mrb[0].mxu0
        %v3363 = vadd.f32 0.0, %v3362
        %v3364 = vpop.f32.mrb[0].mxu0
        %3365 = vdwg.mxu0
        %v3366 = vpack.c.bf16 %v3307, %v3304
        %v3367 = vpack.c.bf16 %v3315, %v3312
        %v3368 = vpack.c.bf16 %v3323, %v3320
        %v3369 = vpack.c.bf16 %v3331, %v3328
        %v3370 = vpack.c.bf16 %v3339, %v3336
        %v3371 = vpack.c.bf16 %v3347, %v3344
        %v3372 = vpack.c.bf16 %v3355, %v3352
        %v3373 = vpack.c.bf16 %v3363, %v3360
        %v3382 = vunpack.c.l.b16 %v1717
        %v3383 = vunpack.c.h.b16 %v1717
        %v3384 = vunpack.c.l.b16 %v1718
        %v3385 = vunpack.c.h.b16 %v1718
        %v3386 = vunpack.c.l.b16 %v1719
        %v3387 = vunpack.c.h.b16 %v1719
        %v3388 = vunpack.c.l.b16 %v1720
        %v3389 = vunpack.c.h.b16 %v1720
        %v3390 = vunpack.c.l.b16 %v1721
        %v3391 = vunpack.c.h.b16 %v1721
        %v3392 = vunpack.c.l.b16 %v1722
        %v3393 = vunpack.c.h.b16 %v1722
        %v3394 = vunpack.c.l.b16 %v1723
        %v3395 = vunpack.c.h.b16 %v1723
        %v3396 = vunpack.c.l.b16 %v1724
        %v3397 = vunpack.c.h.b16 %v1724
        %v3398 = vpack.c.b16 %v3384, %v3382
        %v3399 = vpack.c.b16 %v3385, %v3383
        %v3400 = vpack.c.b16 %v3388, %v3386
        %v3401 = vpack.c.b16 %v3389, %v3387
        %v3402 = vpack.c.b16 %v3392, %v3390
        %v3403 = vpack.c.b16 %v3393, %v3391
        %v3404 = vpack.c.b16 %v3396, %v3394
        %v3405 = vpack.c.b16 %v3397, %v3395
        %v3415 = vsel %vm1733, %v3366, 0
        %v3418 = vsel %vm1733, %v3367, 0
        %v3421 = vsel %vm1733, %v3368, 0
        %v3424 = vsel %vm1733, %v3369, 0
        %v3427 = vsel %vm1733, %v3370, 0
        %v3430 = vsel %vm1733, %v3371, 0
        %v3433 = vsel %vm1733, %v3372, 0
        %v3436 = vsel %vm1733, %v3373, 0
        %3438 = vmatprep.subr.bf16.mxu0 %v3399
        %3439 = vmatpush1.bf16.msra.mxu0 %v3398
        %3440 = vmatprep.subr.bf16.mxu0 %v3401
        %3441 = vmatpush1.bf16.msra.mxu0 %v3400
        %3442 = vmatprep.subr.bf16.mxu0 %v3403
        %3443 = vmatpush1.bf16.msra.mxu0 %v3402
        %3444 = vmatprep.subr.bf16.mxu0 %v3405
        %3445 = vmatpush1.bf16.msra.mxu0 %v3404
        %3446 = vmatprep.subr.bf16.mxu0 0
        %3447 = vmatpush1.bf16.msra.mxu0 0
        %3448 = vmatprep.subr.bf16.mxu0 0
        %3449 = vmatpush1.bf16.msra.mxu0 0
        %3450 = vmatprep.subr.bf16.mxu0 0
        %3451 = vmatpush1.bf16.msra.mxu0 0
        %3452 = vmatprep.subr.bf16.mxu0 0
        %3453 = vmatpush1.bf16.msra.mxu0 0
        %3454 = vmatprep.subr.bf16.mxu0 0
        %3455 = vmatpush1.bf16.msra.mxu0 0
        %3456 = vmatprep.subr.bf16.mxu0 0
        %3457 = vmatpush1.bf16.msra.mxu0 0
        %3458 = vmatprep.subr.bf16.mxu0 0
        %3459 = vmatpush1.bf16.msra.mxu0 0
        %3460 = vmatprep.subr.bf16.mxu0 0
        %3461 = vmatpush1.bf16.msra.mxu0 0
        %3462 = vmatprep.subr.bf16.mxu0 0
        %3463 = vmatpush1.bf16.msra.mxu0 0
        %3464 = vmatprep.subr.bf16.mxu0 0
        %3465 = vmatpush1.bf16.msra.mxu0 0
        %3466 = vmatprep.subr.bf16.mxu0 0
        %3467 = vmatpush1.bf16.msra.mxu0 0
        %3468 = vmatprep.subr.bf16.mxu0 0
        %3469 = vmatpush1.bf16.msra.mxu0 0
        %3470 = vmatprep.mubr.bf16.mxu0 0
        %3471 = vmatmul.mubr.bf16.gmra.mrb[0].mxu0 %v3415
        %v3472 = vpop.f32.mrb[0].mxu0
        %v3473 = vadd.f32 0.0, %v3472
        %v3474 = vpop.f32.mrb[0].mxu0
        %v3475 = vadd.f32 0.0, %v3474
        %v3476 = vpop.f32.mrb[0].mxu0
        %v3477 = vadd.f32 0.0, %v3476
        %v3478 = vpop.f32.mrb[0].mxu0
        %v3479 = vadd.f32 0.0, %v3478
        %3480 = vmatprep.mubr.bf16.mxu0 0
        %3481 = vmatmul.mubr.bf16.gmra.mrb[0].mxu0 %v3418
        %v3482 = vpop.f32.mrb[0].mxu0
        %v3483 = vadd.f32 0.0, %v3482
        %v3484 = vpop.f32.mrb[0].mxu0
        %v3485 = vadd.f32 0.0, %v3484
        %v3486 = vpop.f32.mrb[0].mxu0
        %v3487 = vadd.f32 0.0, %v3486
        %v3488 = vpop.f32.mrb[0].mxu0
        %v3489 = vadd.f32 0.0, %v3488
        %3490 = vmatprep.mubr.bf16.mxu0 0
        %3491 = vmatmul.mubr.bf16.gmra.mrb[0].mxu0 %v3421
        %v3492 = vpop.f32.mrb[0].mxu0
        %v3493 = vadd.f32 0.0, %v3492
        %v3494 = vpop.f32.mrb[0].mxu0
        %v3495 = vadd.f32 0.0, %v3494
        %v3496 = vpop.f32.mrb[0].mxu0
        %v3497 = vadd.f32 0.0, %v3496
        %v3498 = vpop.f32.mrb[0].mxu0
        %v3499 = vadd.f32 0.0, %v3498
        %3500 = vmatprep.mubr.bf16.mxu0 0
        %3501 = vmatmul.mubr.bf16.gmra.mrb[0].mxu0 %v3424
        %v3502 = vpop.f32.mrb[0].mxu0
        %v3503 = vadd.f32 0.0, %v3502
        %v3504 = vpop.f32.mrb[0].mxu0
        %v3505 = vadd.f32 0.0, %v3504
        %v3506 = vpop.f32.mrb[0].mxu0
        %v3507 = vadd.f32 0.0, %v3506
        %v3508 = vpop.f32.mrb[0].mxu0
        %v3509 = vadd.f32 0.0, %v3508
        %3510 = vmatprep.mubr.bf16.mxu0 0
        %3511 = vmatmul.mubr.bf16.gmra.mrb[0].mxu0 %v3427
        %v3512 = vpop.f32.mrb[0].mxu0
        %v3513 = vadd.f32 0.0, %v3512
        %v3514 = vpop.f32.mrb[0].mxu0
        %v3515 = vadd.f32 0.0, %v3514
        %v3516 = vpop.f32.mrb[0].mxu0
        %v3517 = vadd.f32 0.0, %v3516
        %v3518 = vpop.f32.mrb[0].mxu0
        %v3519 = vadd.f32 0.0, %v3518
        %3520 = vmatprep.mubr.bf16.mxu0 0
        %3521 = vmatmul.mubr.bf16.gmra.mrb[0].mxu0 %v3430
        %v3522 = vpop.f32.mrb[0].mxu0
        %v3523 = vadd.f32 0.0, %v3522
        %v3524 = vpop.f32.mrb[0].mxu0
        %v3525 = vadd.f32 0.0, %v3524
        %v3526 = vpop.f32.mrb[0].mxu0
        %v3527 = vadd.f32 0.0, %v3526
        %v3528 = vpop.f32.mrb[0].mxu0
        %v3529 = vadd.f32 0.0, %v3528
        %3530 = vmatprep.mubr.bf16.mxu0 0
        %3531 = vmatmul.mubr.bf16.gmra.mrb[0].mxu0 %v3433
        %v3532 = vpop.f32.mrb[0].mxu0
        %v3533 = vadd.f32 0.0, %v3532
        %v3534 = vpop.f32.mrb[0].mxu0
        %v3535 = vadd.f32 0.0, %v3534
        %v3536 = vpop.f32.mrb[0].mxu0
        %v3537 = vadd.f32 0.0, %v3536
        %v3538 = vpop.f32.mrb[0].mxu0
        %v3539 = vadd.f32 0.0, %v3538
        %3540 = vmatprep.mubr.bf16.mxu0 0
        %3541 = vmatmul.mubr.bf16.gmra.mrb[0].mxu0 %v3436
        %v3542 = vpop.f32.mrb[0].mxu0
        %v3543 = vadd.f32 0.0, %v3542
        %v3544 = vpop.f32.mrb[0].mxu0
        %v3545 = vadd.f32 0.0, %v3544
        %v3546 = vpop.f32.mrb[0].mxu0
        %v3547 = vadd.f32 0.0, %v3546
        %v3548 = vpop.f32.mrb[0].mxu0
        %v3549 = vadd.f32 0.0, %v3548
        %3550 = vdwg.mxu0
        %v3551 = vadd.f32 %v2894, %v3473
        %v3552 = vadd.f32 %v2896, %v3475
        %v3553 = vadd.f32 %v2898, %v3477
        %v3554 = vadd.f32 %v2900, %v3479
        %v3555 = vadd.f32 %v2904, %v3483
        %v3556 = vadd.f32 %v2906, %v3485
        %v3557 = vadd.f32 %v2908, %v3487
        %v3558 = vadd.f32 %v2910, %v3489
        %v3559 = vadd.f32 %v2914, %v3493
        %v3560 = vadd.f32 %v2916, %v3495
        %v3561 = vadd.f32 %v2918, %v3497
        %v3562 = vadd.f32 %v2920, %v3499
        %v3563 = vadd.f32 %v2924, %v3503
        %v3564 = vadd.f32 %v2926, %v3505
        %v3565 = vadd.f32 %v2928, %v3507
        %v3566 = vadd.f32 %v2930, %v3509
        %v3567 = vadd.f32 %v2934, %v3513
        %v3568 = vadd.f32 %v2936, %v3515
        %v3569 = vadd.f32 %v2938, %v3517
        %v3570 = vadd.f32 %v2940, %v3519
        %v3571 = vadd.f32 %v2944, %v3523
        %v3572 = vadd.f32 %v2946, %v3525
        %v3573 = vadd.f32 %v2948, %v3527
        %v3574 = vadd.f32 %v2950, %v3529
        %v3575 = vadd.f32 %v2954, %v3533
        %v3576 = vadd.f32 %v2956, %v3535
        %v3577 = vadd.f32 %v2958, %v3537
        %v3578 = vadd.f32 %v2960, %v3539
        %v3579 = vadd.f32 %v2964, %v3543
        %v3580 = vadd.f32 %v2966, %v3545
        %v3581 = vadd.f32 %v2968, %v3547
        %v3582 = vadd.f32 %v2970, %v3549
        %3591 = vrot.lane.b32.xlu0 %v1653, 64
        %v3592 = vpop.permute.xlu0 %3591
        %3593 = vrot.lane.b32.xlu0 %v1655, 64
        %v3594 = vpop.permute.xlu0 %3593
        %3595 = vrot.lane.b32.xlu0 %v1657, 64
        %v3596 = vpop.permute.xlu0 %3595
        %3597 = vrot.lane.b32.xlu0 %v1659, 64
        %v3598 = vpop.permute.xlu0 %3597
        %3599 = vrot.lane.b32.xlu0 %v1661, 64
        %v3600 = vpop.permute.xlu0 %3599
        %3601 = vrot.lane.b32.xlu0 %v1663, 64
        %v3602 = vpop.permute.xlu0 %3601
        %3603 = vrot.lane.b32.xlu0 %v1665, 64
        %v3604 = vpop.permute.xlu0 %3603
        %3605 = vrot.lane.b32.xlu0 %v1667, 64
        %v3606 = vpop.permute.xlu0 %3605
        %3615 = vrot.lane.b32.xlu0 %v1669, 64
        %v3616 = vpop.permute.xlu0 %3615
        %3617 = vrot.lane.b32.xlu0 %v1671, 64
        %v3618 = vpop.permute.xlu0 %3617
        %3619 = vrot.lane.b32.xlu0 %v1673, 64
        %v3620 = vpop.permute.xlu0 %3619
        %3621 = vrot.lane.b32.xlu0 %v1675, 64
        %v3622 = vpop.permute.xlu0 %3621
        %3623 = vrot.lane.b32.xlu0 %v1677, 64
        %v3624 = vpop.permute.xlu0 %3623
        %3625 = vrot.lane.b32.xlu0 %v1679, 64
        %v3626 = vpop.permute.xlu0 %3625
        %3627 = vrot.lane.b32.xlu0 %v1681, 64
        %v3628 = vpop.permute.xlu0 %3627
        %3629 = vrot.lane.b32.xlu0 %v1683, 64
        %v3630 = vpop.permute.xlu0 %3629
        %v3632 = vsel %vm1733, %v3592, 0
        %v3635 = vsel %vm1733, %v3594, 0
        %v3638 = vsel %vm1733, %v3596, 0
        %v3641 = vsel %vm1733, %v3598, 0
        %v3644 = vsel %vm1733, %v3600, 0
        %v3647 = vsel %vm1733, %v3602, 0
        %v3650 = vsel %vm1733, %v3604, 0
        %v3653 = vsel %vm1733, %v3606, 0
        %v3656 = vsel %vm1733, %v3616, 0
        %v3659 = vsel %vm1733, %v3618, 0
        %v3662 = vsel %vm1733, %v3620, 0
        %v3665 = vsel %vm1733, %v3622, 0
        %v3668 = vsel %vm1733, %v3624, 0
        %v3671 = vsel %vm1733, %v3626, 0
        %v3674 = vsel %vm1733, %v3628, 0
        %v3677 = vsel %vm1733, %v3630, 0
        %3679 = vmatprep.subr.bf16.mxu0 0
        %3680 = vmatpush1.bf16.xpose.msra.mxu0 %v3656
        %3681 = vmatprep.subr.bf16.mxu0 0
        %3682 = vmatpush1.bf16.xpose.msra.mxu0 %v3659
        %3683 = vmatprep.subr.bf16.mxu0 0
        %3684 = vmatpush1.bf16.xpose.msra.mxu0 %v3662
        %3685 = vmatprep.subr.bf16.mxu0 0
        %3686 = vmatpush1.bf16.xpose.msra.mxu0 %v3665
        %3687 = vmatprep.subr.bf16.mxu0 0
        %3688 = vmatpush1.bf16.xpose.msra.mxu0 %v3668
        %3689 = vmatprep.subr.bf16.mxu0 0
        %3690 = vmatpush1.bf16.xpose.msra.mxu0 %v3671
        %3691 = vmatprep.subr.bf16.mxu0 0
        %3692 = vmatpush1.bf16.xpose.msra.mxu0 %v3674
        %3693 = vmatprep.subr.bf16.mxu0 0
        %3694 = vmatpush1.bf16.xpose.msra.mxu0 %v3677
        %3695 = vmatprep.subr.bf16.mxu0 0
        %3696 = vmatpush1.bf16.xpose.msra.mxu0 0
        %3697 = vmatprep.subr.bf16.mxu0 0
        %3698 = vmatpush1.bf16.xpose.msra.mxu0 0
        %3699 = vmatprep.subr.bf16.mxu0 0
        %3700 = vmatpush1.bf16.xpose.msra.mxu0 0
        %3701 = vmatprep.subr.bf16.mxu0 0
        %3702 = vmatpush1.bf16.xpose.msra.mxu0 0
        %3703 = vmatprep.subr.bf16.mxu0 0
        %3704 = vmatpush1.bf16.xpose.msra.mxu0 0
        %3705 = vmatprep.subr.bf16.mxu0 0
        %3706 = vmatpush1.bf16.xpose.msra.mxu0 0
        %3707 = vmatprep.subr.bf16.mxu0 0
        %3708 = vmatpush1.bf16.xpose.msra.mxu0 0
        %3709 = vmatprep.subr.bf16.mxu0 0
        %3710 = vmatpush1.bf16.xpose.msra.mxu0 0
        %3711 = vmatprep.mubr.bf16.mxu0 0
        %3712 = vmatmul.mubr.bf16.gmra.mrb[0].mxu0 %v3632
        %v3713 = vpop.f32.mrb[0].mxu0
        %v3714 = vadd.f32 0.0, %v3713
        %v3715 = vpop.f32.mrb[0].mxu0
        %v3716 = vpop.f32.mrb[0].mxu0
        %v3717 = vadd.f32 0.0, %v3716
        %v3718 = vpop.f32.mrb[0].mxu0
        %3719 = vmatprep.mubr.bf16.mxu0 0
        %3720 = vmatmul.mubr.bf16.gmra.mrb[0].mxu0 %v3635
        %v3721 = vpop.f32.mrb[0].mxu0
        %v3722 = vadd.f32 0.0, %v3721
        %v3723 = vpop.f32.mrb[0].mxu0
        %v3724 = vpop.f32.mrb[0].mxu0
        %v3725 = vadd.f32 0.0, %v3724
        %v3726 = vpop.f32.mrb[0].mxu0
        %3727 = vmatprep.mubr.bf16.mxu0 0
        %3728 = vmatmul.mubr.bf16.gmra.mrb[0].mxu0 %v3638
        %v3729 = vpop.f32.mrb[0].mxu0
        %v3730 = vadd.f32 0.0, %v3729
        %v3731 = vpop.f32.mrb[0].mxu0
        %v3732 = vpop.f32.mrb[0].mxu0
        %v3733 = vadd.f32 0.0, %v3732
        %v3734 = vpop.f32.mrb[0].mxu0
        %3735 = vmatprep.mubr.bf16.mxu0 0
        %3736 = vmatmul.mubr.bf16.gmra.mrb[0].mxu0 %v3641
        %v3737 = vpop.f32.mrb[0].mxu0
        %v3738 = vadd.f32 0.0, %v3737
        %v3739 = vpop.f32.mrb[0].mxu0
        %v3740 = vpop.f32.mrb[0].mxu0
        %v3741 = vadd.f32 0.0, %v3740
        %v3742 = vpop.f32.mrb[0].mxu0
        %3743 = vmatprep.mubr.bf16.mxu0 0
        %3744 = vmatmul.mubr.bf16.gmra.mrb[0].mxu0 %v3644
        %v3745 = vpop.f32.mrb[0].mxu0
        %v3746 = vadd.f32 0.0, %v3745
        %v3747 = vpop.f32.mrb[0].mxu0
        %v3748 = vpop.f32.mrb[0].mxu0
        %v3749 = vadd.f32 0.0, %v3748
        %v3750 = vpop.f32.mrb[0].mxu0
        %3751 = vmatprep.mubr.bf16.mxu0 0
        %3752 = vmatmul.mubr.bf16.gmra.mrb[0].mxu0 %v3647
        %v3753 = vpop.f32.mrb[0].mxu0
        %v3754 = vadd.f32 0.0, %v3753
        %v3755 = vpop.f32.mrb[0].mxu0
        %v3756 = vpop.f32.mrb[0].mxu0
        %v3757 = vadd.f32 0.0, %v3756
        %v3758 = vpop.f32.mrb[0].mxu0
        %3759 = vmatprep.mubr.bf16.mxu0 0
        %3760 = vmatmul.mubr.bf16.gmra.mrb[0].mxu0 %v3650
        %v3761 = vpop.f32.mrb[0].mxu0
        %v3762 = vadd.f32 0.0, %v3761
        %v3763 = vpop.f32.mrb[0].mxu0
        %v3764 = vpop.f32.mrb[0].mxu0
        %v3765 = vadd.f32 0.0, %v3764
        %v3766 = vpop.f32.mrb[0].mxu0
        %3767 = vmatprep.mubr.bf16.mxu0 0
        %3768 = vmatmul.mubr.bf16.gmra.mrb[0].mxu0 %v3653
        %v3769 = vpop.f32.mrb[0].mxu0
        %v3770 = vadd.f32 0.0, %v3769
        %v3771 = vpop.f32.mrb[0].mxu0
        %v3772 = vpop.f32.mrb[0].mxu0
        %v3773 = vadd.f32 0.0, %v3772
        %v3774 = vpop.f32.mrb[0].mxu0
        %3775 = vdwg.mxu0
        %3776 = vmax.xlane.f32.xlu0 %v3714
        %v3777 = vpop.xlane.xlu0 %3776
        %3778 = vmax.xlane.f32.xlu0 %v3717
        %v3779 = vpop.xlane.xlu0 %3778
        %3780 = vmax.xlane.f32.xlu0 %v3722
        %v3781 = vpop.xlane.xlu0 %3780
        %3782 = vmax.xlane.f32.xlu0 %v3725
        %v3783 = vpop.xlane.xlu0 %3782
        %3784 = vmax.xlane.f32.xlu0 %v3730
        %v3785 = vpop.xlane.xlu0 %3784
        %3786 = vmax.xlane.f32.xlu0 %v3733
        %v3787 = vpop.xlane.xlu0 %3786
        %3788 = vmax.xlane.f32.xlu0 %v3738
        %v3789 = vpop.xlane.xlu0 %3788
        %3790 = vmax.xlane.f32.xlu0 %v3741
        %v3791 = vpop.xlane.xlu0 %3790
        %3792 = vmax.xlane.f32.xlu0 %v3746
        %v3793 = vpop.xlane.xlu0 %3792
        %3794 = vmax.xlane.f32.xlu0 %v3749
        %v3795 = vpop.xlane.xlu0 %3794
        %3796 = vmax.xlane.f32.xlu0 %v3754
        %v3797 = vpop.xlane.xlu0 %3796
        %3798 = vmax.xlane.f32.xlu0 %v3757
        %v3799 = vpop.xlane.xlu0 %3798
        %3800 = vmax.xlane.f32.xlu0 %v3762
        %v3801 = vpop.xlane.xlu0 %3800
        %3802 = vmax.xlane.f32.xlu0 %v3765
        %v3803 = vpop.xlane.xlu0 %3802
        %3804 = vmax.xlane.f32.xlu0 %v3770
        %v3805 = vpop.xlane.xlu0 %3804
        %3806 = vmax.xlane.f32.xlu0 %v3773
        %v3807 = vpop.xlane.xlu0 %3806
        %v3808 = vsub.f32 %v3714, %v3777
        %v3809 = vsub.f32 %v3717, %v3779
        %v3810 = vsub.f32 %v3722, %v3781
        %v3811 = vsub.f32 %v3725, %v3783
        %v3812 = vsub.f32 %v3730, %v3785
        %v3813 = vsub.f32 %v3733, %v3787
        %v3814 = vsub.f32 %v3738, %v3789
        %v3815 = vsub.f32 %v3741, %v3791
        %v3816 = vsub.f32 %v3746, %v3793
        %v3817 = vsub.f32 %v3749, %v3795
        %v3818 = vsub.f32 %v3754, %v3797
        %v3819 = vsub.f32 %v3757, %v3799
        %v3820 = vsub.f32 %v3762, %v3801
        %v3821 = vsub.f32 %v3765, %v3803
        %v3822 = vsub.f32 %v3770, %v3805
        %v3823 = vsub.f32 %v3773, %v3807
        %v3824 = vmul.f32 %v3808, 1.442695
        %v3825 = vpow.pop %v3824
        %v3826 = vmul.f32 %v3809, 1.442695
        %v3827 = vpow.pop %v3826
        %v3828 = vmul.f32 %v3810, 1.442695
        %v3829 = vpow.pop %v3828
        %v3830 = vmul.f32 %v3811, 1.442695
        %v3831 = vpow.pop %v3830
        %v3832 = vmul.f32 %v3812, 1.442695
        %v3833 = vpow.pop %v3832
        %v3834 = vmul.f32 %v3813, 1.442695
        %v3835 = vpow.pop %v3834
        %v3836 = vmul.f32 %v3814, 1.442695
        %v3837 = vpow.pop %v3836
        %v3838 = vmul.f32 %v3815, 1.442695
        %v3839 = vpow.pop %v3838
        %v3840 = vmul.f32 %v3816, 1.442695
        %v3841 = vpow.pop %v3840
        %v3842 = vmul.f32 %v3817, 1.442695
        %v3843 = vpow.pop %v3842
        %v3844 = vmul.f32 %v3818, 1.442695
        %v3845 = vpow.pop %v3844
        %v3846 = vmul.f32 %v3819, 1.442695
        %v3847 = vpow.pop %v3846
        %v3848 = vmul.f32 %v3820, 1.442695
        %v3849 = vpow.pop %v3848
        %v3850 = vmul.f32 %v3821, 1.442695
        %v3851 = vpow.pop %v3850
        %v3852 = vmul.f32 %v3822, 1.442695
        %v3853 = vpow.pop %v3852
        %v3854 = vmul.f32 %v3823, 1.442695
        %v3855 = vpow.pop %v3854
        %3856 = vadd.xlane.f32.xlu0 %v3825
        %v3857 = vpop.xlane.xlu0 %3856
        %3858 = vadd.xlane.f32.xlu0 %v3827
        %v3859 = vpop.xlane.xlu0 %3858
        %3860 = vadd.xlane.f32.xlu0 %v3829
        %v3861 = vpop.xlane.xlu0 %3860
        %3862 = vadd.xlane.f32.xlu0 %v3831
        %v3863 = vpop.xlane.xlu0 %3862
        %3864 = vadd.xlane.f32.xlu0 %v3833
        %v3865 = vpop.xlane.xlu0 %3864
        %3866 = vadd.xlane.f32.xlu0 %v3835
        %v3867 = vpop.xlane.xlu0 %3866
        %3868 = vadd.xlane.f32.xlu0 %v3837
        %v3869 = vpop.xlane.xlu0 %3868
        %3870 = vadd.xlane.f32.xlu0 %v3839
        %v3871 = vpop.xlane.xlu0 %3870
        %3872 = vadd.xlane.f32.xlu0 %v3841
        %v3873 = vpop.xlane.xlu0 %3872
        %3874 = vadd.xlane.f32.xlu0 %v3843
        %v3875 = vpop.xlane.xlu0 %3874
        %3876 = vadd.xlane.f32.xlu0 %v3845
        %v3877 = vpop.xlane.xlu0 %3876
        %3878 = vadd.xlane.f32.xlu0 %v3847
        %v3879 = vpop.xlane.xlu0 %3878
        %3880 = vadd.xlane.f32.xlu0 %v3849
        %v3881 = vpop.xlane.xlu0 %3880
        %3882 = vadd.xlane.f32.xlu0 %v3851
        %v3883 = vpop.xlane.xlu0 %3882
        %3884 = vadd.xlane.f32.xlu0 %v3853
        %v3885 = vpop.xlane.xlu0 %3884
        %3886 = vadd.xlane.f32.xlu0 %v3855
        %v3887 = vpop.xlane.xlu0 %3886
        %v3888 = vrcp.pop %v3857
        %v3889 = vrcp.pop %v3859
        %v3890 = vrcp.pop %v3861
        %v3891 = vrcp.pop %v3863
        %v3892 = vrcp.pop %v3865
        %v3893 = vrcp.pop %v3867
        %v3894 = vrcp.pop %v3869
        %v3895 = vrcp.pop %v3871
        %v3896 = vrcp.pop %v3873
        %v3897 = vrcp.pop %v3875
        %v3898 = vrcp.pop %v3877
        %v3899 = vrcp.pop %v3879
        %v3900 = vrcp.pop %v3881
        %v3901 = vrcp.pop %v3883
        %v3902 = vrcp.pop %v3885
        %v3903 = vrcp.pop %v3887
        %v3904 = vmul.f32 %v3825, %v3888
        %v3905 = vmul.f32 %v3827, %v3889
        %v3906 = vmul.f32 %v3829, %v3890
        %v3907 = vmul.f32 %v3831, %v3891
        %v3908 = vmul.f32 %v3833, %v3892
        %v3909 = vmul.f32 %v3835, %v3893
        %v3910 = vmul.f32 %v3837, %v3894
        %v3911 = vmul.f32 %v3839, %v3895
        %v3912 = vmul.f32 %v3841, %v3896
        %v3913 = vmul.f32 %v3843, %v3897
        %v3914 = vmul.f32 %v3845, %v3898
        %v3915 = vmul.f32 %v3847, %v3899
        %v3916 = vmul.f32 %v3849, %v3900
        %v3917 = vmul.f32 %v3851, %v3901
        %v3918 = vmul.f32 %v3853, %v3902
        %v3919 = vmul.f32 %v3855, %v3903
        %v3920 = vpack.c.bf16 %v3905, %v3904
        %v3921 = vpack.c.bf16 %v3907, %v3906
        %v3922 = vpack.c.bf16 %v3909, %v3908
        %v3923 = vpack.c.bf16 %v3911, %v3910
        %v3924 = vpack.c.bf16 %v3913, %v3912
        %v3925 = vpack.c.bf16 %v3915, %v3914
        %v3926 = vpack.c.bf16 %v3917, %v3916
        %v3927 = vpack.c.bf16 %v3919, %v3918
        %3936 = vrot.lane.b32.xlu0 %v1686, 64
        %v3937 = vpop.permute.xlu0 %3936
        %3938 = vrot.lane.b32.xlu0 %v1688, 64
        %v3939 = vpop.permute.xlu0 %3938
        %3940 = vrot.lane.b32.xlu0 %v1690, 64
        %v3941 = vpop.permute.xlu0 %3940
        %3942 = vrot.lane.b32.xlu0 %v1692, 64
        %v3943 = vpop.permute.xlu0 %3942
        %3944 = vrot.lane.b32.xlu0 %v1694, 64
        %v3945 = vpop.permute.xlu0 %3944
        %3946 = vrot.lane.b32.xlu0 %v1696, 64
        %v3947 = vpop.permute.xlu0 %3946
        %3948 = vrot.lane.b32.xlu0 %v1698, 64
        %v3949 = vpop.permute.xlu0 %3948
        %3950 = vrot.lane.b32.xlu0 %v1700, 64
        %v3951 = vpop.permute.xlu0 %3950
        %3960 = vmatprep.subr.bf16.mxu0 0
        %3961 = vmatpush1.bf16.msra.mxu0 %v3937
        %3962 = vmatprep.subr.bf16.mxu0 0
        %3963 = vmatpush1.bf16.msra.mxu0 %v3939
        %3964 = vmatprep.subr.bf16.mxu0 0
        %3965 = vmatpush1.bf16.msra.mxu0 %v3941
        %3966 = vmatprep.subr.bf16.mxu0 0
        %3967 = vmatpush1.bf16.msra.mxu0 %v3943
        %3968 = vmatprep.subr.bf16.mxu0 0
        %3969 = vmatpush1.bf16.msra.mxu0 %v3945
        %3970 = vmatprep.subr.bf16.mxu0 0
        %3971 = vmatpush1.bf16.msra.mxu0 %v3947
        %3972 = vmatprep.subr.bf16.mxu0 0
        %3973 = vmatpush1.bf16.msra.mxu0 %v3949
        %3974 = vmatprep.subr.bf16.mxu0 0
        %3975 = vmatpush1.bf16.msra.mxu0 %v3951
        %3976 = vmatprep.subr.bf16.mxu0 0
        %3977 = vmatpush1.bf16.msra.mxu0 0
        %3978 = vmatprep.subr.bf16.mxu0 0
        %3979 = vmatpush1.bf16.msra.mxu0 0
        %3980 = vmatprep.subr.bf16.mxu0 0
        %3981 = vmatpush1.bf16.msra.mxu0 0
        %3982 = vmatprep.subr.bf16.mxu0 0
        %3983 = vmatpush1.bf16.msra.mxu0 0
        %3984 = vmatprep.subr.bf16.mxu0 0
        %3985 = vmatpush1.bf16.msra.mxu0 0
        %3986 = vmatprep.subr.bf16.mxu0 0
        %3987 = vmatpush1.bf16.msra.mxu0 0
        %3988 = vmatprep.subr.bf16.mxu0 0
        %3989 = vmatpush1.bf16.msra.mxu0 0
        %3990 = vmatprep.subr.bf16.mxu0 0
        %3991 = vmatpush1.bf16.msra.mxu0 0
        %3992 = vmatprep.mubr.bf16.mxu0 0
        %3993 = vmatmul.mubr.bf16.gmra.mrb[0].mxu0 %v3920
        %v3994 = vpop.f32.mrb[0].mxu0
        %v3995 = vadd.f32 0.0, %v3994
        %v3996 = vpop.f32.mrb[0].mxu0
        %v3997 = vpop.f32.mrb[0].mxu0
        %v3998 = vadd.f32 0.0, %v3997
        %v3999 = vpop.f32.mrb[0].mxu0
        %4000 = vmatprep.mubr.bf16.mxu0 0
        %4001 = vmatmul.mubr.bf16.gmra.mrb[0].mxu0 %v3921
        %v4002 = vpop.f32.mrb[0].mxu0
        %v4003 = vadd.f32 0.0, %v4002
        %v4004 = vpop.f32.mrb[0].mxu0
        %v4005 = vpop.f32.mrb[0].mxu0
        %v4006 = vadd.f32 0.0, %v4005
        %v4007 = vpop.f32.mrb[0].mxu0
        %4008 = vmatprep.mubr.bf16.mxu0 0
        %4009 = vmatmul.mubr.bf16.gmra.mrb[0].mxu0 %v3922
        %v4010 = vpop.f32.mrb[0].mxu0
        %v4011 = vadd.f32 0.0, %v4010
        %v4012 = vpop.f32.mrb[0].mxu0
        %v4013 = vpop.f32.mrb[0].mxu0
        %v4014 = vadd.f32 0.0, %v4013
        %v4015 = vpop.f32.mrb[0].mxu0
        %4016 = vmatprep.mubr.bf16.mxu0 0
        %4017 = vmatmul.mubr.bf16.gmra.mrb[0].mxu0 %v3923
        %v4018 = vpop.f32.mrb[0].mxu0
        %v4019 = vadd.f32 0.0, %v4018
        %v4020 = vpop.f32.mrb[0].mxu0
        %v4021 = vpop.f32.mrb[0].mxu0
        %v4022 = vadd.f32 0.0, %v4021
        %v4023 = vpop.f32.mrb[0].mxu0
        %4024 = vmatprep.mubr.bf16.mxu0 0
        %4025 = vmatmul.mubr.bf16.gmra.mrb[0].mxu0 %v3924
        %v4026 = vpop.f32.mrb[0].mxu0
        %v4027 = vadd.f32 0.0, %v4026
        %v4028 = vpop.f32.mrb[0].mxu0
        %v4029 = vpop.f32.mrb[0].mxu0
        %v4030 = vadd.f32 0.0, %v4029
        %v4031 = vpop.f32.mrb[0].mxu0
        %4032 = vmatprep.mubr.bf16.mxu0 0
        %4033 = vmatmul.mubr.bf16.gmra.mrb[0].mxu0 %v3925
        %v4034 = vpop.f32.mrb[0].mxu0
        %v4035 = vadd.f32 0.0, %v4034
        %v4036 = vpop.f32.mrb[0].mxu0
        %v4037 = vpop.f32.mrb[0].mxu0
        %v4038 = vadd.f32 0.0, %v4037
        %v4039 = vpop.f32.mrb[0].mxu0
        %4040 = vmatprep.mubr.bf16.mxu0 0
        %4041 = vmatmul.mubr.bf16.gmra.mrb[0].mxu0 %v3926
        %v4042 = vpop.f32.mrb[0].mxu0
        %v4043 = vadd.f32 0.0, %v4042
        %v4044 = vpop.f32.mrb[0].mxu0
        %v4045 = vpop.f32.mrb[0].mxu0
        %v4046 = vadd.f32 0.0, %v4045
        %v4047 = vpop.f32.mrb[0].mxu0
        %4048 = vmatprep.mubr.bf16.mxu0 0
        %4049 = vmatmul.mubr.bf16.gmra.mrb[0].mxu0 %v3927
        %v4050 = vpop.f32.mrb[0].mxu0
        %v4051 = vadd.f32 0.0, %v4050
        %v4052 = vpop.f32.mrb[0].mxu0
        %v4053 = vpop.f32.mrb[0].mxu0
        %v4054 = vadd.f32 0.0, %v4053
        %v4055 = vpop.f32.mrb[0].mxu0
        %4056 = vdwg.mxu0
        %v4057 = vpack.c.bf16 %v3998, %v3995
        %v4058 = vpack.c.bf16 %v4006, %v4003
        %v4059 = vpack.c.bf16 %v4014, %v4011
        %v4060 = vpack.c.bf16 %v4022, %v4019
        %v4061 = vpack.c.bf16 %v4030, %v4027
        %v4062 = vpack.c.bf16 %v4038, %v4035
        %v4063 = vpack.c.bf16 %v4046, %v4043
        %v4064 = vpack.c.bf16 %v4054, %v4051
        %v4073 = vunpack.c.l.b16 %v1725
        %v4074 = vunpack.c.h.b16 %v1725
        %v4075 = vunpack.c.l.b16 %v1726
        %v4076 = vunpack.c.h.b16 %v1726
        %v4077 = vunpack.c.l.b16 %v1727
        %v4078 = vunpack.c.h.b16 %v1727
        %v4079 = vunpack.c.l.b16 %v1728
        %v4080 = vunpack.c.h.b16 %v1728
        %v4081 = vunpack.c.l.b16 %v1729
        %v4082 = vunpack.c.h.b16 %v1729
        %v4083 = vunpack.c.l.b16 %v1730
        %v4084 = vunpack.c.h.b16 %v1730
        %v4085 = vunpack.c.l.b16 %v1731
        %v4086 = vunpack.c.h.b16 %v1731
        %v4087 = vunpack.c.l.b16 %v1732
        %v4088 = vunpack.c.h.b16 %v1732
        %v4089 = vpack.c.b16 %v4075, %v4073
        %v4090 = vpack.c.b16 %v4076, %v4074
        %v4091 = vpack.c.b16 %v4079, %v4077
        %v4092 = vpack.c.b16 %v4080, %v4078
        %v4093 = vpack.c.b16 %v4083, %v4081
        %v4094 = vpack.c.b16 %v4084, %v4082
        %v4095 = vpack.c.b16 %v4087, %v4085
        %v4096 = vpack.c.b16 %v4088, %v4086
        %v4106 = vsel %vm1733, %v4057, 0
        %v4109 = vsel %vm1733, %v4058, 0
        %v4112 = vsel %vm1733, %v4059, 0
        %v4115 = vsel %vm1733, %v4060, 0
        %v4118 = vsel %vm1733, %v4061, 0
        %v4121 = vsel %vm1733, %v4062, 0
        %v4124 = vsel %vm1733, %v4063, 0
        %v4127 = vsel %vm1733, %v4064, 0
        %4129 = vmatprep.subr.bf16.mxu0 %v4090
        %4130 = vmatpush1.bf16.msra.mxu0 %v4089
        %4131 = vmatprep.subr.bf16.mxu0 %v4092
        %4132 = vmatpush1.bf16.msra.mxu0 %v4091
        %4133 = vmatprep.subr.bf16.mxu0 %v4094
        %4134 = vmatpush1.bf16.msra.mxu0 %v4093
        %4135 = vmatprep.subr.bf16.mxu0 %v4096
        %4136 = vmatpush1.bf16.msra.mxu0 %v4095
        %4137 = vmatprep.subr.bf16.mxu0 0
        %4138 = vmatpush1.bf16.msra.mxu0 0
        %4139 = vmatprep.subr.bf16.mxu0 0
        %4140 = vmatpush1.bf16.msra.mxu0 0
        %4141 = vmatprep.subr.bf16.mxu0 0
        %4142 = vmatpush1.bf16.msra.mxu0 0
        %4143 = vmatprep.subr.bf16.mxu0 0
        %4144 = vmatpush1.bf16.msra.mxu0 0
        %4145 = vmatprep.subr.bf16.mxu0 0
        %4146 = vmatpush1.bf16.msra.mxu0 0
        %4147 = vmatprep.subr.bf16.mxu0 0
        %4148 = vmatpush1.bf16.msra.mxu0 0
        %4149 = vmatprep.subr.bf16.mxu0 0
        %4150 = vmatpush1.bf16.msra.mxu0 0
        %4151 = vmatprep.subr.bf16.mxu0 0
        %4152 = vmatpush1.bf16.msra.mxu0 0
        %4153 = vmatprep.subr.bf16.mxu0 0
        %4154 = vmatpush1.bf16.msra.mxu0 0
        %4155 = vmatprep.subr.bf16.mxu0 0
        %4156 = vmatpush1.bf16.msra.mxu0 0
        %4157 = vmatprep.subr.bf16.mxu0 0
        %4158 = vmatpush1.bf16.msra.mxu0 0
        %4159 = vmatprep.subr.bf16.mxu0 0
        %4160 = vmatpush1.bf16.msra.mxu0 0
        %4161 = vmatprep.mubr.bf16.mxu0 0
        %4162 = vmatmul.mubr.bf16.gmra.mrb[0].mxu0 %v4106
        %v4163 = vpop.f32.mrb[0].mxu0
        %v4164 = vadd.f32 0.0, %v4163
        %v4165 = vpop.f32.mrb[0].mxu0
        %v4166 = vadd.f32 0.0, %v4165
        %v4167 = vpop.f32.mrb[0].mxu0
        %v4168 = vadd.f32 0.0, %v4167
        %v4169 = vpop.f32.mrb[0].mxu0
        %v4170 = vadd.f32 0.0, %v4169
        %4171 = vmatprep.mubr.bf16.mxu0 0
        %4172 = vmatmul.mubr.bf16.gmra.mrb[0].mxu0 %v4109
        %v4173 = vpop.f32.mrb[0].mxu0
        %v4174 = vadd.f32 0.0, %v4173
        %v4175 = vpop.f32.mrb[0].mxu0
        %v4176 = vadd.f32 0.0, %v4175
        %v4177 = vpop.f32.mrb[0].mxu0
        %v4178 = vadd.f32 0.0, %v4177
        %v4179 = vpop.f32.mrb[0].mxu0
        %v4180 = vadd.f32 0.0, %v4179
        %4181 = vmatprep.mubr.bf16.mxu0 0
        %4182 = vmatmul.mubr.bf16.gmra.mrb[0].mxu0 %v4112
        %v4183 = vpop.f32.mrb[0].mxu0
        %v4184 = vadd.f32 0.0, %v4183
        %v4185 = vpop.f32.mrb[0].mxu0
        %v4186 = vadd.f32 0.0, %v4185
        %v4187 = vpop.f32.mrb[0].mxu0
        %v4188 = vadd.f32 0.0, %v4187
        %v4189 = vpop.f32.mrb[0].mxu0
        %v4190 = vadd.f32 0.0, %v4189
        %4191 = vmatprep.mubr.bf16.mxu0 0
        %4192 = vmatmul.mubr.bf16.gmra.mrb[0].mxu0 %v4115
        %v4193 = vpop.f32.mrb[0].mxu0
        %v4194 = vadd.f32 0.0, %v4193
        %v4195 = vpop.f32.mrb[0].mxu0
        %v4196 = vadd.f32 0.0, %v4195
        %v4197 = vpop.f32.mrb[0].mxu0
        %v4198 = vadd.f32 0.0, %v4197
        %v4199 = vpop.f32.mrb[0].mxu0
        %v4200 = vadd.f32 0.0, %v4199
        %4201 = vmatprep.mubr.bf16.mxu0 0
        %4202 = vmatmul.mubr.bf16.gmra.mrb[0].mxu0 %v4118
        %v4203 = vpop.f32.mrb[0].mxu0
        %v4204 = vadd.f32 0.0, %v4203
        %v4205 = vpop.f32.mrb[0].mxu0
        %v4206 = vadd.f32 0.0, %v4205
        %v4207 = vpop.f32.mrb[0].mxu0
        %v4208 = vadd.f32 0.0, %v4207
        %v4209 = vpop.f32.mrb[0].mxu0
        %v4210 = vadd.f32 0.0, %v4209
        %4211 = vmatprep.mubr.bf16.mxu0 0
        %4212 = vmatmul.mubr.bf16.gmra.mrb[0].mxu0 %v4121
        %v4213 = vpop.f32.mrb[0].mxu0
        %v4214 = vadd.f32 0.0, %v4213
        %v4215 = vpop.f32.mrb[0].mxu0
        %v4216 = vadd.f32 0.0, %v4215
        %v4217 = vpop.f32.mrb[0].mxu0
        %v4218 = vadd.f32 0.0, %v4217
        %v4219 = vpop.f32.mrb[0].mxu0
        %v4220 = vadd.f32 0.0, %v4219
        %4221 = vmatprep.mubr.bf16.mxu0 0
        %4222 = vmatmul.mubr.bf16.gmra.mrb[0].mxu0 %v4124
        %v4223 = vpop.f32.mrb[0].mxu0
        %v4224 = vadd.f32 0.0, %v4223
        %v4225 = vpop.f32.mrb[0].mxu0
        %v4226 = vadd.f32 0.0, %v4225
        %v4227 = vpop.f32.mrb[0].mxu0
        %v4228 = vadd.f32 0.0, %v4227
        %v4229 = vpop.f32.mrb[0].mxu0
        %v4230 = vadd.f32 0.0, %v4229
        %4231 = vmatprep.mubr.bf16.mxu0 0
        %4232 = vmatmul.mubr.bf16.gmra.mrb[0].mxu0 %v4127
        %v4233 = vpop.f32.mrb[0].mxu0
        %v4234 = vadd.f32 0.0, %v4233
        %v4235 = vpop.f32.mrb[0].mxu0
        %v4236 = vadd.f32 0.0, %v4235
        %v4237 = vpop.f32.mrb[0].mxu0
        %v4238 = vadd.f32 0.0, %v4237
        %v4239 = vpop.f32.mrb[0].mxu0
        %v4240 = vadd.f32 0.0, %v4239
        %4241 = vdwg.mxu0
        %v4242 = vadd.f32 %v3551, %v4164
        %v4243 = vadd.f32 %v3552, %v4166
        %v4244 = vadd.f32 %v3553, %v4168
        %v4245 = vadd.f32 %v3554, %v4170
        %v4246 = vadd.f32 %v3555, %v4174
        %v4247 = vadd.f32 %v3556, %v4176
        %v4248 = vadd.f32 %v3557, %v4178
        %v4249 = vadd.f32 %v3558, %v4180
        %v4250 = vadd.f32 %v3559, %v4184
        %v4251 = vadd.f32 %v3560, %v4186
        %v4252 = vadd.f32 %v3561, %v4188
        %v4253 = vadd.f32 %v3562, %v4190
        %v4254 = vadd.f32 %v3563, %v4194
        %v4255 = vadd.f32 %v3564, %v4196
        %v4256 = vadd.f32 %v3565, %v4198
        %v4257 = vadd.f32 %v3566, %v4200
        %v4258 = vadd.f32 %v3567, %v4204
        %v4259 = vadd.f32 %v3568, %v4206
        %v4260 = vadd.f32 %v3569, %v4208
        %v4261 = vadd.f32 %v3570, %v4210
        %v4262 = vadd.f32 %v3571, %v4214
        %v4263 = vadd.f32 %v3572, %v4216
        %v4264 = vadd.f32 %v3573, %v4218
        %v4265 = vadd.f32 %v3574, %v4220
        %v4266 = vadd.f32 %v3575, %v4224
        %v4267 = vadd.f32 %v3576, %v4226
        %v4268 = vadd.f32 %v3577, %v4228
        %v4269 = vadd.f32 %v3578, %v4230
        %v4270 = vadd.f32 %v3579, %v4234
        %v4271 = vadd.f32 %v3580, %v4236
        %v4272 = vadd.f32 %v3581, %v4238
        %v4273 = vadd.f32 %v3582, %v4240
        %v4274 = vld [vmem:[%s6] sm:$0x3]
        %v4275 = vunpack.c.l.bf16 %v4274
        %v4277 = vlaneseq
        %v4278 = vshrl.u32 %v4277, 7
        %v4279 = vsub.s32 0, %v4278
        %v4280 = vrot.slane %v4275, %v4279
        %v4281 = vlaneseq
        %v4282 = vshrl.u32 %v4281, 7
        %v4283 = vsub.s32 2, %v4282
        %v4284 = vrot.slane %v4275, %v4283
        %v4287 = vlaneseq
        %v4288 = vshrl.u32 %v4287, 7
        %v4289 = vsub.s32 0, %v4288
        %v4290 = vrot.slane %v4280, %v4289
        %v4291 = vlaneseq
        %v4292 = vshrl.u32 %v4291, 7
        %v4293 = vsub.s32 0, %v4292
        %v4294 = vrot.slane %v4284, %v4293
        %v4295 = vadd.f32 %v4242, %v4290
        %v4296 = vadd.f32 %v4243, %v4294
        %v4297 = vadd.f32 %v4244, %v4290
        %v4298 = vadd.f32 %v4245, %v4294
        %v4299 = vadd.f32 %v4246, %v4290
        %v4300 = vadd.f32 %v4247, %v4294
        %v4301 = vadd.f32 %v4248, %v4290
        %v4302 = vadd.f32 %v4249, %v4294
        %v4303 = vadd.f32 %v4250, %v4290
        %v4304 = vadd.f32 %v4251, %v4294
        %v4305 = vadd.f32 %v4252, %v4290
        %v4306 = vadd.f32 %v4253, %v4294
        %v4307 = vadd.f32 %v4254, %v4290
        %v4308 = vadd.f32 %v4255, %v4294
        %v4309 = vadd.f32 %v4256, %v4290
        %v4310 = vadd.f32 %v4257, %v4294
        %v4311 = vadd.f32 %v4258, %v4290
        %v4312 = vadd.f32 %v4259, %v4294
        %v4313 = vadd.f32 %v4260, %v4290
        %v4314 = vadd.f32 %v4261, %v4294
        %v4315 = vadd.f32 %v4262, %v4290
        %v4316 = vadd.f32 %v4263, %v4294
        %v4317 = vadd.f32 %v4264, %v4290
        %v4318 = vadd.f32 %v4265, %v4294
        %v4319 = vadd.f32 %v4266, %v4290
        %v4320 = vadd.f32 %v4267, %v4294
        %v4321 = vadd.f32 %v4268, %v4290
        %v4322 = vadd.f32 %v4269, %v4294
        %v4323 = vadd.f32 %v4270, %v4290
        %v4324 = vadd.f32 %v4271, %v4294
        %v4325 = vadd.f32 %v4272, %v4290
        %v4326 = vadd.f32 %v4273, %v4294
        %4327 = vst [vmem:[%s421] sm:$0xff] %v4295
        %4328 = vst [vmem:[%s421 + $0x8] sm:$0xff] %v4296
        %4329 = vst [vmem:[%s421 + $0x10] sm:$0xff] %v4297
        %4330 = vst [vmem:[%s421 + $0x18] sm:$0xff] %v4298
        %4331 = vst [vmem:[%s421 + $0x20] sm:$0xff] %v4299
        %4332 = vst [vmem:[%s421 + $0x28] sm:$0xff] %v4300
        %4333 = vst [vmem:[%s421 + $0x30] sm:$0xff] %v4301
        %4334 = vst [vmem:[%s421 + $0x38] sm:$0xff] %v4302
        %4335 = vst [vmem:[%s421 + $0x40] sm:$0xff] %v4303
        %4336 = vst [vmem:[%s421 + $0x48] sm:$0xff] %v4304
        %4337 = vst [vmem:[%s421 + $0x50] sm:$0xff] %v4305
        %4338 = vst [vmem:[%s421 + $0x58] sm:$0xff] %v4306
        %4339 = vst [vmem:[%s421 + $0x60] sm:$0xff] %v4307
        %4340 = vst [vmem:[%s421 + $0x68] sm:$0xff] %v4308
        %4341 = vst [vmem:[%s421 + $0x70] sm:$0xff] %v4309
        %4342 = vst [vmem:[%s421 + $0x78] sm:$0xff] %v4310
        %4343 = vst [vmem:[%s421 + $0x80] sm:$0xff] %v4311
        %4344 = vst [vmem:[%s421 + $0x88] sm:$0xff] %v4312
        %4345 = vst [vmem:[%s421 + $0x90] sm:$0xff] %v4313
        %4346 = vst [vmem:[%s421 + $0x98] sm:$0xff] %v4314
        %4347 = vst [vmem:[%s421 + $0xa0] sm:$0xff] %v4315
        %4348 = vst [vmem:[%s421 + $0xa8] sm:$0xff] %v4316
        %4349 = vst [vmem:[%s421 + $0xb0] sm:$0xff] %v4317
        %4350 = vst [vmem:[%s421 + $0xb8] sm:$0xff] %v4318
        %4351 = vst [vmem:[%s421 + $0xc0] sm:$0xff] %v4319
        %4352 = vst [vmem:[%s421 + $0xc8] sm:$0xff] %v4320
        %4353 = vst [vmem:[%s421 + $0xd0] sm:$0xff] %v4321
        %4354 = vst [vmem:[%s421 + $0xd8] sm:$0xff] %v4322
        %4355 = vst [vmem:[%s421 + $0xe0] sm:$0xff] %v4323
        %4356 = vst [vmem:[%s421 + $0xe8] sm:$0xff] %v4324
        %4357 = vst [vmem:[%s421 + $0xf0] sm:$0xff] %v4325
        %4358 = vst [vmem:[%s421 + $0xf8] sm:$0xff] %v4326
        %s4359 = sand.u32 %s214, 1
        %s4360 = scalar_lea.sflag [#allocation5], %s4359
        %s4361 = sand.u32 %s214, 1
        %s4362 = smul.addr %s4361, 256
        %s4363 = scalar_lea.vmem [#allocation12], %s4362
        // Predicated region
        $region73: #{tpu_custom_call.1} parent=47 // pred_check
          %p4364 = pneg %p224
        $region74: #{tpu_custom_call.1} parent=47 // pred_check_branch
          %4366 = sbr.rel (%p4364) target = $region76
        $region75: #{tpu_custom_call.1} parent=47 // pred_region
          %s4367 = smul.u32 16, %s33
          %s4369 = ssub.s32 4096, 4096
          %4370 = vsyncadd %s4360, %s4369
          %s4371 = smul.addr %s4367, 2
          %s4372 = smul.addr %s32, 32
          %s4373 = sadd.s32 %s4371, %s4372
          %s4374 = smul.addr %s4373, 128
          %s4375 = scalar_lea.hbm %s7, %s4374
          %s4376 = sshll.u32 %s4363, 4
          %s4377 = int_to_ptr.vmem [resolvable:$true] %s4376
          %4382 = dma.vmem_to_hbm [thread:$0]  %s4377, 4096, %s4375, %s4360, 256, 256, 16
        $region76: #{tpu_custom_call.1} parent=47 // pred_fallthru
          _
      $region48: #{tpu_custom_call.1} parent=5 // pred_fallthru
        _
      %p4383 = scmp.le.s32.totalorder 2, %s23
      // Predicated region
      $region77: #{tpu_custom_call.1} parent=5 // pred_check
        %p4384 = pneg %p4383
      $region78: #{tpu_custom_call.1} parent=5 // pred_check_branch
        %4386 = sbr.rel (%p4384) target = $region80
      $region79: #{tpu_custom_call.1} parent=5 // pred_region
        %s4387 = ssub.s32 %s23, 2
        // Predicated region
        $region81: #{tpu_custom_call.1} parent=79 // pred_check
          %p4388 = pneg %p230
        $region82: #{tpu_custom_call.1} parent=79 // pred_check_branch
          %4390 = sbr.rel (%p4388) target = $region84
        $region83: #{tpu_custom_call.1} parent=79 // pred_region
          %s4391 = sand.u32 %s215, 1
          %s4392 = scalar_lea.sflag [#allocation5], %s4391
          %s4393 = sand.u32 %s215, 1
          %s4394 = smul.addr %s4393, 256
          %s4395 = scalar_lea.vmem [#allocation12], %s4394
          %4396 = dma.done %s4392, 4096
        $region84: #{tpu_custom_call.1} parent=79 // pred_fallthru
          _
      $region80: #{tpu_custom_call.1} parent=5 // pred_fallthru
        _
    $region6: #{tpu_custom_call.1} parent=1 // loop_footer
      %s27 = sadd.s32 1, %s23
    $region7: #{tpu_custom_call.1} parent=1 // loop_footer_branch
      %22 = sbr.rel target = $region3
    $region8: #{tpu_custom_call.1} parent=1 // loop_exit
      _
    %4397 = vsyncpa [#allocation4], 1
    %s4398 = scalar_lea.sflag [#allocation4], 1
    %4399 = vsyncpa %s4398, 1
    %4400 = vsyncpa [#allocation7], 1
    %s4401 = scalar_lea.sflag [#allocation7], 1
    %4402 = vsyncpa %s4401, 1
    %4403 = vsyncpa [#allocation10], 1
    %4404 = vsyncpa [#allocation5], 1
    %s4405 = scalar_lea.sflag [#allocation5], 1
    %4406 = vsyncpa %s4405, 1

</llo_original>
